<compile_context>
chip_gen: v7x
topology: tpu7x:2x2x1
jax: 0.10.0
libtpu: 0.0.40
codegen_flags: <defaults>
</compile_context>

<pallas_src>
import jax
import jax.numpy as jnp
from jax.experimental import pallas as pl
from jax.experimental.pallas import tpu as pltpu

# ---- model dimensions implied by the module --------------------------------
B = 2                 # batch
C_IN = 2              # Conv1d in_channels
L_IN = 1500           # input length (forced by Linear(5968, ...) = 16*373)
C_OUT = 16            # Conv1d out_channels
K = 10                # kernel size
STRIDE = 2
L_CONV = (L_IN - K) // STRIDE + 1      # 746
L_POOL = L_CONV // 2                   # 373  (MaxPool1d(2))
FLAT = C_OUT * L_POOL                  # 5968
HID = 600
BN_EPS = 1e-5
NEG_SLOPE = 0.2

# ---- padded / tiled layout constants ----------------------------------------
LPAD = 384                             # per (batch, channel) length padded to 3*128
NCOLS = 2 * B * LPAD                   # 1536 conv columns: [even | odd] x batch x LPAD
FLAT_PAD = C_OUT * LPAD                # 6144 padded reduction dim of W1
NK = 4                                 # number of W1 K-tiles (grid steps)
TK = FLAT_PAD // NK                    # 1536 rows per W1 tile
CPT = TK // LPAD                       # 4 channels per tile
MROWS = 8                              # batch rows padded to one sublane group
N_VALID = float(B * L_CONV)            # 1492 valid conv positions for BN stats


# ---- fused kernel -----------------------------------------------------------
def fused_kernel(patches_ref, mask_ref, wc_ref, bc_ref, gamma_ref, beta_ref,
                 w1_ref, b1_ref, w2_ref, b2_ref, out_ref,
                 feat_ref, acc_ref, pool_ref):
    k = pl.program_id(0)

    @pl.when(k == 0)
    def _prologue():
        # Conv1d(k=10, s=2) as a lane-dense matmul: (16, 20) @ (20, 1536).
        conv = jnp.dot(wc_ref[...], patches_ref[...],
                       preferred_element_type=jnp.float32) + bc_ref[...]
        # BatchNorm1d (training mode): biased stats over the valid columns only.
        m = mask_ref[...]                                   # (1, NCOLS) 0/1 mask
        mean = jnp.sum(conv * m, axis=1, keepdims=True) / N_VALID
        cen = (conv - mean) * m
        var = jnp.sum(cen * cen, axis=1, keepdims=True) / N_VALID
        y = (conv - mean) * jax.lax.rsqrt(var + BN_EPS)
        y = y * gamma_ref[...] + beta_ref[...]
        y = jnp.where(y > 0, y, NEG_SLOPE * y)              # LeakyReLU(0.2)
        # MaxPool1d(2): even-position half vs odd-position half (same (b, j) col).
        pool_ref[...] = jnp.maximum(y[:, :B * LPAD], y[:, B * LPAD:])

        # Relayout (C_OUT, B*LPAD) -> (batch rows, C_OUT*LPAD lanes) matching
        # the host-side W1 row permutation.  Full 384-lane (3x128) blocks are
        # copied, so every load/store is lane-aligned and unmasked; the pad
        # lanes only ever multiply the zero-padded W1 rows.
        feat_ref[...] = jnp.zeros_like(feat_ref)            # zero pad rows 2..7
        acc_ref[...] = jnp.zeros_like(acc_ref)
        for c in range(C_OUT):
            for b in range(B):
                feat_ref[c // CPT, pl.ds(b, 1),
                         pl.ds((c % CPT) * LPAD, LPAD)] = (
                    pool_ref[pl.ds(c, 1), pl.ds(b * LPAD, LPAD)])

    # Stream one (TK, HID) bf16 tile of W1 per grid step; f32 accumulation.
    f_tile = feat_ref[k].astype(jnp.bfloat16)               # (MROWS, TK)
    acc_ref[...] += jnp.dot(f_tile, w1_ref[...],
                            preferred_element_type=jnp.float32)

    @pl.when(k == NK - 1)
    def _epilogue():
        h = acc_ref[...] + b1_ref[...]
        h = jnp.where(h > 0, h, NEG_SLOPE * h)               # LeakyReLU(0.2)
        logits = jnp.sum(h * w2_ref[...], axis=1, keepdims=True) + b2_ref[...]
        out_ref[...] = logits[:B, :]


# ---- host-side glue ---------------------------------------------------------
def _im2col_T(x):
    """(B, C_IN, L_IN) -> (C_IN*K, NCOLS), cols ordered [parity, batch, j(+pad)]."""
    j = jnp.arange(L_POOL)
    kk = jnp.arange(K)
    halves = []
    for parity in (0, 1):
        t = 2 * STRIDE * j[None, :] + STRIDE * parity + kk[:, None]   # (K, L_POOL)
        g = x[:, :, t]                                                # (B, C_IN, K, L_POOL)
        g = jnp.pad(g, ((0, 0), (0, 0), (0, 0), (0, LPAD - L_POOL)))
        halves.append(jnp.transpose(g, (1, 2, 0, 3)).reshape(C_IN * K, B * LPAD))
    return jnp.concatenate(halves, axis=1)                            # (20, 1536)


_COST = pl.CostEstimate(
    flops=int(2 * C_OUT * C_IN * K * NCOLS          # conv matmul
              + 2 * MROWS * FLAT_PAD * HID          # Linear(5968, 600) (padded)
              + 2 * MROWS * HID                     # Linear(600, 1)
              + 12 * C_OUT * NCOLS),                # BN / LeakyReLU / pool
    transcendentals=C_OUT,                          # per-channel rsqrt
    bytes_accessed=int(FLAT_PAD * HID * 2           # bf16 W1
                       + C_IN * K * NCOLS * 4       # im2col patches
                       + 2 * HID * 4 + 4096))


def discriminator_forward(x, params):
    wc_mat, bc, gamma, beta, w1p, b1, w2, b2 = params

    patches_t = _im2col_T(x)
    mask = jnp.tile((jnp.arange(LPAD) < L_POOL), (2 * B,))
    mask = mask.astype(jnp.float32)[None, :]                          # (1, NCOLS)

    grid_spec = pltpu.PrefetchScalarGridSpec(
        num_scalar_prefetch=0,
        grid=(NK,),
        in_specs=[
            pl.BlockSpec((C_IN * K, NCOLS), lambda k: (0, 0)),   # im2col patches^T
            pl.BlockSpec((1, NCOLS), lambda k: (0, 0)),          # BN validity mask
            pl.BlockSpec((C_OUT, C_IN * K), lambda k: (0, 0)),   # conv weight
            pl.BlockSpec((C_OUT, 1), lambda k: (0, 0)),          # conv bias
            pl.BlockSpec((C_OUT, 1), lambda k: (0, 0)),          # bn gamma
            pl.BlockSpec((C_OUT, 1), lambda k: (0, 0)),          # bn beta
            pl.BlockSpec((TK, HID), lambda k: (k, 0)),           # W1 K-tile (bf16)
            pl.BlockSpec((1, HID), lambda k: (0, 0)),            # b1
            pl.BlockSpec((1, HID), lambda k: (0, 0)),            # W2 row
            pl.BlockSpec((1, 1), lambda k: (0, 0)),              # b2
        ],
        out_specs=pl.BlockSpec((B, 1), lambda k: (0, 0)),
        scratch_shapes=[
            pltpu.VMEM((NK, MROWS, TK), jnp.float32),            # feat (K-tiled)
            pltpu.VMEM((MROWS, HID), jnp.float32),               # dense accumulator
            pltpu.VMEM((C_OUT, B * LPAD), jnp.float32),          # pooled activations
        ],
    )

    return pl.pallas_call(
        fused_kernel,
        out_shape=jax.ShapeDtypeStruct((B, 1), jnp.float32),
        grid_spec=grid_spec,
        compiler_params=pltpu.CompilerParams(
            dimension_semantics=("arbitrary",)),
        cost_estimate=_COST,
    )(patches_t, mask, wc_mat, bc, gamma, beta, w1p, b1, w2, b2)


# ---- deterministic parameter init (PyTorch default-style bounds) ------------
def init_params(key):
    ks = jax.random.split(key, 6)
    bnd_c = 1.0 / jnp.sqrt(float(C_IN * K))
    wconv = jax.random.uniform(ks[0], (C_OUT, C_IN, K), jnp.float32, -bnd_c, bnd_c)
    bconv = jax.random.uniform(ks[1], (C_OUT,), jnp.float32, -bnd_c, bnd_c)
    gamma = jnp.ones((C_OUT,), jnp.float32)    # BatchNorm1d default weight
    beta = jnp.zeros((C_OUT,), jnp.float32)    # BatchNorm1d default bias
    bnd1 = 1.0 / jnp.sqrt(float(FLAT))
    w1t = jax.random.uniform(ks[2], (FLAT, HID), jnp.float32, -bnd1, bnd1)
    b1 = jax.random.uniform(ks[3], (HID,), jnp.float32, -bnd1, bnd1)
    bnd2 = 1.0 / jnp.sqrt(float(HID))
    w2t = jax.random.uniform(ks[4], (HID, 1), jnp.float32, -bnd2, bnd2)
    b2 = jax.random.uniform(ks[5], (1,), jnp.float32, -bnd2, bnd2)
    return wconv, bconv, gamma, beta, w1t, b1, w2t, b2


def prepare_params(raw):
    """Repack raw (torch-layout) params into the layouts the fused kernel expects."""
    wconv, bconv, gamma, beta, w1t, b1, w2t, b2 = raw
    wc_mat = wconv.reshape(C_OUT, C_IN * K)                       # (16, 20)
    # W1 rows reordered/padded to f = c*LPAD + l (pad rows are zero) and cast to bf16.
    w1p = w1t.reshape(C_OUT, L_POOL, HID)
    w1p = jnp.pad(w1p, ((0, 0), (0, LPAD - L_POOL), (0, 0)))
    w1p = w1p.reshape(FLAT_PAD, HID).astype(jnp.bfloat16)
    return (wc_mat,
            bconv.reshape(C_OUT, 1),
            gamma.reshape(C_OUT, 1),
            beta.reshape(C_OUT, 1),
            w1p,
            b1.reshape(1, HID),
            w2t.reshape(1, HID),
            b2.reshape(1, 1))


# ---- pure-JAX reference (independent path through lax.conv) -----------------
def reference_forward(x, raw):
    wconv, bconv, gamma, beta, w1t, b1, w2t, b2 = raw
    conv = jax.lax.conv_general_dilated(
        x, wconv, window_strides=(STRIDE,), padding="VALID",
        dimension_numbers=("NCH", "OIH", "NCH"),
        precision=jax.lax.Precision.HIGHEST)
    conv = conv + bconv[None, :, None]
    mean = jnp.mean(conv, axis=(0, 2), keepdims=True)
    var = jnp.mean((conv - mean) ** 2, axis=(0, 2), keepdims=True)
    y = (conv - mean) / jnp.sqrt(var + BN_EPS) * gamma[None, :, None] + beta[None, :, None]
    y = jnp.where(y > 0, y, NEG_SLOPE * y)
    y = jnp.max(y.reshape(B, C_OUT, L_POOL, 2), axis=-1)
    feat = y.reshape(B, FLAT)
    h = jnp.dot(feat, w1t, precision=jax.lax.Precision.HIGHEST) + b1
    h = jnp.where(h > 0, h, NEG_SLOPE * h)
    return jnp.dot(h, w2t, precision=jax.lax.Precision.HIGHEST) + b2


if __name__ == "__main__":
    key = jax.random.PRNGKey(0)
    kx, kp = jax.random.split(key)
    x = jax.random.normal(kx, (B, C_IN, L_IN), jnp.float32)
    raw = init_params(kp)
    params = prepare_params(raw)

    fwd = jax.jit(discriminator_forward)
    out = jax.block_until_ready(fwd(x, params))
    assert out.shape == (B, 1), out.shape

    ref = reference_forward(x, raw)
    # bf16 W1 / bf16 feat tiles with f32 accumulation: expect |err| ~ 1e-3.
    if not jnp.allclose(out, ref, rtol=2e-2, atol=2e-2):
        raise AssertionError(f"Pallas result {out} != reference {ref}")

    print("KERNEL_OK")
</pallas_src>

<mosaic_0001>
module attributes {stable_mosaic.version = 11 : i64} {
  func.func @fused_kernel(%arg0: i32, %arg1: memref<20x1536xf32, #tpu.memory_space<vmem>>, %arg2: memref<1x1536xf32, #tpu.memory_space<vmem>>, %arg3: memref<16x20xf32, #tpu.memory_space<vmem>>, %arg4: memref<16x1xf32, #tpu.memory_space<vmem>>, %arg5: memref<16x1xf32, #tpu.memory_space<vmem>>, %arg6: memref<16x1xf32, #tpu.memory_space<vmem>>, %arg7: memref<1536x600xbf16, #tpu.memory_space<vmem>>, %arg8: memref<1x600xf32, #tpu.memory_space<vmem>>, %arg9: memref<1x600xf32, #tpu.memory_space<vmem>>, %arg10: memref<1x1xf32, #tpu.memory_space<vmem>>, %arg11: memref<2x1xf32, #tpu.memory_space<vmem>>, %arg12: memref<4x8x1536xf32, #tpu.memory_space<vmem>>, %arg13: memref<8x600xf32, #tpu.memory_space<vmem>>, %arg14: memref<16x768xf32, #tpu.memory_space<vmem>>) attributes {dimension_semantics = [#tpu.dimension_semantics<arbitrary>], iteration_bounds = array<i64: 4>, scalar_prefetch = 0 : i64, scratch_operands = 3 : i64, tpu.core_type = #tpu.core_type<tc>, window_params = [{pipeline_mode = #tpu.pipeline_mode<synchronous>, transform_indices = @transform_0, window_bounds = array<i64: 20, 1536>}, {pipeline_mode = #tpu.pipeline_mode<synchronous>, transform_indices = @transform_1, window_bounds = array<i64: 1, 1536>}, {pipeline_mode = #tpu.pipeline_mode<synchronous>, transform_indices = @transform_2, window_bounds = array<i64: 16, 20>}, {pipeline_mode = #tpu.pipeline_mode<synchronous>, transform_indices = @transform_3, window_bounds = array<i64: 16, 1>}, {pipeline_mode = #tpu.pipeline_mode<synchronous>, transform_indices = @transform_4, window_bounds = array<i64: 16, 1>}, {pipeline_mode = #tpu.pipeline_mode<synchronous>, transform_indices = @transform_5, window_bounds = array<i64: 16, 1>}, {transform_indices = @transform_6, window_bounds = array<i64: 1536, 600>}, {pipeline_mode = #tpu.pipeline_mode<synchronous>, transform_indices = @transform_7, window_bounds = array<i64: 1, 600>}, {pipeline_mode = #tpu.pipeline_mode<synchronous>, transform_indices = @transform_8, window_bounds = array<i64: 1, 600>}, {pipeline_mode = #tpu.pipeline_mode<synchronous>, transform_indices = @transform_9, window_bounds = array<i64: 1, 1>}, {pipeline_mode = #tpu.pipeline_mode<synchronous>, transform_indices = @transform_10, window_bounds = array<i64: 2, 1>}]} {
    %c0_i32 = arith.constant 0 : i32
    %0 = arith.cmpi eq, %arg0, %c0_i32 : i32
    %1 = arith.extui %0 : i1 to i32
    %c0_i32_0 = arith.constant 0 : i32
    %2 = arith.cmpi ne, %1, %c0_i32_0 : i32
    scf.if %2 {
      %c0_9 = arith.constant 0 : index
      %c0_10 = arith.constant 0 : index
      %15 = vector.load %arg3[%c0_9, %c0_10] : memref<16x20xf32, #tpu.memory_space<vmem>>, vector<16x20xf32>
      %c0_11 = arith.constant 0 : index
      %c0_12 = arith.constant 0 : index
      %16 = vector.load %arg1[%c0_11, %c0_12] : memref<20x1536xf32, #tpu.memory_space<vmem>>, vector<20x1536xf32>
      %cst_13 = arith.constant dense<0.000000e+00> : vector<16x1536xf32>
      %17 = tpu.matmul %15, %16, %cst_13 {dimension_numbers = #tpu.dot_dimension_numbers<[1], [0], [0], [1], [0, 0, 1, 1], [], []>} : vector<16x20xf32>, vector<20x1536xf32>, vector<16x1536xf32> -> vector<16x1536xf32>
      %c0_14 = arith.constant 0 : index
      %c0_15 = arith.constant 0 : index
      %18 = vector.load %arg4[%c0_14, %c0_15] : memref<16x1xf32, #tpu.memory_space<vmem>>, vector<16x1xf32>
      %19 = vector.broadcast %18 : vector<16x1xf32> to vector<16x1536xf32>
      %20 = arith.addf %17, %19 : vector<16x1536xf32>
      %c0_16 = arith.constant 0 : index
      %c0_17 = arith.constant 0 : index
      %21 = vector.load %arg2[%c0_16, %c0_17] : memref<1x1536xf32, #tpu.memory_space<vmem>>, vector<1x1536xf32>
      %22 = vector.broadcast %21 : vector<1x1536xf32> to vector<16x1536xf32>
      %23 = arith.mulf %20, %22 : vector<16x1536xf32>
      %cst_18 = arith.constant dense<0.000000e+00> : vector<16xf32>
      %24 = vector.multi_reduction <add>, %23, %cst_18 [1] : vector<16x1536xf32> to vector<16xf32>
      %25 = vector.shape_cast %24 : vector<16xf32> to vector<16x1xf32>
      %cst_19 = arith.constant 1.492000e+03 : f32
      %26 = vector.broadcast %cst_19 : f32 to vector<16x1xf32>
      %27 = arith.divf %25, %26 : vector<16x1xf32>
      %28 = vector.broadcast %27 : vector<16x1xf32> to vector<16x1536xf32>
      %29 = arith.subf %20, %28 : vector<16x1536xf32>
      %30 = vector.broadcast %21 : vector<1x1536xf32> to vector<16x1536xf32>
      %31 = arith.mulf %29, %30 : vector<16x1536xf32>
      %32 = arith.mulf %31, %31 : vector<16x1536xf32>
      %cst_20 = arith.constant dense<0.000000e+00> : vector<16xf32>
      %33 = vector.multi_reduction <add>, %32, %cst_20 [1] : vector<16x1536xf32> to vector<16xf32>
      %34 = vector.shape_cast %33 : vector<16xf32> to vector<16x1xf32>
      %cst_21 = arith.constant 1.492000e+03 : f32
      %35 = vector.broadcast %cst_21 : f32 to vector<16x1xf32>
      %36 = arith.divf %34, %35 : vector<16x1xf32>
      %37 = vector.broadcast %27 : vector<16x1xf32> to vector<16x1536xf32>
      %38 = arith.subf %20, %37 : vector<16x1536xf32>
      %cst_22 = arith.constant 9.99999974E-6 : f32
      %39 = vector.broadcast %cst_22 : f32 to vector<16x1xf32>
      %40 = arith.addf %36, %39 : vector<16x1xf32>
      %41 = math.rsqrt %40 : vector<16x1xf32>
      %42 = vector.broadcast %41 : vector<16x1xf32> to vector<16x1536xf32>
      %43 = arith.mulf %38, %42 : vector<16x1536xf32>
      %c0_23 = arith.constant 0 : index
      %c0_24 = arith.constant 0 : index
      %44 = vector.load %arg5[%c0_23, %c0_24] : memref<16x1xf32, #tpu.memory_space<vmem>>, vector<16x1xf32>
      %45 = vector.broadcast %44 : vector<16x1xf32> to vector<16x1536xf32>
      %46 = arith.mulf %43, %45 : vector<16x1536xf32>
      %c0_25 = arith.constant 0 : index
      %c0_26 = arith.constant 0 : index
      %47 = vector.load %arg6[%c0_25, %c0_26] : memref<16x1xf32, #tpu.memory_space<vmem>>, vector<16x1xf32>
      %48 = vector.broadcast %47 : vector<16x1xf32> to vector<16x1536xf32>
      %49 = arith.addf %46, %48 : vector<16x1536xf32>
      %cst_27 = arith.constant 0.000000e+00 : f32
      %50 = vector.broadcast %cst_27 : f32 to vector<16x1536xf32>
      %51 = arith.cmpf ogt, %49, %50 : vector<16x1536xf32>
      %cst_28 = arith.constant 2.000000e-01 : f32
      %52 = vector.broadcast %cst_28 : f32 to vector<16x1536xf32>
      %53 = arith.mulf %52, %49 : vector<16x1536xf32>
      %54 = arith.select %51, %49, %53 : vector<16x1536xi1>, vector<16x1536xf32>
      %55 = vector.extract_strided_slice %54 {offsets = [0, 0], sizes = [16, 768], strides = [1, 1]} : vector<16x1536xf32> to vector<16x768xf32>
      %56 = vector.extract_strided_slice %54 {offsets = [0, 768], sizes = [16, 768], strides = [1, 1]} : vector<16x1536xf32> to vector<16x768xf32>
      %57 = arith.maximumf %55, %56 : vector<16x768xf32>
      %c0_29 = arith.constant 0 : index
      %c0_30 = arith.constant 0 : index
      %58 = vector.load %arg14[%c0_29, %c0_30] : memref<16x768xf32, #tpu.memory_space<vmem>>, vector<16x768xf32>
      tpu.vector_store %arg14[%c0_29, %c0_30], %57 {strides = array<i32>} : memref<16x768xf32, #tpu.memory_space<vmem>>, vector<16x768xf32>,
      %cst_31 = arith.constant 0.000000e+00 : f32
      %59 = vector.broadcast %cst_31 : f32 to vector<4x8x1536xf32>
      %c0_32 = arith.constant 0 : index
      %c0_33 = arith.constant 0 : index
      %c0_34 = arith.constant 0 : index
      %60 = vector.load %arg12[%c0_32, %c0_33, %c0_34] : memref<4x8x1536xf32, #tpu.memory_space<vmem>>, vector<4x8x1536xf32>
      tpu.vector_store %arg12[%c0_32, %c0_33, %c0_34], %59 {strides = array<i32>} : memref<4x8x1536xf32, #tpu.memory_space<vmem>>, vector<4x8x1536xf32>,
      %cst_35 = arith.constant 0.000000e+00 : f32
      %61 = vector.broadcast %cst_35 : f32 to vector<8x600xf32>
      %c0_36 = arith.constant 0 : index
      %c0_37 = arith.constant 0 : index
      %62 = vector.load %arg13[%c0_36, %c0_37] : memref<8x600xf32, #tpu.memory_space<vmem>>, vector<8x600xf32>
      tpu.vector_store %arg13[%c0_36, %c0_37], %61 {strides = array<i32>} : memref<8x600xf32, #tpu.memory_space<vmem>>, vector<8x600xf32>,
      %c0_38 = arith.constant 0 : index
      %c0_39 = arith.constant 0 : index
      %63 = vector.load %arg14[%c0_38, %c0_39] : memref<16x768xf32, #tpu.memory_space<vmem>>, vector<1x384xf32>
      %c0_40 = arith.constant 0 : index
      %c0_41 = arith.constant 0 : index
      %c0_42 = arith.constant 0 : index
      %64 = vector.load %arg12[%c0_40, %c0_41, %c0_42] : memref<4x8x1536xf32, #tpu.memory_space<vmem>>, vector<1x1x384xf32>
      %65 = vector.shape_cast %64 : vector<1x1x384xf32> to vector<1x384xf32>
      %66 = vector.shape_cast %63 : vector<1x384xf32> to vector<1x1x384xf32>
      tpu.vector_store %arg12[%c0_40, %c0_41, %c0_42], %66 {strides = array<i32>} : memref<4x8x1536xf32, #tpu.memory_space<vmem>>, vector<1x1x384xf32>,
      %c0_43 = arith.constant 0 : index
      %c384 = arith.constant 384 : index
      %67 = vector.load %arg14[%c0_43, %c384] : memref<16x768xf32, #tpu.memory_space<vmem>>, vector<1x384xf32>
      %c0_44 = arith.constant 0 : index
      %c1 = arith.constant 1 : index
      %c0_45 = arith.constant 0 : index
      %68 = vector.load %arg12[%c0_44, %c1, %c0_45] : memref<4x8x1536xf32, #tpu.memory_space<vmem>>, vector<1x1x384xf32>
      %69 = vector.shape_cast %68 : vector<1x1x384xf32> to vector<1x384xf32>
      %70 = vector.shape_cast %67 : vector<1x384xf32> to vector<1x1x384xf32>
      tpu.vector_store %arg12[%c0_44, %c1, %c0_45], %70 {strides = array<i32>} : memref<4x8x1536xf32, #tpu.memory_space<vmem>>, vector<1x1x384xf32>,
      %c1_46 = arith.constant 1 : index
      %c0_47 = arith.constant 0 : index
      %71 = vector.load %arg14[%c1_46, %c0_47] : memref<16x768xf32, #tpu.memory_space<vmem>>, vector<1x384xf32>
      %c0_48 = arith.constant 0 : index
      %c0_49 = arith.constant 0 : index
      %c384_50 = arith.constant 384 : index
      %72 = vector.load %arg12[%c0_48, %c0_49, %c384_50] : memref<4x8x1536xf32, #tpu.memory_space<vmem>>, vector<1x1x384xf32>
      %73 = vector.shape_cast %72 : vector<1x1x384xf32> to vector<1x384xf32>
      %74 = vector.shape_cast %71 : vector<1x384xf32> to vector<1x1x384xf32>
      tpu.vector_store %arg12[%c0_48, %c0_49, %c384_50], %74 {strides = array<i32>} : memref<4x8x1536xf32, #tpu.memory_space<vmem>>, vector<1x1x384xf32>,
      %c1_51 = arith.constant 1 : index
      %c384_52 = arith.constant 384 : index
      %75 = vector.load %arg14[%c1_51, %c384_52] : memref<16x768xf32, #tpu.memory_space<vmem>>, vector<1x384xf32>
      %c0_53 = arith.constant 0 : index
      %c1_54 = arith.constant 1 : index
      %c384_55 = arith.constant 384 : index
      %76 = vector.load %arg12[%c0_53, %c1_54, %c384_55] : memref<4x8x1536xf32, #tpu.memory_space<vmem>>, vector<1x1x384xf32>
      %77 = vector.shape_cast %76 : vector<1x1x384xf32> to vector<1x384xf32>
      %78 = vector.shape_cast %75 : vector<1x384xf32> to vector<1x1x384xf32>
      tpu.vector_store %arg12[%c0_53, %c1_54, %c384_55], %78 {strides = array<i32>} : memref<4x8x1536xf32, #tpu.memory_space<vmem>>, vector<1x1x384xf32>,
      %c2 = arith.constant 2 : index
      %c0_56 = arith.constant 0 : index
      %79 = vector.load %arg14[%c2, %c0_56] : memref<16x768xf32, #tpu.memory_space<vmem>>, vector<1x384xf32>
      %c0_57 = arith.constant 0 : index
      %c0_58 = arith.constant 0 : index
      %c768 = arith.constant 768 : index
      %80 = vector.load %arg12[%c0_57, %c0_58, %c768] : memref<4x8x1536xf32, #tpu.memory_space<vmem>>, vector<1x1x384xf32>
      %81 = vector.shape_cast %80 : vector<1x1x384xf32> to vector<1x384xf32>
      %82 = vector.shape_cast %79 : vector<1x384xf32> to vector<1x1x384xf32>
      tpu.vector_store %arg12[%c0_57, %c0_58, %c768], %82 {strides = array<i32>} : memref<4x8x1536xf32, #tpu.memory_space<vmem>>, vector<1x1x384xf32>,
      %c2_59 = arith.constant 2 : index
      %c384_60 = arith.constant 384 : index
      %83 = vector.load %arg14[%c2_59, %c384_60] : memref<16x768xf32, #tpu.memory_space<vmem>>, vector<1x384xf32>
      %c0_61 = arith.constant 0 : index
      %c1_62 = arith.constant 1 : index
      %c768_63 = arith.constant 768 : index
      %84 = vector.load %arg12[%c0_61, %c1_62, %c768_63] : memref<4x8x1536xf32, #tpu.memory_space<vmem>>, vector<1x1x384xf32>
      %85 = vector.shape_cast %84 : vector<1x1x384xf32> to vector<1x384xf32>
      %86 = vector.shape_cast %83 : vector<1x384xf32> to vector<1x1x384xf32>
      tpu.vector_store %arg12[%c0_61, %c1_62, %c768_63], %86 {strides = array<i32>} : memref<4x8x1536xf32, #tpu.memory_space<vmem>>, vector<1x1x384xf32>,
      %c3 = arith.constant 3 : index
      %c0_64 = arith.constant 0 : index
      %87 = vector.load %arg14[%c3, %c0_64] : memref<16x768xf32, #tpu.memory_space<vmem>>, vector<1x384xf32>
      %c0_65 = arith.constant 0 : index
      %c0_66 = arith.constant 0 : index
      %c1152 = arith.constant 1152 : index
      %88 = vector.load %arg12[%c0_65, %c0_66, %c1152] : memref<4x8x1536xf32, #tpu.memory_space<vmem>>, vector<1x1x384xf32>
      %89 = vector.shape_cast %88 : vector<1x1x384xf32> to vector<1x384xf32>
      %90 = vector.shape_cast %87 : vector<1x384xf32> to vector<1x1x384xf32>
      tpu.vector_store %arg12[%c0_65, %c0_66, %c1152], %90 {strides = array<i32>} : memref<4x8x1536xf32, #tpu.memory_space<vmem>>, vector<1x1x384xf32>,
      %c3_67 = arith.constant 3 : index
      %c384_68 = arith.constant 384 : index
      %91 = vector.load %arg14[%c3_67, %c384_68] : memref<16x768xf32, #tpu.memory_space<vmem>>, vector<1x384xf32>
      %c0_69 = arith.constant 0 : index
      %c1_70 = arith.constant 1 : index
      %c1152_71 = arith.constant 1152 : index
      %92 = vector.load %arg12[%c0_69, %c1_70, %c1152_71] : memref<4x8x1536xf32, #tpu.memory_space<vmem>>, vector<1x1x384xf32>
      %93 = vector.shape_cast %92 : vector<1x1x384xf32> to vector<1x384xf32>
      %94 = vector.shape_cast %91 : vector<1x384xf32> to vector<1x1x384xf32>
      tpu.vector_store %arg12[%c0_69, %c1_70, %c1152_71], %94 {strides = array<i32>} : memref<4x8x1536xf32, #tpu.memory_space<vmem>>, vector<1x1x384xf32>,
      %c4 = arith.constant 4 : index
      %c0_72 = arith.constant 0 : index
      %95 = vector.load %arg14[%c4, %c0_72] : memref<16x768xf32, #tpu.memory_space<vmem>>, vector<1x384xf32>
      %c1_73 = arith.constant 1 : index
      %c0_74 = arith.constant 0 : index
      %c0_75 = arith.constant 0 : index
      %96 = vector.load %arg12[%c1_73, %c0_74, %c0_75] : memref<4x8x1536xf32, #tpu.memory_space<vmem>>, vector<1x1x384xf32>
      %97 = vector.shape_cast %96 : vector<1x1x384xf32> to vector<1x384xf32>
      %98 = vector.shape_cast %95 : vector<1x384xf32> to vector<1x1x384xf32>
      tpu.vector_store %arg12[%c1_73, %c0_74, %c0_75], %98 {strides = array<i32>} : memref<4x8x1536xf32, #tpu.memory_space<vmem>>, vector<1x1x384xf32>,
      %c4_76 = arith.constant 4 : index
      %c384_77 = arith.constant 384 : index
      %99 = vector.load %arg14[%c4_76, %c384_77] : memref<16x768xf32, #tpu.memory_space<vmem>>, vector<1x384xf32>
      %c1_78 = arith.constant 1 : index
      %c1_79 = arith.constant 1 : index
      %c0_80 = arith.constant 0 : index
      %100 = vector.load %arg12[%c1_78, %c1_79, %c0_80] : memref<4x8x1536xf32, #tpu.memory_space<vmem>>, vector<1x1x384xf32>
      %101 = vector.shape_cast %100 : vector<1x1x384xf32> to vector<1x384xf32>
      %102 = vector.shape_cast %99 : vector<1x384xf32> to vector<1x1x384xf32>
      tpu.vector_store %arg12[%c1_78, %c1_79, %c0_80], %102 {strides = array<i32>} : memref<4x8x1536xf32, #tpu.memory_space<vmem>>, vector<1x1x384xf32>,
      %c5 = arith.constant 5 : index
      %c0_81 = arith.constant 0 : index
      %103 = vector.load %arg14[%c5, %c0_81] : memref<16x768xf32, #tpu.memory_space<vmem>>, vector<1x384xf32>
      %c1_82 = arith.constant 1 : index
      %c0_83 = arith.constant 0 : index
      %c384_84 = arith.constant 384 : index
      %104 = vector.load %arg12[%c1_82, %c0_83, %c384_84] : memref<4x8x1536xf32, #tpu.memory_space<vmem>>, vector<1x1x384xf32>
      %105 = vector.shape_cast %104 : vector<1x1x384xf32> to vector<1x384xf32>
      %106 = vector.shape_cast %103 : vector<1x384xf32> to vector<1x1x384xf32>
      tpu.vector_store %arg12[%c1_82, %c0_83, %c384_84], %106 {strides = array<i32>} : memref<4x8x1536xf32, #tpu.memory_space<vmem>>, vector<1x1x384xf32>,
      %c5_85 = arith.constant 5 : index
      %c384_86 = arith.constant 384 : index
      %107 = vector.load %arg14[%c5_85, %c384_86] : memref<16x768xf32, #tpu.memory_space<vmem>>, vector<1x384xf32>
      %c1_87 = arith.constant 1 : index
      %c1_88 = arith.constant 1 : index
      %c384_89 = arith.constant 384 : index
      %108 = vector.load %arg12[%c1_87, %c1_88, %c384_89] : memref<4x8x1536xf32, #tpu.memory_space<vmem>>, vector<1x1x384xf32>
      %109 = vector.shape_cast %108 : vector<1x1x384xf32> to vector<1x384xf32>
      %110 = vector.shape_cast %107 : vector<1x384xf32> to vector<1x1x384xf32>
      tpu.vector_store %arg12[%c1_87, %c1_88, %c384_89], %110 {strides = array<i32>} : memref<4x8x1536xf32, #tpu.memory_space<vmem>>, vector<1x1x384xf32>,
      %c6 = arith.constant 6 : index
      %c0_90 = arith.constant 0 : index
      %111 = vector.load %arg14[%c6, %c0_90] : memref<16x768xf32, #tpu.memory_space<vmem>>, vector<1x384xf32>
      %c1_91 = arith.constant 1 : index
      %c0_92 = arith.constant 0 : index
      %c768_93 = arith.constant 768 : index
      %112 = vector.load %arg12[%c1_91, %c0_92, %c768_93] : memref<4x8x1536xf32, #tpu.memory_space<vmem>>, vector<1x1x384xf32>
      %113 = vector.shape_cast %112 : vector<1x1x384xf32> to vector<1x384xf32>
      %114 = vector.shape_cast %111 : vector<1x384xf32> to vector<1x1x384xf32>
      tpu.vector_store %arg12[%c1_91, %c0_92, %c768_93], %114 {strides = array<i32>} : memref<4x8x1536xf32, #tpu.memory_space<vmem>>, vector<1x1x384xf32>,
      %c6_94 = arith.constant 6 : index
      %c384_95 = arith.constant 384 : index
      %115 = vector.load %arg14[%c6_94, %c384_95] : memref<16x768xf32, #tpu.memory_space<vmem>>, vector<1x384xf32>
      %c1_96 = arith.constant 1 : index
      %c1_97 = arith.constant 1 : index
      %c768_98 = arith.constant 768 : index
      %116 = vector.load %arg12[%c1_96, %c1_97, %c768_98] : memref<4x8x1536xf32, #tpu.memory_space<vmem>>, vector<1x1x384xf32>
      %117 = vector.shape_cast %116 : vector<1x1x384xf32> to vector<1x384xf32>
      %118 = vector.shape_cast %115 : vector<1x384xf32> to vector<1x1x384xf32>
      tpu.vector_store %arg12[%c1_96, %c1_97, %c768_98], %118 {strides = array<i32>} : memref<4x8x1536xf32, #tpu.memory_space<vmem>>, vector<1x1x384xf32>,
      %c7 = arith.constant 7 : index
      %c0_99 = arith.constant 0 : index
      %119 = vector.load %arg14[%c7, %c0_99] : memref<16x768xf32, #tpu.memory_space<vmem>>, vector<1x384xf32>
      %c1_100 = arith.constant 1 : index
      %c0_101 = arith.constant 0 : index
      %c1152_102 = arith.constant 1152 : index
      %120 = vector.load %arg12[%c1_100, %c0_101, %c1152_102] : memref<4x8x1536xf32, #tpu.memory_space<vmem>>, vector<1x1x384xf32>
      %121 = vector.shape_cast %120 : vector<1x1x384xf32> to vector<1x384xf32>
      %122 = vector.shape_cast %119 : vector<1x384xf32> to vector<1x1x384xf32>
      tpu.vector_store %arg12[%c1_100, %c0_101, %c1152_102], %122 {strides = array<i32>} : memref<4x8x1536xf32, #tpu.memory_space<vmem>>, vector<1x1x384xf32>,
      %c7_103 = arith.constant 7 : index
      %c384_104 = arith.constant 384 : index
      %123 = vector.load %arg14[%c7_103, %c384_104] : memref<16x768xf32, #tpu.memory_space<vmem>>, vector<1x384xf32>
      %c1_105 = arith.constant 1 : index
      %c1_106 = arith.constant 1 : index
      %c1152_107 = arith.constant 1152 : index
      %124 = vector.load %arg12[%c1_105, %c1_106, %c1152_107] : memref<4x8x1536xf32, #tpu.memory_space<vmem>>, vector<1x1x384xf32>
      %125 = vector.shape_cast %124 : vector<1x1x384xf32> to vector<1x384xf32>
      %126 = vector.shape_cast %123 : vector<1x384xf32> to vector<1x1x384xf32>
      tpu.vector_store %arg12[%c1_105, %c1_106, %c1152_107], %126 {strides = array<i32>} : memref<4x8x1536xf32, #tpu.memory_space<vmem>>, vector<1x1x384xf32>,
      %c8 = arith.constant 8 : index
      %c0_108 = arith.constant 0 : index
      %127 = vector.load %arg14[%c8, %c0_108] : memref<16x768xf32, #tpu.memory_space<vmem>>, vector<1x384xf32>
      %c2_109 = arith.constant 2 : index
      %c0_110 = arith.constant 0 : index
      %c0_111 = arith.constant 0 : index
      %128 = vector.load %arg12[%c2_109, %c0_110, %c0_111] : memref<4x8x1536xf32, #tpu.memory_space<vmem>>, vector<1x1x384xf32>
      %129 = vector.shape_cast %128 : vector<1x1x384xf32> to vector<1x384xf32>
      %130 = vector.shape_cast %127 : vector<1x384xf32> to vector<1x1x384xf32>
      tpu.vector_store %arg12[%c2_109, %c0_110, %c0_111], %130 {strides = array<i32>} : memref<4x8x1536xf32, #tpu.memory_space<vmem>>, vector<1x1x384xf32>,
      %c8_112 = arith.constant 8 : index
      %c384_113 = arith.constant 384 : index
      %131 = vector.load %arg14[%c8_112, %c384_113] : memref<16x768xf32, #tpu.memory_space<vmem>>, vector<1x384xf32>
      %c2_114 = arith.constant 2 : index
      %c1_115 = arith.constant 1 : index
      %c0_116 = arith.constant 0 : index
      %132 = vector.load %arg12[%c2_114, %c1_115, %c0_116] : memref<4x8x1536xf32, #tpu.memory_space<vmem>>, vector<1x1x384xf32>
      %133 = vector.shape_cast %132 : vector<1x1x384xf32> to vector<1x384xf32>
      %134 = vector.shape_cast %131 : vector<1x384xf32> to vector<1x1x384xf32>
      tpu.vector_store %arg12[%c2_114, %c1_115, %c0_116], %134 {strides = array<i32>} : memref<4x8x1536xf32, #tpu.memory_space<vmem>>, vector<1x1x384xf32>,
      %c9 = arith.constant 9 : index
      %c0_117 = arith.constant 0 : index
      %135 = vector.load %arg14[%c9, %c0_117] : memref<16x768xf32, #tpu.memory_space<vmem>>, vector<1x384xf32>
      %c2_118 = arith.constant 2 : index
      %c0_119 = arith.constant 0 : index
      %c384_120 = arith.constant 384 : index
      %136 = vector.load %arg12[%c2_118, %c0_119, %c384_120] : memref<4x8x1536xf32, #tpu.memory_space<vmem>>, vector<1x1x384xf32>
      %137 = vector.shape_cast %136 : vector<1x1x384xf32> to vector<1x384xf32>
      %138 = vector.shape_cast %135 : vector<1x384xf32> to vector<1x1x384xf32>
      tpu.vector_store %arg12[%c2_118, %c0_119, %c384_120], %138 {strides = array<i32>} : memref<4x8x1536xf32, #tpu.memory_space<vmem>>, vector<1x1x384xf32>,
      %c9_121 = arith.constant 9 : index
      %c384_122 = arith.constant 384 : index
      %139 = vector.load %arg14[%c9_121, %c384_122] : memref<16x768xf32, #tpu.memory_space<vmem>>, vector<1x384xf32>
      %c2_123 = arith.constant 2 : index
      %c1_124 = arith.constant 1 : index
      %c384_125 = arith.constant 384 : index
      %140 = vector.load %arg12[%c2_123, %c1_124, %c384_125] : memref<4x8x1536xf32, #tpu.memory_space<vmem>>, vector<1x1x384xf32>
      %141 = vector.shape_cast %140 : vector<1x1x384xf32> to vector<1x384xf32>
      %142 = vector.shape_cast %139 : vector<1x384xf32> to vector<1x1x384xf32>
      tpu.vector_store %arg12[%c2_123, %c1_124, %c384_125], %142 {strides = array<i32>} : memref<4x8x1536xf32, #tpu.memory_space<vmem>>, vector<1x1x384xf32>,
      %c10 = arith.constant 10 : index
      %c0_126 = arith.constant 0 : index
      %143 = vector.load %arg14[%c10, %c0_126] : memref<16x768xf32, #tpu.memory_space<vmem>>, vector<1x384xf32>
      %c2_127 = arith.constant 2 : index
      %c0_128 = arith.constant 0 : index
      %c768_129 = arith.constant 768 : index
      %144 = vector.load %arg12[%c2_127, %c0_128, %c768_129] : memref<4x8x1536xf32, #tpu.memory_space<vmem>>, vector<1x1x384xf32>
      %145 = vector.shape_cast %144 : vector<1x1x384xf32> to vector<1x384xf32>
      %146 = vector.shape_cast %143 : vector<1x384xf32> to vector<1x1x384xf32>
      tpu.vector_store %arg12[%c2_127, %c0_128, %c768_129], %146 {strides = array<i32>} : memref<4x8x1536xf32, #tpu.memory_space<vmem>>, vector<1x1x384xf32>,
      %c10_130 = arith.constant 10 : index
      %c384_131 = arith.constant 384 : index
      %147 = vector.load %arg14[%c10_130, %c384_131] : memref<16x768xf32, #tpu.memory_space<vmem>>, vector<1x384xf32>
      %c2_132 = arith.constant 2 : index
      %c1_133 = arith.constant 1 : index
      %c768_134 = arith.constant 768 : index
      %148 = vector.load %arg12[%c2_132, %c1_133, %c768_134] : memref<4x8x1536xf32, #tpu.memory_space<vmem>>, vector<1x1x384xf32>
      %149 = vector.shape_cast %148 : vector<1x1x384xf32> to vector<1x384xf32>
      %150 = vector.shape_cast %147 : vector<1x384xf32> to vector<1x1x384xf32>
      tpu.vector_store %arg12[%c2_132, %c1_133, %c768_134], %150 {strides = array<i32>} : memref<4x8x1536xf32, #tpu.memory_space<vmem>>, vector<1x1x384xf32>,
      %c11 = arith.constant 11 : index
      %c0_135 = arith.constant 0 : index
      %151 = vector.load %arg14[%c11, %c0_135] : memref<16x768xf32, #tpu.memory_space<vmem>>, vector<1x384xf32>
      %c2_136 = arith.constant 2 : index
      %c0_137 = arith.constant 0 : index
      %c1152_138 = arith.constant 1152 : index
      %152 = vector.load %arg12[%c2_136, %c0_137, %c1152_138] : memref<4x8x1536xf32, #tpu.memory_space<vmem>>, vector<1x1x384xf32>
      %153 = vector.shape_cast %152 : vector<1x1x384xf32> to vector<1x384xf32>
      %154 = vector.shape_cast %151 : vector<1x384xf32> to vector<1x1x384xf32>
      tpu.vector_store %arg12[%c2_136, %c0_137, %c1152_138], %154 {strides = array<i32>} : memref<4x8x1536xf32, #tpu.memory_space<vmem>>, vector<1x1x384xf32>,
      %c11_139 = arith.constant 11 : index
      %c384_140 = arith.constant 384 : index
      %155 = vector.load %arg14[%c11_139, %c384_140] : memref<16x768xf32, #tpu.memory_space<vmem>>, vector<1x384xf32>
      %c2_141 = arith.constant 2 : index
      %c1_142 = arith.constant 1 : index
      %c1152_143 = arith.constant 1152 : index
      %156 = vector.load %arg12[%c2_141, %c1_142, %c1152_143] : memref<4x8x1536xf32, #tpu.memory_space<vmem>>, vector<1x1x384xf32>
      %157 = vector.shape_cast %156 : vector<1x1x384xf32> to vector<1x384xf32>
      %158 = vector.shape_cast %155 : vector<1x384xf32> to vector<1x1x384xf32>
      tpu.vector_store %arg12[%c2_141, %c1_142, %c1152_143], %158 {strides = array<i32>} : memref<4x8x1536xf32, #tpu.memory_space<vmem>>, vector<1x1x384xf32>,
      %c12 = arith.constant 12 : index
      %c0_144 = arith.constant 0 : index
      %159 = vector.load %arg14[%c12, %c0_144] : memref<16x768xf32, #tpu.memory_space<vmem>>, vector<1x384xf32>
      %c3_145 = arith.constant 3 : index
      %c0_146 = arith.constant 0 : index
      %c0_147 = arith.constant 0 : index
      %160 = vector.load %arg12[%c3_145, %c0_146, %c0_147] : memref<4x8x1536xf32, #tpu.memory_space<vmem>>, vector<1x1x384xf32>
      %161 = vector.shape_cast %160 : vector<1x1x384xf32> to vector<1x384xf32>
      %162 = vector.shape_cast %159 : vector<1x384xf32> to vector<1x1x384xf32>
      tpu.vector_store %arg12[%c3_145, %c0_146, %c0_147], %162 {strides = array<i32>} : memref<4x8x1536xf32, #tpu.memory_space<vmem>>, vector<1x1x384xf32>,
      %c12_148 = arith.constant 12 : index
      %c384_149 = arith.constant 384 : index
      %163 = vector.load %arg14[%c12_148, %c384_149] : memref<16x768xf32, #tpu.memory_space<vmem>>, vector<1x384xf32>
      %c3_150 = arith.constant 3 : index
      %c1_151 = arith.constant 1 : index
      %c0_152 = arith.constant 0 : index
      %164 = vector.load %arg12[%c3_150, %c1_151, %c0_152] : memref<4x8x1536xf32, #tpu.memory_space<vmem>>, vector<1x1x384xf32>
      %165 = vector.shape_cast %164 : vector<1x1x384xf32> to vector<1x384xf32>
      %166 = vector.shape_cast %163 : vector<1x384xf32> to vector<1x1x384xf32>
      tpu.vector_store %arg12[%c3_150, %c1_151, %c0_152], %166 {strides = array<i32>} : memref<4x8x1536xf32, #tpu.memory_space<vmem>>, vector<1x1x384xf32>,
      %c13 = arith.constant 13 : index
      %c0_153 = arith.constant 0 : index
      %167 = vector.load %arg14[%c13, %c0_153] : memref<16x768xf32, #tpu.memory_space<vmem>>, vector<1x384xf32>
      %c3_154 = arith.constant 3 : index
      %c0_155 = arith.constant 0 : index
      %c384_156 = arith.constant 384 : index
      %168 = vector.load %arg12[%c3_154, %c0_155, %c384_156] : memref<4x8x1536xf32, #tpu.memory_space<vmem>>, vector<1x1x384xf32>
      %169 = vector.shape_cast %168 : vector<1x1x384xf32> to vector<1x384xf32>
      %170 = vector.shape_cast %167 : vector<1x384xf32> to vector<1x1x384xf32>
      tpu.vector_store %arg12[%c3_154, %c0_155, %c384_156], %170 {strides = array<i32>} : memref<4x8x1536xf32, #tpu.memory_space<vmem>>, vector<1x1x384xf32>,
      %c13_157 = arith.constant 13 : index
      %c384_158 = arith.constant 384 : index
      %171 = vector.load %arg14[%c13_157, %c384_158] : memref<16x768xf32, #tpu.memory_space<vmem>>, vector<1x384xf32>
      %c3_159 = arith.constant 3 : index
      %c1_160 = arith.constant 1 : index
      %c384_161 = arith.constant 384 : index
      %172 = vector.load %arg12[%c3_159, %c1_160, %c384_161] : memref<4x8x1536xf32, #tpu.memory_space<vmem>>, vector<1x1x384xf32>
      %173 = vector.shape_cast %172 : vector<1x1x384xf32> to vector<1x384xf32>
      %174 = vector.shape_cast %171 : vector<1x384xf32> to vector<1x1x384xf32>
      tpu.vector_store %arg12[%c3_159, %c1_160, %c384_161], %174 {strides = array<i32>} : memref<4x8x1536xf32, #tpu.memory_space<vmem>>, vector<1x1x384xf32>,
      %c14 = arith.constant 14 : index
      %c0_162 = arith.constant 0 : index
      %175 = vector.load %arg14[%c14, %c0_162] : memref<16x768xf32, #tpu.memory_space<vmem>>, vector<1x384xf32>
      %c3_163 = arith.constant 3 : index
      %c0_164 = arith.constant 0 : index
      %c768_165 = arith.constant 768 : index
      %176 = vector.load %arg12[%c3_163, %c0_164, %c768_165] : memref<4x8x1536xf32, #tpu.memory_space<vmem>>, vector<1x1x384xf32>
      %177 = vector.shape_cast %176 : vector<1x1x384xf32> to vector<1x384xf32>
      %178 = vector.shape_cast %175 : vector<1x384xf32> to vector<1x1x384xf32>
      tpu.vector_store %arg12[%c3_163, %c0_164, %c768_165], %178 {strides = array<i32>} : memref<4x8x1536xf32, #tpu.memory_space<vmem>>, vector<1x1x384xf32>,
      %c14_166 = arith.constant 14 : index
      %c384_167 = arith.constant 384 : index
      %179 = vector.load %arg14[%c14_166, %c384_167] : memref<16x768xf32, #tpu.memory_space<vmem>>, vector<1x384xf32>
      %c3_168 = arith.constant 3 : index
      %c1_169 = arith.constant 1 : index
      %c768_170 = arith.constant 768 : index
      %180 = vector.load %arg12[%c3_168, %c1_169, %c768_170] : memref<4x8x1536xf32, #tpu.memory_space<vmem>>, vector<1x1x384xf32>
      %181 = vector.shape_cast %180 : vector<1x1x384xf32> to vector<1x384xf32>
      %182 = vector.shape_cast %179 : vector<1x384xf32> to vector<1x1x384xf32>
      tpu.vector_store %arg12[%c3_168, %c1_169, %c768_170], %182 {strides = array<i32>} : memref<4x8x1536xf32, #tpu.memory_space<vmem>>, vector<1x1x384xf32>,
      %c15 = arith.constant 15 : index
      %c0_171 = arith.constant 0 : index
      %183 = vector.load %arg14[%c15, %c0_171] : memref<16x768xf32, #tpu.memory_space<vmem>>, vector<1x384xf32>
      %c3_172 = arith.constant 3 : index
      %c0_173 = arith.constant 0 : index
      %c1152_174 = arith.constant 1152 : index
      %184 = vector.load %arg12[%c3_172, %c0_173, %c1152_174] : memref<4x8x1536xf32, #tpu.memory_space<vmem>>, vector<1x1x384xf32>
      %185 = vector.shape_cast %184 : vector<1x1x384xf32> to vector<1x384xf32>
      %186 = vector.shape_cast %183 : vector<1x384xf32> to vector<1x1x384xf32>
      tpu.vector_store %arg12[%c3_172, %c0_173, %c1152_174], %186 {strides = array<i32>} : memref<4x8x1536xf32, #tpu.memory_space<vmem>>, vector<1x1x384xf32>,
      %c15_175 = arith.constant 15 : index
      %c384_176 = arith.constant 384 : index
      %187 = vector.load %arg14[%c15_175, %c384_176] : memref<16x768xf32, #tpu.memory_space<vmem>>, vector<1x384xf32>
      %c3_177 = arith.constant 3 : index
      %c1_178 = arith.constant 1 : index
      %c1152_179 = arith.constant 1152 : index
      %188 = vector.load %arg12[%c3_177, %c1_178, %c1152_179] : memref<4x8x1536xf32, #tpu.memory_space<vmem>>, vector<1x1x384xf32>
      %189 = vector.shape_cast %188 : vector<1x1x384xf32> to vector<1x384xf32>
      %190 = vector.shape_cast %187 : vector<1x384xf32> to vector<1x1x384xf32>
      tpu.vector_store %arg12[%c3_177, %c1_178, %c1152_179], %190 {strides = array<i32>} : memref<4x8x1536xf32, #tpu.memory_space<vmem>>, vector<1x1x384xf32>,
    } else {
    }
    %3 = arith.index_cast %arg0 : i32 to index
    %c0 = arith.constant 0 : index
    %c0_1 = arith.constant 0 : index
    %4 = vector.load %arg12[%3, %c0, %c0_1] : memref<4x8x1536xf32, #tpu.memory_space<vmem>>, vector<1x8x1536xf32>
    %5 = vector.shape_cast %4 : vector<1x8x1536xf32> to vector<8x1536xf32>
    %6 = arith.truncf %5 : vector<8x1536xf32> to vector<8x1536xbf16>
    %c0_2 = arith.constant 0 : index
    %c0_3 = arith.constant 0 : index
    %7 = vector.load %arg13[%c0_2, %c0_3] : memref<8x600xf32, #tpu.memory_space<vmem>>, vector<8x600xf32>
    %c0_4 = arith.constant 0 : index
    %c0_5 = arith.constant 0 : index
    %8 = vector.load %arg7[%c0_4, %c0_5] : memref<1536x600xbf16, #tpu.memory_space<vmem>>, vector<1536x600xbf16>
    %cst = arith.constant dense<0.000000e+00> : vector<8x600xf32>
    %9 = tpu.matmul %6, %8, %cst {dimension_numbers = #tpu.dot_dimension_numbers<[1], [0], [0], [1], [0, 0, 1, 1], [], []>} : vector<8x1536xbf16>, vector<1536x600xbf16>, vector<8x600xf32> -> vector<8x600xf32>
    %10 = arith.addf %7, %9 : vector<8x600xf32>
    %c0_6 = arith.constant 0 : index
    %c0_7 = arith.constant 0 : index
    %11 = vector.load %arg13[%c0_6, %c0_7] : memref<8x600xf32, #tpu.memory_space<vmem>>, vector<8x600xf32>
    tpu.vector_store %arg13[%c0_6, %c0_7], %10 {strides = array<i32>} : memref<8x600xf32, #tpu.memory_space<vmem>>, vector<8x600xf32>,
    %c3_i32 = arith.constant 3 : i32
    %12 = arith.cmpi eq, %arg0, %c3_i32 : i32
    %13 = arith.extui %12 : i1 to i32
    %c0_i32_8 = arith.constant 0 : i32
    %14 = arith.cmpi ne, %13, %c0_i32_8 : i32
    scf.if %14 {
      %c0_9 = arith.constant 0 : index
      %c0_10 = arith.constant 0 : index
      %15 = vector.load %arg13[%c0_9, %c0_10] : memref<8x600xf32, #tpu.memory_space<vmem>>, vector<8x600xf32>
      %c0_11 = arith.constant 0 : index
      %c0_12 = arith.constant 0 : index
      %16 = vector.load %arg8[%c0_11, %c0_12] : memref<1x600xf32, #tpu.memory_space<vmem>>, vector<1x600xf32>
      %17 = vector.broadcast %16 : vector<1x600xf32> to vector<8x600xf32>
      %18 = arith.addf %15, %17 : vector<8x600xf32>
      %cst_13 = arith.constant 0.000000e+00 : f32
      %19 = vector.broadcast %cst_13 : f32 to vector<8x600xf32>
      %20 = arith.cmpf ogt, %18, %19 : vector<8x600xf32>
      %cst_14 = arith.constant 2.000000e-01 : f32
      %21 = vector.broadcast %cst_14 : f32 to vector<8x600xf32>
      %22 = arith.mulf %21, %18 : vector<8x600xf32>
      %23 = arith.select %20, %18, %22 : vector<8x600xi1>, vector<8x600xf32>
      %c0_15 = arith.constant 0 : index
      %c0_16 = arith.constant 0 : index
      %24 = vector.load %arg9[%c0_15, %c0_16] : memref<1x600xf32, #tpu.memory_space<vmem>>, vector<1x600xf32>
      %25 = vector.broadcast %24 : vector<1x600xf32> to vector<8x600xf32>
      %26 = arith.mulf %23, %25 : vector<8x600xf32>
      %cst_17 = arith.constant dense<0.000000e+00> : vector<8xf32>
      %27 = vector.multi_reduction <add>, %26, %cst_17 [1] : vector<8x600xf32> to vector<8xf32>
      %28 = vector.shape_cast %27 : vector<8xf32> to vector<8x1xf32>
      %c0_18 = arith.constant 0 : index
      %c0_19 = arith.constant 0 : index
      %29 = vector.load %arg10[%c0_18, %c0_19] : memref<1x1xf32, #tpu.memory_space<vmem>>, vector<1x1xf32>
      %30 = vector.broadcast %29 : vector<1x1xf32> to vector<8x1xf32>
      %31 = arith.addf %28, %30 : vector<8x1xf32>
      %32 = vector.extract_strided_slice %31 {offsets = [0, 0], sizes = [2, 1], strides = [1, 1]} : vector<8x1xf32> to vector<2x1xf32>
      %c0_20 = arith.constant 0 : index
      %c0_21 = arith.constant 0 : index
      %33 = vector.load %arg11[%c0_20, %c0_21] : memref<2x1xf32, #tpu.memory_space<vmem>>, vector<2x1xf32>
      tpu.vector_store %arg11[%c0_20, %c0_21], %32 {strides = array<i32>} : memref<2x1xf32, #tpu.memory_space<vmem>>, vector<2x1xf32>,
    } else {
    }
    return
  }
  func.func @transform_0(%arg0: i32) -> (i32, i32) {
    %c0_i32 = arith.constant 0 : i32
    %c0_i32_0 = arith.constant 0 : i32
    %c0_i32_1 = arith.constant 0 : i32
    return %c0_i32, %c0_i32_0 : i32, i32
  }
  func.func @transform_1(%arg0: i32) -> (i32, i32) {
    %c0_i32 = arith.constant 0 : i32
    %c0_i32_0 = arith.constant 0 : i32
    %c0_i32_1 = arith.constant 0 : i32
    return %c0_i32, %c0_i32_0 : i32, i32
  }
  func.func @transform_2(%arg0: i32) -> (i32, i32) {
    %c0_i32 = arith.constant 0 : i32
    %c0_i32_0 = arith.constant 0 : i32
    %c0_i32_1 = arith.constant 0 : i32
    return %c0_i32, %c0_i32_0 : i32, i32
  }
  func.func @transform_3(%arg0: i32) -> (i32, i32) {
    %c0_i32 = arith.constant 0 : i32
    %c0_i32_0 = arith.constant 0 : i32
    %c0_i32_1 = arith.constant 0 : i32
    return %c0_i32, %c0_i32_0 : i32, i32
  }
  func.func @transform_4(%arg0: i32) -> (i32, i32) {
    %c0_i32 = arith.constant 0 : i32
    %c0_i32_0 = arith.constant 0 : i32
    %c0_i32_1 = arith.constant 0 : i32
    return %c0_i32, %c0_i32_0 : i32, i32
  }
  func.func @transform_5(%arg0: i32) -> (i32, i32) {
    %c0_i32 = arith.constant 0 : i32
    %c0_i32_0 = arith.constant 0 : i32
    %c0_i32_1 = arith.constant 0 : i32
    return %c0_i32, %c0_i32_0 : i32, i32
  }
  func.func @transform_6(%arg0: i32) -> (i32, i32) {
    %c0_i32 = arith.constant 0 : i32
    %c0_i32_0 = arith.constant 0 : i32
    return %arg0, %c0_i32 : i32, i32
  }
  func.func @transform_7(%arg0: i32) -> (i32, i32) {
    %c0_i32 = arith.constant 0 : i32
    %c0_i32_0 = arith.constant 0 : i32
    %c0_i32_1 = arith.constant 0 : i32
    return %c0_i32, %c0_i32_0 : i32, i32
  }
  func.func @transform_8(%arg0: i32) -> (i32, i32) {
    %c0_i32 = arith.constant 0 : i32
    %c0_i32_0 = arith.constant 0 : i32
    %c0_i32_1 = arith.constant 0 : i32
    return %c0_i32, %c0_i32_0 : i32, i32
  }
  func.func @transform_9(%arg0: i32) -> (i32, i32) {
    %c0_i32 = arith.constant 0 : i32
    %c0_i32_0 = arith.constant 0 : i32
    %c0_i32_1 = arith.constant 0 : i32
    return %c0_i32, %c0_i32_0 : i32, i32
  }
  func.func @transform_10(%arg0: i32) -> (i32, i32) {
    %c0_i32 = arith.constant 0 : i32
    %c0_i32_0 = arith.constant 0 : i32
    %c0_i32_1 = arith.constant 0 : i32
    return %c0_i32, %c0_i32_0 : i32, i32
  }
}

</mosaic_0001>

<llo_original>
// kernel: discriminator_forward.1
$region0: #{discriminator_forward.1}
  #allocation0 [shape = 'u32[]', space=smem, size = 0x4, offset = 0x4, fixed_abs, tag = 'smem constant byte address 0x4 - core index']
  #allocation1 [shape = 'u32[144,128]{1,0:T(1,128)}', space=vmem, size = 0x12000, scoped, tag = 'internal scratch']
  #allocation2 [shape = 'f32[4,8,1536]{2,1,0:T(8,128)}', space=vmem, size = 0x30000, scoped, tag = 'scratch operand']
  #allocation3 [shape = 'f32[8,600]{1,0:T(8,128)}', space=vmem, size = 0x5000, scoped, tag = 'scratch operand']
  #allocation4 [shape = 'f32[16,768]{1,0:T(8,128)}', space=vmem, size = 0xc000, scoped, tag = 'scratch operand']
  #allocation5 [shape = 'f32[1,1]{1,0:T(1,128)S(1)}', space=vmem, size = 0x200, scoped, tag = 'scoped memory for discriminator_forward.1']
  %s0 = inlined_call_operand.vmem [shape: f32[20,1536], index: 0, kind: input, shape index: {}]
  %s1 = inlined_call_operand.vmem [shape: f32[1,1536], index: 1, kind: input, shape index: {}]
  %s2 = inlined_call_operand.vmem [shape: f32[16,20], index: 2, kind: input, shape index: {}]
  %s3 = inlined_call_operand.vmem [shape: f32[16,1], index: 3, kind: input, shape index: {}]
  %s4 = inlined_call_operand.vmem [shape: f32[16,1], index: 4, kind: input, shape index: {}]
  %s5 = inlined_call_operand.vmem [shape: f32[16,1], index: 5, kind: input, shape index: {}]
  %s6 = inlined_call_operand.vmem [shape: bf16[6144,600], index: 6, kind: input, shape index: {}]
  %s7 = inlined_call_operand.vmem [shape: f32[1,600], index: 7, kind: input, shape index: {}]
  %s8 = inlined_call_operand.vmem [shape: f32[1,600], index: 8, kind: input, shape index: {}]
  %s9 = inlined_call_operand.<no memory space> [shape: f32[1,1], index: 9, kind: input, shape index: {}]
  %s10 = inlined_call_operand.vmem [shape: f32[2,1], index: 10, kind: output, shape index: {}]
  %s11 = sld [smem:[#allocation0]]
  $region81: #{discriminator_forward.1} parent=0
    _
  %s13 = ssub.s32 1, %s11
  %s14 = scalar_select 0, %s13, %s11
  %v15 = vstv %s9
  %16 = vst [vmem:[#allocation5] sm:$0x1] %v15
  loop: start=0, step=1, limit=6
  $region2: #{discriminator_forward.1} parent=0 // loop_pre_header
    _
  $region3: #{discriminator_forward.1} parent=0 // loop_header
    %s18 = sphi 0, %s22
    %p19 = scmp.ge.s32.totalorder %s18, 6
    %s26 = sphi 0, %s26
    %s28 = sphi 0, %s26
    %s29 = sphi 0, %s28
    %s43 = sphi 0, %s29
    %s47 = sphi 0, %s47
    %s49 = sphi 0, %s47
    %s50 = sphi 0, %s49
    %s64 = sphi 0, %s50
    %s68 = sphi 0, %s68
    %s70 = sphi 0, %s68
    %s71 = sphi 0, %s70
    %s85 = sphi 0, %s71
    %s89 = sphi 0, %s89
    %s91 = sphi 0, %s89
    %s92 = sphi 0, %s91
    %s106 = sphi 0, %s92
    %s110 = sphi 0, %s110
    %s112 = sphi 0, %s110
    %s113 = sphi 0, %s112
    %s127 = sphi 0, %s113
    %s131 = sphi 0, %s131
    %s133 = sphi 0, %s131
    %s134 = sphi 0, %s133
    %s148 = sphi 0, %s134
    %s154 = sphi 0, %s156
    %s157 = sphi 0, %s154
    %s158 = sphi 0, %s157
    %s174 = sphi 0, %s158
    %s178 = sphi 0, %s178
    %s180 = sphi 0, %s178
    %s181 = sphi 0, %s180
    %s195 = sphi 0, %s181
    %s199 = sphi 0, %s199
    %s201 = sphi 0, %s199
    %s202 = sphi 0, %s201
    %s216 = sphi 0, %s202
    %s220 = sphi 0, %s220
    %s222 = sphi 0, %s220
    %s223 = sphi 0, %s222
    %s237 = sphi 0, %s223
    %s241 = sphi 0, %s241
    %s243 = sphi 0, %s241
    %s244 = sphi 0, %s243
    %s258 = sphi 0, %s244
  $region4: #{discriminator_forward.1} parent=0 // loop_header_branch
    %21 = sbr.rel (%p19) target = $region8
  $region5: #{discriminator_forward.1} parent=0 // loop_body
    %s23 = ssub.s32 %s18, 1
    %s24 = ssub.s32 %s18, 2
    %s25 = sadd.s32 %s18, 1
    %s27 = sadd.s32 %s26, 1
    %p30 = scmp.eq.s32.totalorder %s18, 3
    %p31 = scmp.ne.s32.totalorder %s26, %s28
    %p32 = scmp.eq.s32.totalorder %s18, 0
    %p33 = por %p31, %p32
    %p34 = scmp.ne.s32.totalorder %s26, %s28
    %p35 = scmp.eq.s32.totalorder %s23, 3
    %p36 = por %p34, %p35
    %p37 = scmp.ne.s32.totalorder %s28, %s29
    %p38 = scmp.eq.s32.totalorder %s23, 0
    %p39 = por %p37, %p38
    %p40 = scmp.ne.s32.totalorder %s28, %s29
    %p41 = scmp.eq.s32.totalorder %s24, 3
    %p42 = por %p40, %p41
    %p44 = scmp.ne.s32.totalorder %s29, %s43
    %p45 = scmp.eq.s32.totalorder %s24, 0
    %p46 = por %p44, %p45
    %s48 = sadd.s32 %s47, 1
    %p51 = scmp.eq.s32.totalorder %s18, 3
    %p52 = scmp.ne.s32.totalorder %s47, %s49
    %p53 = scmp.eq.s32.totalorder %s18, 0
    %p54 = por %p52, %p53
    %p55 = scmp.ne.s32.totalorder %s47, %s49
    %p56 = scmp.eq.s32.totalorder %s23, 3
    %p57 = por %p55, %p56
    %p58 = scmp.ne.s32.totalorder %s49, %s50
    %p59 = scmp.eq.s32.totalorder %s23, 0
    %p60 = por %p58, %p59
    %p61 = scmp.ne.s32.totalorder %s49, %s50
    %p62 = scmp.eq.s32.totalorder %s24, 3
    %p63 = por %p61, %p62
    %p65 = scmp.ne.s32.totalorder %s50, %s64
    %p66 = scmp.eq.s32.totalorder %s24, 0
    %p67 = por %p65, %p66
    %s69 = sadd.s32 %s68, 1
    %p72 = scmp.eq.s32.totalorder %s18, 3
    %p73 = scmp.ne.s32.totalorder %s68, %s70
    %p74 = scmp.eq.s32.totalorder %s18, 0
    %p75 = por %p73, %p74
    %p76 = scmp.ne.s32.totalorder %s68, %s70
    %p77 = scmp.eq.s32.totalorder %s23, 3
    %p78 = por %p76, %p77
    %p79 = scmp.ne.s32.totalorder %s70, %s71
    %p80 = scmp.eq.s32.totalorder %s23, 0
    %p81 = por %p79, %p80
    %p82 = scmp.ne.s32.totalorder %s70, %s71
    %p83 = scmp.eq.s32.totalorder %s24, 3
    %p84 = por %p82, %p83
    %p86 = scmp.ne.s32.totalorder %s71, %s85
    %p87 = scmp.eq.s32.totalorder %s24, 0
    %p88 = por %p86, %p87
    %s90 = sadd.s32 %s89, 1
    %p93 = scmp.eq.s32.totalorder %s18, 3
    %p94 = scmp.ne.s32.totalorder %s89, %s91
    %p95 = scmp.eq.s32.totalorder %s18, 0
    %p96 = por %p94, %p95
    %p97 = scmp.ne.s32.totalorder %s89, %s91
    %p98 = scmp.eq.s32.totalorder %s23, 3
    %p99 = por %p97, %p98
    %p100 = scmp.ne.s32.totalorder %s91, %s92
    %p101 = scmp.eq.s32.totalorder %s23, 0
    %p102 = por %p100, %p101
    %p103 = scmp.ne.s32.totalorder %s91, %s92
    %p104 = scmp.eq.s32.totalorder %s24, 3
    %p105 = por %p103, %p104
    %p107 = scmp.ne.s32.totalorder %s92, %s106
    %p108 = scmp.eq.s32.totalorder %s24, 0
    %p109 = por %p107, %p108
    %s111 = sadd.s32 %s110, 1
    %p114 = scmp.eq.s32.totalorder %s18, 3
    %p115 = scmp.ne.s32.totalorder %s110, %s112
    %p116 = scmp.eq.s32.totalorder %s18, 0
    %p117 = por %p115, %p116
    %p118 = scmp.ne.s32.totalorder %s110, %s112
    %p119 = scmp.eq.s32.totalorder %s23, 3
    %p120 = por %p118, %p119
    %p121 = scmp.ne.s32.totalorder %s112, %s113
    %p122 = scmp.eq.s32.totalorder %s23, 0
    %p123 = por %p121, %p122
    %p124 = scmp.ne.s32.totalorder %s112, %s113
    %p125 = scmp.eq.s32.totalorder %s24, 3
    %p126 = por %p124, %p125
    %p128 = scmp.ne.s32.totalorder %s113, %s127
    %p129 = scmp.eq.s32.totalorder %s24, 0
    %p130 = por %p128, %p129
    %s132 = sadd.s32 %s131, 1
    %p135 = scmp.eq.s32.totalorder %s18, 3
    %p136 = scmp.ne.s32.totalorder %s131, %s133
    %p137 = scmp.eq.s32.totalorder %s18, 0
    %p138 = por %p136, %p137
    %p139 = scmp.ne.s32.totalorder %s131, %s133
    %p140 = scmp.eq.s32.totalorder %s23, 3
    %p141 = por %p139, %p140
    %p142 = scmp.ne.s32.totalorder %s133, %s134
    %p143 = scmp.eq.s32.totalorder %s23, 0
    %p144 = por %p142, %p143
    %p145 = scmp.ne.s32.totalorder %s133, %s134
    %p146 = scmp.eq.s32.totalorder %s24, 3
    %p147 = por %p145, %p146
    %p149 = scmp.ne.s32.totalorder %s134, %s148
    %p150 = scmp.eq.s32.totalorder %s24, 0
    %p151 = por %p149, %p150
    %s152 = ssub.s32 %s18, %s25
    %p153 = scmp.eq.s32.totalorder %s152, 0
    %s155 = sadd.s32 %s154, 1
    %s156 = scalar_select %p153, %s154, %s155
    %p159 = pneg %p153
    %p160 = scmp.eq.s32.totalorder %s18, 3
    %p161 = por %p159, %p160
    %p162 = scmp.ne.s32.totalorder %s154, %s157
    %p163 = scmp.eq.s32.totalorder %s18, 0
    %p164 = por %p162, %p163
    %p165 = scmp.ne.s32.totalorder %s154, %s157
    %p166 = scmp.eq.s32.totalorder %s23, 3
    %p167 = por %p165, %p166
    %p168 = scmp.ne.s32.totalorder %s157, %s158
    %p169 = scmp.eq.s32.totalorder %s23, 0
    %p170 = por %p168, %p169
    %p171 = scmp.ne.s32.totalorder %s157, %s158
    %p172 = scmp.eq.s32.totalorder %s24, 3
    %p173 = por %p171, %p172
    %p175 = scmp.ne.s32.totalorder %s158, %s174
    %p176 = scmp.eq.s32.totalorder %s24, 0
    %p177 = por %p175, %p176
    %s179 = sadd.s32 %s178, 1
    %p182 = scmp.eq.s32.totalorder %s18, 3
    %p183 = scmp.ne.s32.totalorder %s178, %s180
    %p184 = scmp.eq.s32.totalorder %s18, 0
    %p185 = por %p183, %p184
    %p186 = scmp.ne.s32.totalorder %s178, %s180
    %p187 = scmp.eq.s32.totalorder %s23, 3
    %p188 = por %p186, %p187
    %p189 = scmp.ne.s32.totalorder %s180, %s181
    %p190 = scmp.eq.s32.totalorder %s23, 0
    %p191 = por %p189, %p190
    %p192 = scmp.ne.s32.totalorder %s180, %s181
    %p193 = scmp.eq.s32.totalorder %s24, 3
    %p194 = por %p192, %p193
    %p196 = scmp.ne.s32.totalorder %s181, %s195
    %p197 = scmp.eq.s32.totalorder %s24, 0
    %p198 = por %p196, %p197
    %s200 = sadd.s32 %s199, 1
    %p203 = scmp.eq.s32.totalorder %s18, 3
    %p204 = scmp.ne.s32.totalorder %s199, %s201
    %p205 = scmp.eq.s32.totalorder %s18, 0
    %p206 = por %p204, %p205
    %p207 = scmp.ne.s32.totalorder %s199, %s201
    %p208 = scmp.eq.s32.totalorder %s23, 3
    %p209 = por %p207, %p208
    %p210 = scmp.ne.s32.totalorder %s201, %s202
    %p211 = scmp.eq.s32.totalorder %s23, 0
    %p212 = por %p210, %p211
    %p213 = scmp.ne.s32.totalorder %s201, %s202
    %p214 = scmp.eq.s32.totalorder %s24, 3
    %p215 = por %p213, %p214
    %p217 = scmp.ne.s32.totalorder %s202, %s216
    %p218 = scmp.eq.s32.totalorder %s24, 0
    %p219 = por %p217, %p218
    %s221 = sadd.s32 %s220, 1
    %p224 = scmp.eq.s32.totalorder %s18, 3
    %p225 = scmp.ne.s32.totalorder %s220, %s222
    %p226 = scmp.eq.s32.totalorder %s18, 0
    %p227 = por %p225, %p226
    %p228 = scmp.ne.s32.totalorder %s220, %s222
    %p229 = scmp.eq.s32.totalorder %s23, 3
    %p230 = por %p228, %p229
    %p231 = scmp.ne.s32.totalorder %s222, %s223
    %p232 = scmp.eq.s32.totalorder %s23, 0
    %p233 = por %p231, %p232
    %p234 = scmp.ne.s32.totalorder %s222, %s223
    %p235 = scmp.eq.s32.totalorder %s24, 3
    %p236 = por %p234, %p235
    %p238 = scmp.ne.s32.totalorder %s223, %s237
    %p239 = scmp.eq.s32.totalorder %s24, 0
    %p240 = por %p238, %p239
    %s242 = sadd.s32 %s241, 1
    %p245 = scmp.eq.s32.totalorder %s18, 3
    %p246 = scmp.ne.s32.totalorder %s241, %s243
    %p247 = scmp.eq.s32.totalorder %s18, 0
    %p248 = por %p246, %p247
    %p249 = scmp.ne.s32.totalorder %s241, %s243
    %p250 = scmp.eq.s32.totalorder %s23, 3
    %p251 = por %p249, %p250
    %p252 = scmp.ne.s32.totalorder %s243, %s244
    %p253 = scmp.eq.s32.totalorder %s23, 0
    %p254 = por %p252, %p253
    %p255 = scmp.ne.s32.totalorder %s243, %s244
    %p256 = scmp.eq.s32.totalorder %s24, 3
    %p257 = por %p255, %p256
    %p259 = scmp.ne.s32.totalorder %s244, %s258
    %p260 = scmp.eq.s32.totalorder %s24, 0
    %p261 = por %p259, %p260
    %p262 = scmp.le.s32.totalorder 1, %s18
    %p263 = scmp.lt.s32.totalorder %s18, 5
    %p264 = pnand %p262, %p263
    %p265 = pneg %p264
    // Predicated region
    $region9: #{discriminator_forward.1} parent=5 // pred_check
      _
    $region10: #{discriminator_forward.1} parent=5 // pred_check_branch
      %267 = sbr.rel (%p264) target = $region12
    $region11: #{discriminator_forward.1} parent=5 // pred_region
      %s268 = ssub.s32 %s18, 1
      // Predicated region
      $region13: #{discriminator_forward.1} parent=11 // pred_check
        %p269 = pneg %p39
      $region14: #{discriminator_forward.1} parent=11 // pred_check_branch
        %271 = sbr.rel (%p269) target = $region16
      $region15: #{discriminator_forward.1} parent=11 // pred_region
        _
      $region16: #{discriminator_forward.1} parent=11 // pred_fallthru
        _
      // Predicated region
      $region17: #{discriminator_forward.1} parent=11 // pred_check
        %p272 = pneg %p60
      $region18: #{discriminator_forward.1} parent=11 // pred_check_branch
        %274 = sbr.rel (%p272) target = $region20
      $region19: #{discriminator_forward.1} parent=11 // pred_region
        _
      $region20: #{discriminator_forward.1} parent=11 // pred_fallthru
        _
      // Predicated region
      $region21: #{discriminator_forward.1} parent=11 // pred_check
        %p275 = pneg %p81
      $region22: #{discriminator_forward.1} parent=11 // pred_check_branch
        %277 = sbr.rel (%p275) target = $region24
      $region23: #{discriminator_forward.1} parent=11 // pred_region
        _
      $region24: #{discriminator_forward.1} parent=11 // pred_fallthru
        _
      // Predicated region
      $region25: #{discriminator_forward.1} parent=11 // pred_check
        %p278 = pneg %p102
      $region26: #{discriminator_forward.1} parent=11 // pred_check_branch
        %280 = sbr.rel (%p278) target = $region28
      $region27: #{discriminator_forward.1} parent=11 // pred_region
        _
      $region28: #{discriminator_forward.1} parent=11 // pred_fallthru
        _
      // Predicated region
      $region29: #{discriminator_forward.1} parent=11 // pred_check
        %p281 = pneg %p123
      $region30: #{discriminator_forward.1} parent=11 // pred_check_branch
        %283 = sbr.rel (%p281) target = $region32
      $region31: #{discriminator_forward.1} parent=11 // pred_region
        _
      $region32: #{discriminator_forward.1} parent=11 // pred_fallthru
        _
      // Predicated region
      $region33: #{discriminator_forward.1} parent=11 // pred_check
        %p284 = pneg %p144
      $region34: #{discriminator_forward.1} parent=11 // pred_check_branch
        %286 = sbr.rel (%p284) target = $region36
      $region35: #{discriminator_forward.1} parent=11 // pred_region
        _
      $region36: #{discriminator_forward.1} parent=11 // pred_fallthru
        _
      // Predicated region
      $region37: #{discriminator_forward.1} parent=11 // pred_check
        %p287 = pneg %p191
      $region38: #{discriminator_forward.1} parent=11 // pred_check_branch
        %289 = sbr.rel (%p287) target = $region40
      $region39: #{discriminator_forward.1} parent=11 // pred_region
        _
      $region40: #{discriminator_forward.1} parent=11 // pred_fallthru
        _
      // Predicated region
      $region41: #{discriminator_forward.1} parent=11 // pred_check
        %p290 = pneg %p212
      $region42: #{discriminator_forward.1} parent=11 // pred_check_branch
        %292 = sbr.rel (%p290) target = $region44
      $region43: #{discriminator_forward.1} parent=11 // pred_region
        _
      $region44: #{discriminator_forward.1} parent=11 // pred_fallthru
        _
      // Predicated region
      $region45: #{discriminator_forward.1} parent=11 // pred_check
        %p293 = pneg %p233
      $region46: #{discriminator_forward.1} parent=11 // pred_check_branch
        %295 = sbr.rel (%p293) target = $region48
      $region47: #{discriminator_forward.1} parent=11 // pred_region
        _
      $region48: #{discriminator_forward.1} parent=11 // pred_fallthru
        _
    $region12: #{discriminator_forward.1} parent=5 // pred_fallthru
      _
    %p296 = scmp.lt.s32.totalorder %s18, 4
    // Predicated region
    $region49: #{discriminator_forward.1} parent=5 // pred_check
      %p297 = pneg %p296
    $region50: #{discriminator_forward.1} parent=5 // pred_check_branch
      %299 = sbr.rel (%p297) target = $region52
    $region51: #{discriminator_forward.1} parent=5 // pred_region
      // Predicated region
      $region53: #{discriminator_forward.1} parent=51 // pred_check
        %p300 = pneg %p164
      $region54: #{discriminator_forward.1} parent=51 // pred_check_branch
        %302 = sbr.rel (%p300) target = $region56
      $region55: #{discriminator_forward.1} parent=51 // pred_region
        %s303 = smul.u32 192, %s18
        %p304 = scmp.lt.s32.totalorder %s303, 767
        %s305 = scalar_select %p304, %s303, 767
        %s306 = smul.addr %s305, 5
        %s307 = smul.addr %s306, 4
        %s308 = scalar_lea.vmem %s6, %s307
        %s309 = smul.u32 192, %s18
      $region56: #{discriminator_forward.1} parent=51 // pred_fallthru
        _
    $region52: #{discriminator_forward.1} parent=5 // pred_fallthru
      _
    %p310 = scmp.le.s32.totalorder 1, %s18
    %p311 = scmp.lt.s32.totalorder %s18, 5
    %p312 = pnand %p310, %p311
    %p313 = pneg %p312
    // Predicated region
    $region57: #{discriminator_forward.1} parent=5 // pred_check
      _
    $region58: #{discriminator_forward.1} parent=5 // pred_check_branch
      %315 = sbr.rel (%p312) target = $region60
    $region59: #{discriminator_forward.1} parent=5 // pred_region
      %s316 = ssub.s32 %s18, 1
      %p317 = pneg %p39
      %p318 = pneg %p36
      %p319 = pneg %p60
      %p320 = pneg %p57
      %p321 = pneg %p81
      %p322 = pneg %p78
      %p323 = pneg %p102
      %p324 = pneg %p99
      %p325 = pneg %p123
      %p326 = pneg %p120
      %p327 = pneg %p144
      %p328 = pneg %p141
      %s329 = smul.u32 192, %s23
      %p330 = scmp.lt.s32.totalorder %s329, 767
      %s331 = scalar_select %p330, %s329, 767
      %s332 = smul.addr %s331, 5
      %s333 = smul.addr %s332, 4
      %s334 = scalar_lea.vmem %s6, %s333
      %p335 = pneg %p170
      %p336 = pneg %p167
      %p337 = pneg %p191
      %p338 = pneg %p188
      %p339 = pneg %p212
      %p340 = pneg %p209
      %p341 = pneg %p233
      %p342 = pneg %p230
      %p343 = pneg %p254
      %p344 = pneg %p251
      %s345 = smul.u32 192, %s23
      %p346 = scmp.lt.s32.totalorder %s345, 767
      %s347 = scalar_select %p346, %s345, 767
      %s348 = smul.addr %s347, 5
      %s349 = smul.addr %s348, 4
      %s350 = scalar_lea.vmem %s6, %s349
      %s351 = smul.u32 192, %s23
      %p353 = scmp.eq.s32.totalorder %s23, 0
      // Predicated region
      $region61: #{discriminator_forward.1} parent=59 // pred_check
        %p354 = pneg %p353
      $region62: #{discriminator_forward.1} parent=59 // pred_check_branch
        %356 = sbr.rel (%p354) target = $region64
      $region63: #{discriminator_forward.1} parent=59 // pred_region
        %v357 = vld [vmem:[%s2] sm:$0xff]
        %v358 = vld [vmem:[%s2 + $0x8] sm:$0xff]
        %v359 = vld [vmem:[%s0] sm:$0xff]
        %v360 = vld [vmem:[%s0 + $0x8] sm:$0xff]
        %v361 = vld [vmem:[%s0 + $0x10] sm:$0xff]
        %v362 = vld [vmem:[%s0 + $0x18] sm:$0xff]
        %v363 = vld [vmem:[%s0 + $0x20] sm:$0xff]
        %v364 = vld [vmem:[%s0 + $0x28] sm:$0xff]
        %v365 = vld [vmem:[%s0 + $0x30] sm:$0xff]
        %v366 = vld [vmem:[%s0 + $0x38] sm:$0xff]
        %v367 = vld [vmem:[%s0 + $0x40] sm:$0xff]
        %v368 = vld [vmem:[%s0 + $0x48] sm:$0xff]
        %v369 = vld [vmem:[%s0 + $0x50] sm:$0xff]
        %v370 = vld [vmem:[%s0 + $0x58] sm:$0xff]
        %v371 = vld [vmem:[%s0 + $0x60] sm:$0xff]
        %v372 = vld [vmem:[%s0 + $0x68] sm:$0xff]
        %v373 = vld [vmem:[%s0 + $0x70] sm:$0xff]
        %v374 = vld [vmem:[%s0 + $0x78] sm:$0xff]
        %v375 = vld [vmem:[%s0 + $0x80] sm:$0xff]
        %v376 = vld [vmem:[%s0 + $0x88] sm:$0xff]
        %v377 = vld [vmem:[%s0 + $0x90] sm:$0xff]
        %v378 = vld [vmem:[%s0 + $0x98] sm:$0xff]
        %v379 = vld [vmem:[%s0 + $0xa0] sm:$0xff]
        %v380 = vld [vmem:[%s0 + $0xa8] sm:$0xff]
        %v381 = vld [vmem:[%s0 + $0xb0] sm:$0xff]
        %v382 = vld [vmem:[%s0 + $0xb8] sm:$0xff]
        %v383 = vld [vmem:[%s0 + $0xc0] sm:$0xf]
        %v384 = vld [vmem:[%s0 + $0xc8] sm:$0xf]
        %v385 = vld [vmem:[%s0 + $0xd0] sm:$0xf]
        %v386 = vld [vmem:[%s0 + $0xd8] sm:$0xf]
        %v387 = vld [vmem:[%s0 + $0xe0] sm:$0xf]
        %v388 = vld [vmem:[%s0 + $0xe8] sm:$0xf]
        %v389 = vld [vmem:[%s0 + $0xf0] sm:$0xf]
        %v390 = vld [vmem:[%s0 + $0xf8] sm:$0xf]
        %v391 = vld [vmem:[%s0 + $0x100] sm:$0xf]
        %v392 = vld [vmem:[%s0 + $0x108] sm:$0xf]
        %v393 = vld [vmem:[%s0 + $0x110] sm:$0xf]
        %v394 = vld [vmem:[%s0 + $0x118] sm:$0xf]
        %v395 = vld [vmem:[%s3] sm:$0xff]
        %v396 = vld [vmem:[%s3 + $0x8] sm:$0xff]
        %398 = vset.pattern.permute.xlu0 0
        %399 = vperm.xlu0 %398, %v395
        %v400 = vpop.permute.xlu0 %399
        %403 = vset.pattern.permute.xlu0 0
        %404 = vperm.xlu0 %403, %v396
        %v405 = vpop.permute.xlu0 %404
        %vm407 = vcmask 162816
        %v409 = vsel %vm407, %v357, 0
        %v412 = vsel %vm407, %v358, 0
        %vm414 = vcmask 1043456
        %v416 = vsel %vm414, %v383, 0
        %v419 = vsel %vm414, %v384, 0
        %v422 = vsel %vm414, %v385, 0
        %v425 = vsel %vm414, %v386, 0
        %v428 = vsel %vm414, %v387, 0
        %v431 = vsel %vm414, %v388, 0
        %v434 = vsel %vm414, %v389, 0
        %v437 = vsel %vm414, %v390, 0
        %v440 = vsel %vm414, %v391, 0
        %v443 = vsel %vm414, %v392, 0
        %v446 = vsel %vm414, %v393, 0
        %v449 = vsel %vm414, %v394, 0
        %451 = vmatprep.subr.mxu0 %v360
        %452 = vmatpush1.msra.mxu0 %v359
        %453 = vmatprep.subr.mxu0 %v372
        %454 = vmatpush1.msra.mxu0 %v371
        %455 = vmatprep.subr.mxu0 %v419
        %456 = vmatpush1.msra.mxu0 %v416
        %457 = vmatprep.subr.mxu0 0.0
        %458 = vmatpush1.msra.mxu0 0.0
        %459 = vmatprep.subr.mxu0 0.0
        %460 = vmatpush1.msra.mxu0 0.0
        %461 = vmatprep.subr.mxu0 0.0
        %462 = vmatpush1.msra.mxu0 0.0
        %463 = vmatprep.subr.mxu0 0.0
        %464 = vmatpush1.msra.mxu0 0.0
        %465 = vmatprep.subr.mxu0 0.0
        %466 = vmatpush1.msra.mxu0 0.0
        %467 = vmatprep.subr.mxu0 0.0
        %468 = vmatpush1.msra.mxu0 0.0
        %469 = vmatprep.subr.mxu0 0.0
        %470 = vmatpush1.msra.mxu0 0.0
        %471 = vmatprep.subr.mxu0 0.0
        %472 = vmatpush1.msra.mxu0 0.0
        %473 = vmatprep.subr.mxu0 0.0
        %474 = vmatpush1.msra.mxu0 0.0
        %475 = vmatprep.subr.mxu0 0.0
        %476 = vmatpush1.msra.mxu0 0.0
        %477 = vmatprep.subr.mxu0 0.0
        %478 = vmatpush1.msra.mxu0 0.0
        %479 = vmatprep.subr.mxu0 0.0
        %480 = vmatpush1.msra.mxu0 0.0
        %481 = vmatprep.subr.mxu0 0.0
        %482 = vmatpush1.msra.mxu0 0.0
        %483 = vmatprep.subr.mxu0 0.0
        %484 = vmatpush1.msra.mxu0 0.0
        %485 = vmatprep.subr.mxu0 0.0
        %486 = vmatpush1.msra.mxu0 0.0
        %487 = vmatprep.subr.mxu0 0.0
        %488 = vmatpush1.msra.mxu0 0.0
        %489 = vmatprep.subr.mxu0 0.0
        %490 = vmatpush1.msra.mxu0 0.0
        %491 = vmatprep.subr.mxu0 0.0
        %492 = vmatpush1.msra.mxu0 0.0
        %493 = vmatprep.subr.mxu0 0.0
        %494 = vmatpush1.msra.mxu0 0.0
        %495 = vmatprep.subr.mxu0 0.0
        %496 = vmatpush1.msra.mxu0 0.0
        %497 = vmatprep.subr.mxu0 0.0
        %498 = vmatpush1.msra.mxu0 0.0
        %499 = vmatprep.subr.mxu0 0.0
        %500 = vmatpush1.msra.mxu0 0.0
        %501 = vmatprep.subr.mxu0 0.0
        %502 = vmatpush1.msra.mxu0 0.0
        %503 = vmatprep.subr.mxu0 0.0
        %504 = vmatpush1.msra.mxu0 0.0
        %505 = vmatprep.subr.mxu0 0.0
        %506 = vmatpush1.msra.mxu0 0.0
        %507 = vmatprep.subr.mxu0 0.0
        %508 = vmatpush1.msra.mxu0 0.0
        %509 = vmatprep.subr.mxu0 0.0
        %510 = vmatpush1.msra.mxu0 0.0
        %511 = vmatprep.subr.mxu0 0.0
        %512 = vmatpush1.msra.mxu0 0.0
        %513 = vmatprep.subr.mxu0 0.0
        %514 = vmatpush1.msra.mxu0 0.0
        %515 = vmatprep.mubr.f32.mxu0 0.0
        %516 = vmatmul.mubr.f32.gmra.mrb[0].mxu0 %v409
        %v517 = vpop.f32.mrb[0].mxu0
        %v518 = vadd.f32 %v400, %v517
        %v519 = vpop.f32.mrb[0].mxu0
        %v520 = vadd.f32 %v400, %v519
        %521 = vmatprep.mubr.f32.mxu0 0.0
        %522 = vmatmul.mubr.f32.gmra.mrb[0].mxu0 %v412
        %v523 = vpop.f32.mrb[0].mxu0
        %v524 = vadd.f32 %v405, %v523
        %v525 = vpop.f32.mrb[0].mxu0
        %v526 = vadd.f32 %v405, %v525
        %527 = vdwg.mxu0
        %528 = vmatprep.subr.mxu0 %v362
        %529 = vmatpush1.msra.mxu0 %v361
        %530 = vmatprep.subr.mxu0 %v374
        %531 = vmatpush1.msra.mxu0 %v373
        %532 = vmatprep.subr.mxu0 %v425
        %533 = vmatpush1.msra.mxu0 %v422
        %534 = vmatprep.subr.mxu0 0.0
        %535 = vmatpush1.msra.mxu0 0.0
        %536 = vmatprep.subr.mxu0 0.0
        %537 = vmatpush1.msra.mxu0 0.0
        %538 = vmatprep.subr.mxu0 0.0
        %539 = vmatpush1.msra.mxu0 0.0
        %540 = vmatprep.subr.mxu0 0.0
        %541 = vmatpush1.msra.mxu0 0.0
        %542 = vmatprep.subr.mxu0 0.0
        %543 = vmatpush1.msra.mxu0 0.0
        %544 = vmatprep.subr.mxu0 0.0
        %545 = vmatpush1.msra.mxu0 0.0
        %546 = vmatprep.subr.mxu0 0.0
        %547 = vmatpush1.msra.mxu0 0.0
        %548 = vmatprep.subr.mxu0 0.0
        %549 = vmatpush1.msra.mxu0 0.0
        %550 = vmatprep.subr.mxu0 0.0
        %551 = vmatpush1.msra.mxu0 0.0
        %552 = vmatprep.subr.mxu0 0.0
        %553 = vmatpush1.msra.mxu0 0.0
        %554 = vmatprep.subr.mxu0 0.0
        %555 = vmatpush1.msra.mxu0 0.0
        %556 = vmatprep.subr.mxu0 0.0
        %557 = vmatpush1.msra.mxu0 0.0
        %558 = vmatprep.subr.mxu0 0.0
        %559 = vmatpush1.msra.mxu0 0.0
        %560 = vmatprep.subr.mxu0 0.0
        %561 = vmatpush1.msra.mxu0 0.0
        %562 = vmatprep.subr.mxu0 0.0
        %563 = vmatpush1.msra.mxu0 0.0
        %564 = vmatprep.subr.mxu0 0.0
        %565 = vmatpush1.msra.mxu0 0.0
        %566 = vmatprep.subr.mxu0 0.0
        %567 = vmatpush1.msra.mxu0 0.0
        %568 = vmatprep.subr.mxu0 0.0
        %569 = vmatpush1.msra.mxu0 0.0
        %570 = vmatprep.subr.mxu0 0.0
        %571 = vmatpush1.msra.mxu0 0.0
        %572 = vmatprep.subr.mxu0 0.0
        %573 = vmatpush1.msra.mxu0 0.0
        %574 = vmatprep.subr.mxu0 0.0
        %575 = vmatpush1.msra.mxu0 0.0
        %576 = vmatprep.subr.mxu0 0.0
        %577 = vmatpush1.msra.mxu0 0.0
        %578 = vmatprep.subr.mxu0 0.0
        %579 = vmatpush1.msra.mxu0 0.0
        %580 = vmatprep.subr.mxu0 0.0
        %581 = vmatpush1.msra.mxu0 0.0
        %582 = vmatprep.subr.mxu0 0.0
        %583 = vmatpush1.msra.mxu0 0.0
        %584 = vmatprep.subr.mxu0 0.0
        %585 = vmatpush1.msra.mxu0 0.0
        %586 = vmatprep.subr.mxu0 0.0
        %587 = vmatpush1.msra.mxu0 0.0
        %588 = vmatprep.subr.mxu0 0.0
        %589 = vmatpush1.msra.mxu0 0.0
        %590 = vmatprep.subr.mxu0 0.0
        %591 = vmatpush1.msra.mxu0 0.0
        %592 = vmatprep.mubr.f32.mxu0 0.0
        %593 = vmatmul.mubr.f32.gmra.mrb[0].mxu0 %v409
        %v594 = vpop.f32.mrb[0].mxu0
        %v595 = vadd.f32 %v400, %v594
        %v596 = vpop.f32.mrb[0].mxu0
        %v597 = vadd.f32 %v400, %v596
        %598 = vmatprep.mubr.f32.mxu0 0.0
        %599 = vmatmul.mubr.f32.gmra.mrb[0].mxu0 %v412
        %v600 = vpop.f32.mrb[0].mxu0
        %v601 = vadd.f32 %v405, %v600
        %v602 = vpop.f32.mrb[0].mxu0
        %v603 = vadd.f32 %v405, %v602
        %604 = vdwg.mxu0
        %605 = vmatprep.subr.mxu0 %v364
        %606 = vmatpush1.msra.mxu0 %v363
        %607 = vmatprep.subr.mxu0 %v376
        %608 = vmatpush1.msra.mxu0 %v375
        %609 = vmatprep.subr.mxu0 %v431
        %610 = vmatpush1.msra.mxu0 %v428
        %611 = vmatprep.subr.mxu0 0.0
        %612 = vmatpush1.msra.mxu0 0.0
        %613 = vmatprep.subr.mxu0 0.0
        %614 = vmatpush1.msra.mxu0 0.0
        %615 = vmatprep.subr.mxu0 0.0
        %616 = vmatpush1.msra.mxu0 0.0
        %617 = vmatprep.subr.mxu0 0.0
        %618 = vmatpush1.msra.mxu0 0.0
        %619 = vmatprep.subr.mxu0 0.0
        %620 = vmatpush1.msra.mxu0 0.0
        %621 = vmatprep.subr.mxu0 0.0
        %622 = vmatpush1.msra.mxu0 0.0
        %623 = vmatprep.subr.mxu0 0.0
        %624 = vmatpush1.msra.mxu0 0.0
        %625 = vmatprep.subr.mxu0 0.0
        %626 = vmatpush1.msra.mxu0 0.0
        %627 = vmatprep.subr.mxu0 0.0
        %628 = vmatpush1.msra.mxu0 0.0
        %629 = vmatprep.subr.mxu0 0.0
        %630 = vmatpush1.msra.mxu0 0.0
        %631 = vmatprep.subr.mxu0 0.0
        %632 = vmatpush1.msra.mxu0 0.0
        %633 = vmatprep.subr.mxu0 0.0
        %634 = vmatpush1.msra.mxu0 0.0
        %635 = vmatprep.subr.mxu0 0.0
        %636 = vmatpush1.msra.mxu0 0.0
        %637 = vmatprep.subr.mxu0 0.0
        %638 = vmatpush1.msra.mxu0 0.0
        %639 = vmatprep.subr.mxu0 0.0
        %640 = vmatpush1.msra.mxu0 0.0
        %641 = vmatprep.subr.mxu0 0.0
        %642 = vmatpush1.msra.mxu0 0.0
        %643 = vmatprep.subr.mxu0 0.0
        %644 = vmatpush1.msra.mxu0 0.0
        %645 = vmatprep.subr.mxu0 0.0
        %646 = vmatpush1.msra.mxu0 0.0
        %647 = vmatprep.subr.mxu0 0.0
        %648 = vmatpush1.msra.mxu0 0.0
        %649 = vmatprep.subr.mxu0 0.0
        %650 = vmatpush1.msra.mxu0 0.0
        %651 = vmatprep.subr.mxu0 0.0
        %652 = vmatpush1.msra.mxu0 0.0
        %653 = vmatprep.subr.mxu0 0.0
        %654 = vmatpush1.msra.mxu0 0.0
        %655 = vmatprep.subr.mxu0 0.0
        %656 = vmatpush1.msra.mxu0 0.0
        %657 = vmatprep.subr.mxu0 0.0
        %658 = vmatpush1.msra.mxu0 0.0
        %659 = vmatprep.subr.mxu0 0.0
        %660 = vmatpush1.msra.mxu0 0.0
        %661 = vmatprep.subr.mxu0 0.0
        %662 = vmatpush1.msra.mxu0 0.0
        %663 = vmatprep.subr.mxu0 0.0
        %664 = vmatpush1.msra.mxu0 0.0
        %665 = vmatprep.subr.mxu0 0.0
        %666 = vmatpush1.msra.mxu0 0.0
        %667 = vmatprep.subr.mxu0 0.0
        %668 = vmatpush1.msra.mxu0 0.0
        %669 = vmatprep.mubr.f32.mxu0 0.0
        %670 = vmatmul.mubr.f32.gmra.mrb[0].mxu0 %v409
        %v671 = vpop.f32.mrb[0].mxu0
        %v672 = vadd.f32 %v400, %v671
        %v673 = vpop.f32.mrb[0].mxu0
        %v674 = vadd.f32 %v400, %v673
        %675 = vmatprep.mubr.f32.mxu0 0.0
        %676 = vmatmul.mubr.f32.gmra.mrb[0].mxu0 %v412
        %v677 = vpop.f32.mrb[0].mxu0
        %v678 = vadd.f32 %v405, %v677
        %v679 = vpop.f32.mrb[0].mxu0
        %v680 = vadd.f32 %v405, %v679
        %681 = vdwg.mxu0
        %682 = vmatprep.subr.mxu0 %v366
        %683 = vmatpush1.msra.mxu0 %v365
        %684 = vmatprep.subr.mxu0 %v378
        %685 = vmatpush1.msra.mxu0 %v377
        %686 = vmatprep.subr.mxu0 %v437
        %687 = vmatpush1.msra.mxu0 %v434
        %688 = vmatprep.subr.mxu0 0.0
        %689 = vmatpush1.msra.mxu0 0.0
        %690 = vmatprep.subr.mxu0 0.0
        %691 = vmatpush1.msra.mxu0 0.0
        %692 = vmatprep.subr.mxu0 0.0
        %693 = vmatpush1.msra.mxu0 0.0
        %694 = vmatprep.subr.mxu0 0.0
        %695 = vmatpush1.msra.mxu0 0.0
        %696 = vmatprep.subr.mxu0 0.0
        %697 = vmatpush1.msra.mxu0 0.0
        %698 = vmatprep.subr.mxu0 0.0
        %699 = vmatpush1.msra.mxu0 0.0
        %700 = vmatprep.subr.mxu0 0.0
        %701 = vmatpush1.msra.mxu0 0.0
        %702 = vmatprep.subr.mxu0 0.0
        %703 = vmatpush1.msra.mxu0 0.0
        %704 = vmatprep.subr.mxu0 0.0
        %705 = vmatpush1.msra.mxu0 0.0
        %706 = vmatprep.subr.mxu0 0.0
        %707 = vmatpush1.msra.mxu0 0.0
        %708 = vmatprep.subr.mxu0 0.0
        %709 = vmatpush1.msra.mxu0 0.0
        %710 = vmatprep.subr.mxu0 0.0
        %711 = vmatpush1.msra.mxu0 0.0
        %712 = vmatprep.subr.mxu0 0.0
        %713 = vmatpush1.msra.mxu0 0.0
        %714 = vmatprep.subr.mxu0 0.0
        %715 = vmatpush1.msra.mxu0 0.0
        %716 = vmatprep.subr.mxu0 0.0
        %717 = vmatpush1.msra.mxu0 0.0
        %718 = vmatprep.subr.mxu0 0.0
        %719 = vmatpush1.msra.mxu0 0.0
        %720 = vmatprep.subr.mxu0 0.0
        %721 = vmatpush1.msra.mxu0 0.0
        %722 = vmatprep.subr.mxu0 0.0
        %723 = vmatpush1.msra.mxu0 0.0
        %724 = vmatprep.subr.mxu0 0.0
        %725 = vmatpush1.msra.mxu0 0.0
        %726 = vmatprep.subr.mxu0 0.0
        %727 = vmatpush1.msra.mxu0 0.0
        %728 = vmatprep.subr.mxu0 0.0
        %729 = vmatpush1.msra.mxu0 0.0
        %730 = vmatprep.subr.mxu0 0.0
        %731 = vmatpush1.msra.mxu0 0.0
        %732 = vmatprep.subr.mxu0 0.0
        %733 = vmatpush1.msra.mxu0 0.0
        %734 = vmatprep.subr.mxu0 0.0
        %735 = vmatpush1.msra.mxu0 0.0
        %736 = vmatprep.subr.mxu0 0.0
        %737 = vmatpush1.msra.mxu0 0.0
        %738 = vmatprep.subr.mxu0 0.0
        %739 = vmatpush1.msra.mxu0 0.0
        %740 = vmatprep.subr.mxu0 0.0
        %741 = vmatpush1.msra.mxu0 0.0
        %742 = vmatprep.subr.mxu0 0.0
        %743 = vmatpush1.msra.mxu0 0.0
        %744 = vmatprep.subr.mxu0 0.0
        %745 = vmatpush1.msra.mxu0 0.0
        %746 = vmatprep.mubr.f32.mxu0 0.0
        %747 = vmatmul.mubr.f32.gmra.mrb[0].mxu0 %v409
        %v748 = vpop.f32.mrb[0].mxu0
        %v749 = vadd.f32 %v400, %v748
        %v750 = vpop.f32.mrb[0].mxu0
        %v751 = vadd.f32 %v400, %v750
        %752 = vmatprep.mubr.f32.mxu0 0.0
        %753 = vmatmul.mubr.f32.gmra.mrb[0].mxu0 %v412
        %v754 = vpop.f32.mrb[0].mxu0
        %v755 = vadd.f32 %v405, %v754
        %v756 = vpop.f32.mrb[0].mxu0
        %v757 = vadd.f32 %v405, %v756
        %758 = vdwg.mxu0
        %759 = vmatprep.subr.mxu0 %v368
        %760 = vmatpush1.msra.mxu0 %v367
        %761 = vmatprep.subr.mxu0 %v380
        %762 = vmatpush1.msra.mxu0 %v379
        %763 = vmatprep.subr.mxu0 %v443
        %764 = vmatpush1.msra.mxu0 %v440
        %765 = vmatprep.subr.mxu0 0.0
        %766 = vmatpush1.msra.mxu0 0.0
        %767 = vmatprep.subr.mxu0 0.0
        %768 = vmatpush1.msra.mxu0 0.0
        %769 = vmatprep.subr.mxu0 0.0
        %770 = vmatpush1.msra.mxu0 0.0
        %771 = vmatprep.subr.mxu0 0.0
        %772 = vmatpush1.msra.mxu0 0.0
        %773 = vmatprep.subr.mxu0 0.0
        %774 = vmatpush1.msra.mxu0 0.0
        %775 = vmatprep.subr.mxu0 0.0
        %776 = vmatpush1.msra.mxu0 0.0
        %777 = vmatprep.subr.mxu0 0.0
        %778 = vmatpush1.msra.mxu0 0.0
        %779 = vmatprep.subr.mxu0 0.0
        %780 = vmatpush1.msra.mxu0 0.0
        %781 = vmatprep.subr.mxu0 0.0
        %782 = vmatpush1.msra.mxu0 0.0
        %783 = vmatprep.subr.mxu0 0.0
        %784 = vmatpush1.msra.mxu0 0.0
        %785 = vmatprep.subr.mxu0 0.0
        %786 = vmatpush1.msra.mxu0 0.0
        %787 = vmatprep.subr.mxu0 0.0
        %788 = vmatpush1.msra.mxu0 0.0
        %789 = vmatprep.subr.mxu0 0.0
        %790 = vmatpush1.msra.mxu0 0.0
        %791 = vmatprep.subr.mxu0 0.0
        %792 = vmatpush1.msra.mxu0 0.0
        %793 = vmatprep.subr.mxu0 0.0
        %794 = vmatpush1.msra.mxu0 0.0
        %795 = vmatprep.subr.mxu0 0.0
        %796 = vmatpush1.msra.mxu0 0.0
        %797 = vmatprep.subr.mxu0 0.0
        %798 = vmatpush1.msra.mxu0 0.0
        %799 = vmatprep.subr.mxu0 0.0
        %800 = vmatpush1.msra.mxu0 0.0
        %801 = vmatprep.subr.mxu0 0.0
        %802 = vmatpush1.msra.mxu0 0.0
        %803 = vmatprep.subr.mxu0 0.0
        %804 = vmatpush1.msra.mxu0 0.0
        %805 = vmatprep.subr.mxu0 0.0
        %806 = vmatpush1.msra.mxu0 0.0
        %807 = vmatprep.subr.mxu0 0.0
        %808 = vmatpush1.msra.mxu0 0.0
        %809 = vmatprep.subr.mxu0 0.0
        %810 = vmatpush1.msra.mxu0 0.0
        %811 = vmatprep.subr.mxu0 0.0
        %812 = vmatpush1.msra.mxu0 0.0
        %813 = vmatprep.subr.mxu0 0.0
        %814 = vmatpush1.msra.mxu0 0.0
        %815 = vmatprep.subr.mxu0 0.0
        %816 = vmatpush1.msra.mxu0 0.0
        %817 = vmatprep.subr.mxu0 0.0
        %818 = vmatpush1.msra.mxu0 0.0
        %819 = vmatprep.subr.mxu0 0.0
        %820 = vmatpush1.msra.mxu0 0.0
        %821 = vmatprep.subr.mxu0 0.0
        %822 = vmatpush1.msra.mxu0 0.0
        %823 = vmatprep.mubr.f32.mxu0 0.0
        %824 = vmatmul.mubr.f32.gmra.mrb[0].mxu0 %v409
        %v825 = vpop.f32.mrb[0].mxu0
        %v826 = vadd.f32 %v400, %v825
        %v827 = vpop.f32.mrb[0].mxu0
        %v828 = vadd.f32 %v400, %v827
        %829 = vmatprep.mubr.f32.mxu0 0.0
        %830 = vmatmul.mubr.f32.gmra.mrb[0].mxu0 %v412
        %v831 = vpop.f32.mrb[0].mxu0
        %v832 = vadd.f32 %v405, %v831
        %v833 = vpop.f32.mrb[0].mxu0
        %v834 = vadd.f32 %v405, %v833
        %835 = vdwg.mxu0
        %836 = vmatprep.subr.mxu0 %v370
        %837 = vmatpush1.msra.mxu0 %v369
        %838 = vmatprep.subr.mxu0 %v382
        %839 = vmatpush1.msra.mxu0 %v381
        %840 = vmatprep.subr.mxu0 %v449
        %841 = vmatpush1.msra.mxu0 %v446
        %842 = vmatprep.subr.mxu0 0.0
        %843 = vmatpush1.msra.mxu0 0.0
        %844 = vmatprep.subr.mxu0 0.0
        %845 = vmatpush1.msra.mxu0 0.0
        %846 = vmatprep.subr.mxu0 0.0
        %847 = vmatpush1.msra.mxu0 0.0
        %848 = vmatprep.subr.mxu0 0.0
        %849 = vmatpush1.msra.mxu0 0.0
        %850 = vmatprep.subr.mxu0 0.0
        %851 = vmatpush1.msra.mxu0 0.0
        %852 = vmatprep.subr.mxu0 0.0
        %853 = vmatpush1.msra.mxu0 0.0
        %854 = vmatprep.subr.mxu0 0.0
        %855 = vmatpush1.msra.mxu0 0.0
        %856 = vmatprep.subr.mxu0 0.0
        %857 = vmatpush1.msra.mxu0 0.0
        %858 = vmatprep.subr.mxu0 0.0
        %859 = vmatpush1.msra.mxu0 0.0
        %860 = vmatprep.subr.mxu0 0.0
        %861 = vmatpush1.msra.mxu0 0.0
        %862 = vmatprep.subr.mxu0 0.0
        %863 = vmatpush1.msra.mxu0 0.0
        %864 = vmatprep.subr.mxu0 0.0
        %865 = vmatpush1.msra.mxu0 0.0
        %866 = vmatprep.subr.mxu0 0.0
        %867 = vmatpush1.msra.mxu0 0.0
        %868 = vmatprep.subr.mxu0 0.0
        %869 = vmatpush1.msra.mxu0 0.0
        %870 = vmatprep.subr.mxu0 0.0
        %871 = vmatpush1.msra.mxu0 0.0
        %872 = vmatprep.subr.mxu0 0.0
        %873 = vmatpush1.msra.mxu0 0.0
        %874 = vmatprep.subr.mxu0 0.0
        %875 = vmatpush1.msra.mxu0 0.0
        %876 = vmatprep.subr.mxu0 0.0
        %877 = vmatpush1.msra.mxu0 0.0
        %878 = vmatprep.subr.mxu0 0.0
        %879 = vmatpush1.msra.mxu0 0.0
        %880 = vmatprep.subr.mxu0 0.0
        %881 = vmatpush1.msra.mxu0 0.0
        %882 = vmatprep.subr.mxu0 0.0
        %883 = vmatpush1.msra.mxu0 0.0
        %884 = vmatprep.subr.mxu0 0.0
        %885 = vmatpush1.msra.mxu0 0.0
        %886 = vmatprep.subr.mxu0 0.0
        %887 = vmatpush1.msra.mxu0 0.0
        %888 = vmatprep.subr.mxu0 0.0
        %889 = vmatpush1.msra.mxu0 0.0
        %890 = vmatprep.subr.mxu0 0.0
        %891 = vmatpush1.msra.mxu0 0.0
        %892 = vmatprep.subr.mxu0 0.0
        %893 = vmatpush1.msra.mxu0 0.0
        %894 = vmatprep.subr.mxu0 0.0
        %895 = vmatpush1.msra.mxu0 0.0
        %896 = vmatprep.subr.mxu0 0.0
        %897 = vmatpush1.msra.mxu0 0.0
        %898 = vmatprep.subr.mxu0 0.0
        %899 = vmatpush1.msra.mxu0 0.0
        %900 = vmatprep.mubr.f32.mxu0 0.0
        %901 = vmatmul.mubr.f32.gmra.mrb[0].mxu0 %v409
        %v902 = vpop.f32.mrb[0].mxu0
        %v903 = vadd.f32 %v400, %v902
        %v904 = vpop.f32.mrb[0].mxu0
        %v905 = vadd.f32 %v400, %v904
        %906 = vmatprep.mubr.f32.mxu0 0.0
        %907 = vmatmul.mubr.f32.gmra.mrb[0].mxu0 %v412
        %v908 = vpop.f32.mrb[0].mxu0
        %v909 = vadd.f32 %v405, %v908
        %v910 = vpop.f32.mrb[0].mxu0
        %v911 = vadd.f32 %v405, %v910
        %912 = vdwg.mxu0
        %v913 = vld [vmem:[%s1] sm:$0xff]
        %v914 = vld [vmem:[%s1 + $0x8] sm:$0xf]
        %v917 = vlaneseq
        %v918 = vshrl.u32 %v917, 7
        %v919 = vsub.s32 0, %v918
        %v920 = vrot.slane %v913, %v919
        %v921 = vlaneseq
        %v922 = vshrl.u32 %v921, 7
        %v923 = vsub.s32 1, %v922
        %v924 = vrot.slane %v913, %v923
        %v925 = vlaneseq
        %v926 = vshrl.u32 %v925, 7
        %v927 = vsub.s32 2, %v926
        %v928 = vrot.slane %v913, %v927
        %v929 = vlaneseq
        %v930 = vshrl.u32 %v929, 7
        %v931 = vsub.s32 3, %v930
        %v932 = vrot.slane %v913, %v931
        %v933 = vlaneseq
        %v934 = vshrl.u32 %v933, 7
        %v935 = vsub.s32 4, %v934
        %v936 = vrot.slane %v913, %v935
        %v937 = vlaneseq
        %v938 = vshrl.u32 %v937, 7
        %v939 = vsub.s32 5, %v938
        %v940 = vrot.slane %v913, %v939
        %v941 = vlaneseq
        %v942 = vshrl.u32 %v941, 7
        %v943 = vsub.s32 6, %v942
        %v944 = vrot.slane %v913, %v943
        %v945 = vlaneseq
        %v946 = vshrl.u32 %v945, 7
        %v947 = vsub.s32 7, %v946
        %v948 = vrot.slane %v913, %v947
        %v949 = vlaneseq
        %v950 = vshrl.u32 %v949, 7
        %v951 = vsub.s32 0, %v950
        %v952 = vrot.slane %v914, %v951
        %v953 = vlaneseq
        %v954 = vshrl.u32 %v953, 7
        %v955 = vsub.s32 1, %v954
        %v956 = vrot.slane %v914, %v955
        %v957 = vlaneseq
        %v958 = vshrl.u32 %v957, 7
        %v959 = vsub.s32 2, %v958
        %v960 = vrot.slane %v914, %v959
        %v961 = vlaneseq
        %v962 = vshrl.u32 %v961, 7
        %v963 = vsub.s32 3, %v962
        %v964 = vrot.slane %v914, %v963
        %v977 = vmul.f32 %v518, %v920
        %v978 = vmul.f32 %v520, %v924
        %v979 = vmul.f32 %v595, %v928
        %v980 = vmul.f32 %v597, %v932
        %v981 = vmul.f32 %v672, %v936
        %v982 = vmul.f32 %v674, %v940
        %v983 = vmul.f32 %v749, %v944
        %v984 = vmul.f32 %v751, %v948
        %v985 = vmul.f32 %v826, %v952
        %v986 = vmul.f32 %v828, %v956
        %v987 = vmul.f32 %v903, %v960
        %v988 = vmul.f32 %v905, %v964
        %v989 = vmul.f32 %v524, %v920
        %v990 = vmul.f32 %v526, %v924
        %v991 = vmul.f32 %v601, %v928
        %v992 = vmul.f32 %v603, %v932
        %v993 = vmul.f32 %v678, %v936
        %v994 = vmul.f32 %v680, %v940
        %v995 = vmul.f32 %v755, %v944
        %v996 = vmul.f32 %v757, %v948
        %v997 = vmul.f32 %v832, %v952
        %v998 = vmul.f32 %v834, %v956
        %v999 = vmul.f32 %v909, %v960
        %v1000 = vmul.f32 %v911, %v964
        %v1001 = vadd.f32 %v977, %v978
        %v1002 = vadd.f32 %v1001, %v979
        %v1003 = vadd.f32 %v1002, %v980
        %v1004 = vadd.f32 %v1003, %v981
        %v1005 = vadd.f32 %v1004, %v982
        %v1006 = vadd.f32 %v1005, %v983
        %v1007 = vadd.f32 %v1006, %v984
        %v1008 = vadd.f32 %v1007, %v985
        %v1009 = vadd.f32 %v1008, %v986
        %v1010 = vadd.f32 %v1009, %v987
        %v1011 = vadd.f32 %v1010, %v988
        %1012 = vadd.xlane.f32.xlu0 %v1011
        %v1013 = vpop.xlane.xlu0 %1012
        %v1014 = vadd.f32 %v989, %v990
        %v1015 = vadd.f32 %v1014, %v991
        %v1016 = vadd.f32 %v1015, %v992
        %v1017 = vadd.f32 %v1016, %v993
        %v1018 = vadd.f32 %v1017, %v994
        %v1019 = vadd.f32 %v1018, %v995
        %v1020 = vadd.f32 %v1019, %v996
        %v1021 = vadd.f32 %v1020, %v997
        %v1022 = vadd.f32 %v1021, %v998
        %v1023 = vadd.f32 %v1022, %v999
        %v1024 = vadd.f32 %v1023, %v1000
        %1025 = vadd.xlane.f32.xlu0 %v1024
        %v1026 = vpop.xlane.xlu0 %1025
        %v1027 = vrcp.pop 1492.0
        %v1028 = vmul.f32 %v1013, %v1027
        %v1029 = vmul.f32 %v1026, %v1027
        %v1030 = vsub.f32 %v518, %v1028
        %v1031 = vsub.f32 %v520, %v1028
        %v1032 = vsub.f32 %v595, %v1028
        %v1033 = vsub.f32 %v597, %v1028
        %v1034 = vsub.f32 %v672, %v1028
        %v1035 = vsub.f32 %v674, %v1028
        %v1036 = vsub.f32 %v749, %v1028
        %v1037 = vsub.f32 %v751, %v1028
        %v1038 = vsub.f32 %v826, %v1028
        %v1039 = vsub.f32 %v828, %v1028
        %v1040 = vsub.f32 %v903, %v1028
        %v1041 = vsub.f32 %v905, %v1028
        %v1042 = vsub.f32 %v524, %v1029
        %v1043 = vsub.f32 %v526, %v1029
        %v1044 = vsub.f32 %v601, %v1029
        %v1045 = vsub.f32 %v603, %v1029
        %v1046 = vsub.f32 %v678, %v1029
        %v1047 = vsub.f32 %v680, %v1029
        %v1048 = vsub.f32 %v755, %v1029
        %v1049 = vsub.f32 %v757, %v1029
        %v1050 = vsub.f32 %v832, %v1029
        %v1051 = vsub.f32 %v834, %v1029
        %v1052 = vsub.f32 %v909, %v1029
        %v1053 = vsub.f32 %v911, %v1029
        %v1054 = vmul.f32 %v1030, %v920
        %v1055 = vmul.f32 %v1031, %v924
        %v1056 = vmul.f32 %v1032, %v928
        %v1057 = vmul.f32 %v1033, %v932
        %v1058 = vmul.f32 %v1034, %v936
        %v1059 = vmul.f32 %v1035, %v940
        %v1060 = vmul.f32 %v1036, %v944
        %v1061 = vmul.f32 %v1037, %v948
        %v1062 = vmul.f32 %v1038, %v952
        %v1063 = vmul.f32 %v1039, %v956
        %v1064 = vmul.f32 %v1040, %v960
        %v1065 = vmul.f32 %v1041, %v964
        %v1066 = vmul.f32 %v1042, %v920
        %v1067 = vmul.f32 %v1043, %v924
        %v1068 = vmul.f32 %v1044, %v928
        %v1069 = vmul.f32 %v1045, %v932
        %v1070 = vmul.f32 %v1046, %v936
        %v1071 = vmul.f32 %v1047, %v940
        %v1072 = vmul.f32 %v1048, %v944
        %v1073 = vmul.f32 %v1049, %v948
        %v1074 = vmul.f32 %v1050, %v952
        %v1075 = vmul.f32 %v1051, %v956
        %v1076 = vmul.f32 %v1052, %v960
        %v1077 = vmul.f32 %v1053, %v964
        %v1078 = vmul.f32 %v1054, %v1054
        %v1079 = vmul.f32 %v1055, %v1055
        %v1080 = vmul.f32 %v1056, %v1056
        %v1081 = vmul.f32 %v1057, %v1057
        %v1082 = vmul.f32 %v1058, %v1058
        %v1083 = vmul.f32 %v1059, %v1059
        %v1084 = vmul.f32 %v1060, %v1060
        %v1085 = vmul.f32 %v1061, %v1061
        %v1086 = vmul.f32 %v1062, %v1062
        %v1087 = vmul.f32 %v1063, %v1063
        %v1088 = vmul.f32 %v1064, %v1064
        %v1089 = vmul.f32 %v1065, %v1065
        %v1090 = vmul.f32 %v1066, %v1066
        %v1091 = vmul.f32 %v1067, %v1067
        %v1092 = vmul.f32 %v1068, %v1068
        %v1093 = vmul.f32 %v1069, %v1069
        %v1094 = vmul.f32 %v1070, %v1070
        %v1095 = vmul.f32 %v1071, %v1071
        %v1096 = vmul.f32 %v1072, %v1072
        %v1097 = vmul.f32 %v1073, %v1073
        %v1098 = vmul.f32 %v1074, %v1074
        %v1099 = vmul.f32 %v1075, %v1075
        %v1100 = vmul.f32 %v1076, %v1076
        %v1101 = vmul.f32 %v1077, %v1077
        %v1102 = vadd.f32 %v1078, %v1079
        %v1103 = vadd.f32 %v1102, %v1080
        %v1104 = vadd.f32 %v1103, %v1081
        %v1105 = vadd.f32 %v1104, %v1082
        %v1106 = vadd.f32 %v1105, %v1083
        %v1107 = vadd.f32 %v1106, %v1084
        %v1108 = vadd.f32 %v1107, %v1085
        %v1109 = vadd.f32 %v1108, %v1086
        %v1110 = vadd.f32 %v1109, %v1087
        %v1111 = vadd.f32 %v1110, %v1088
        %v1112 = vadd.f32 %v1111, %v1089
        %1113 = vadd.xlane.f32.xlu0 %v1112
        %v1114 = vpop.xlane.xlu0 %1113
        %v1115 = vadd.f32 %v1090, %v1091
        %v1116 = vadd.f32 %v1115, %v1092
        %v1117 = vadd.f32 %v1116, %v1093
        %v1118 = vadd.f32 %v1117, %v1094
        %v1119 = vadd.f32 %v1118, %v1095
        %v1120 = vadd.f32 %v1119, %v1096
        %v1121 = vadd.f32 %v1120, %v1097
        %v1122 = vadd.f32 %v1121, %v1098
        %v1123 = vadd.f32 %v1122, %v1099
        %v1124 = vadd.f32 %v1123, %v1100
        %v1125 = vadd.f32 %v1124, %v1101
        %1126 = vadd.xlane.f32.xlu0 %v1125
        %v1127 = vpop.xlane.xlu0 %1126
        %v1128 = vmul.f32 %v1114, %v1027
        %v1129 = vmul.f32 %v1127, %v1027
        %v1130 = vadd.f32 %v1128, 1e-05
        %v1131 = vadd.f32 %v1129, 1e-05
        %v1132 = vrsqrt.pop %v1130
        %v1133 = vrsqrt.pop %v1131
        %v1134 = vmul.f32 %v1030, %v1132
        %v1135 = vmul.f32 %v1031, %v1132
        %v1136 = vmul.f32 %v1032, %v1132
        %v1137 = vmul.f32 %v1033, %v1132
        %v1138 = vmul.f32 %v1034, %v1132
        %v1139 = vmul.f32 %v1035, %v1132
        %v1140 = vmul.f32 %v1036, %v1132
        %v1141 = vmul.f32 %v1037, %v1132
        %v1142 = vmul.f32 %v1038, %v1132
        %v1143 = vmul.f32 %v1039, %v1132
        %v1144 = vmul.f32 %v1040, %v1132
        %v1145 = vmul.f32 %v1041, %v1132
        %v1146 = vmul.f32 %v1042, %v1133
        %v1147 = vmul.f32 %v1043, %v1133
        %v1148 = vmul.f32 %v1044, %v1133
        %v1149 = vmul.f32 %v1045, %v1133
        %v1150 = vmul.f32 %v1046, %v1133
        %v1151 = vmul.f32 %v1047, %v1133
        %v1152 = vmul.f32 %v1048, %v1133
        %v1153 = vmul.f32 %v1049, %v1133
        %v1154 = vmul.f32 %v1050, %v1133
        %v1155 = vmul.f32 %v1051, %v1133
        %v1156 = vmul.f32 %v1052, %v1133
        %v1157 = vmul.f32 %v1053, %v1133
        %v1158 = vld [vmem:[%s4] sm:$0xff]
        %v1159 = vld [vmem:[%s4 + $0x8] sm:$0xff]
        %1161 = vset.pattern.permute.xlu0 0
        %1162 = vperm.xlu0 %1161, %v1158
        %v1163 = vpop.permute.xlu0 %1162
        %1166 = vset.pattern.permute.xlu0 0
        %1167 = vperm.xlu0 %1166, %v1159
        %v1168 = vpop.permute.xlu0 %1167
        %v1170 = vmul.f32 %v1134, %v1163
        %v1171 = vmul.f32 %v1135, %v1163
        %v1172 = vmul.f32 %v1136, %v1163
        %v1173 = vmul.f32 %v1137, %v1163
        %v1174 = vmul.f32 %v1138, %v1163
        %v1175 = vmul.f32 %v1139, %v1163
        %v1176 = vmul.f32 %v1140, %v1163
        %v1177 = vmul.f32 %v1141, %v1163
        %v1178 = vmul.f32 %v1142, %v1163
        %v1179 = vmul.f32 %v1143, %v1163
        %v1180 = vmul.f32 %v1144, %v1163
        %v1181 = vmul.f32 %v1145, %v1163
        %v1182 = vmul.f32 %v1146, %v1168
        %v1183 = vmul.f32 %v1147, %v1168
        %v1184 = vmul.f32 %v1148, %v1168
        %v1185 = vmul.f32 %v1149, %v1168
        %v1186 = vmul.f32 %v1150, %v1168
        %v1187 = vmul.f32 %v1151, %v1168
        %v1188 = vmul.f32 %v1152, %v1168
        %v1189 = vmul.f32 %v1153, %v1168
        %v1190 = vmul.f32 %v1154, %v1168
        %v1191 = vmul.f32 %v1155, %v1168
        %v1192 = vmul.f32 %v1156, %v1168
        %v1193 = vmul.f32 %v1157, %v1168
        %v1194 = vld [vmem:[%s5] sm:$0xff]
        %v1195 = vld [vmem:[%s5 + $0x8] sm:$0xff]
        %1197 = vset.pattern.permute.xlu0 0
        %1198 = vperm.xlu0 %1197, %v1194
        %v1199 = vpop.permute.xlu0 %1198
        %1202 = vset.pattern.permute.xlu0 0
        %1203 = vperm.xlu0 %1202, %v1195
        %v1204 = vpop.permute.xlu0 %1203
        %v1206 = vadd.f32 %v1170, %v1199
        %v1207 = vadd.f32 %v1171, %v1199
        %v1208 = vadd.f32 %v1172, %v1199
        %v1209 = vadd.f32 %v1173, %v1199
        %v1210 = vadd.f32 %v1174, %v1199
        %v1211 = vadd.f32 %v1175, %v1199
        %v1212 = vadd.f32 %v1176, %v1199
        %v1213 = vadd.f32 %v1177, %v1199
        %v1214 = vadd.f32 %v1178, %v1199
        %v1215 = vadd.f32 %v1179, %v1199
        %v1216 = vadd.f32 %v1180, %v1199
        %v1217 = vadd.f32 %v1181, %v1199
        %v1218 = vadd.f32 %v1182, %v1204
        %v1219 = vadd.f32 %v1183, %v1204
        %v1220 = vadd.f32 %v1184, %v1204
        %v1221 = vadd.f32 %v1185, %v1204
        %v1222 = vadd.f32 %v1186, %v1204
        %v1223 = vadd.f32 %v1187, %v1204
        %v1224 = vadd.f32 %v1188, %v1204
        %v1225 = vadd.f32 %v1189, %v1204
        %v1226 = vadd.f32 %v1190, %v1204
        %v1227 = vadd.f32 %v1191, %v1204
        %v1228 = vadd.f32 %v1192, %v1204
        %v1229 = vadd.f32 %v1193, %v1204
        %vm1230 = vcmp.gt.f32.partialorder %v1206, 0.0
        %vm1231 = vcmp.gt.f32.partialorder %v1207, 0.0
        %vm1232 = vcmp.gt.f32.partialorder %v1208, 0.0
        %vm1233 = vcmp.gt.f32.partialorder %v1209, 0.0
        %vm1234 = vcmp.gt.f32.partialorder %v1210, 0.0
        %vm1235 = vcmp.gt.f32.partialorder %v1211, 0.0
        %vm1236 = vcmp.gt.f32.partialorder %v1212, 0.0
        %vm1237 = vcmp.gt.f32.partialorder %v1213, 0.0
        %vm1238 = vcmp.gt.f32.partialorder %v1214, 0.0
        %vm1239 = vcmp.gt.f32.partialorder %v1215, 0.0
        %vm1240 = vcmp.gt.f32.partialorder %v1216, 0.0
        %vm1241 = vcmp.gt.f32.partialorder %v1217, 0.0
        %vm1242 = vcmp.gt.f32.partialorder %v1218, 0.0
        %vm1243 = vcmp.gt.f32.partialorder %v1219, 0.0
        %vm1244 = vcmp.gt.f32.partialorder %v1220, 0.0
        %vm1245 = vcmp.gt.f32.partialorder %v1221, 0.0
        %vm1246 = vcmp.gt.f32.partialorder %v1222, 0.0
        %vm1247 = vcmp.gt.f32.partialorder %v1223, 0.0
        %vm1248 = vcmp.gt.f32.partialorder %v1224, 0.0
        %vm1249 = vcmp.gt.f32.partialorder %v1225, 0.0
        %vm1250 = vcmp.gt.f32.partialorder %v1226, 0.0
        %vm1251 = vcmp.gt.f32.partialorder %v1227, 0.0
        %vm1252 = vcmp.gt.f32.partialorder %v1228, 0.0
        %vm1253 = vcmp.gt.f32.partialorder %v1229, 0.0
        %v1254 = vmul.f32 %v1206, 0.2
        %v1255 = vmul.f32 %v1207, 0.2
        %v1256 = vmul.f32 %v1208, 0.2
        %v1257 = vmul.f32 %v1209, 0.2
        %v1258 = vmul.f32 %v1210, 0.2
        %v1259 = vmul.f32 %v1211, 0.2
        %v1260 = vmul.f32 %v1212, 0.2
        %v1261 = vmul.f32 %v1213, 0.2
        %v1262 = vmul.f32 %v1214, 0.2
        %v1263 = vmul.f32 %v1215, 0.2
        %v1264 = vmul.f32 %v1216, 0.2
        %v1265 = vmul.f32 %v1217, 0.2
        %v1266 = vmul.f32 %v1218, 0.2
        %v1267 = vmul.f32 %v1219, 0.2
        %v1268 = vmul.f32 %v1220, 0.2
        %v1269 = vmul.f32 %v1221, 0.2
        %v1270 = vmul.f32 %v1222, 0.2
        %v1271 = vmul.f32 %v1223, 0.2
        %v1272 = vmul.f32 %v1224, 0.2
        %v1273 = vmul.f32 %v1225, 0.2
        %v1274 = vmul.f32 %v1226, 0.2
        %v1275 = vmul.f32 %v1227, 0.2
        %v1276 = vmul.f32 %v1228, 0.2
        %v1277 = vmul.f32 %v1229, 0.2
        %v1278 = vsel %vm1230, %v1206, %v1254
        %v1279 = vsel %vm1231, %v1207, %v1255
        %v1280 = vsel %vm1232, %v1208, %v1256
        %v1281 = vsel %vm1233, %v1209, %v1257
        %v1282 = vsel %vm1234, %v1210, %v1258
        %v1283 = vsel %vm1235, %v1211, %v1259
        %v1284 = vsel %vm1236, %v1212, %v1260
        %v1285 = vsel %vm1237, %v1213, %v1261
        %v1286 = vsel %vm1238, %v1214, %v1262
        %v1287 = vsel %vm1239, %v1215, %v1263
        %v1288 = vsel %vm1240, %v1216, %v1264
        %v1289 = vsel %vm1241, %v1217, %v1265
        %v1290 = vsel %vm1242, %v1218, %v1266
        %v1291 = vsel %vm1243, %v1219, %v1267
        %v1292 = vsel %vm1244, %v1220, %v1268
        %v1293 = vsel %vm1245, %v1221, %v1269
        %v1294 = vsel %vm1246, %v1222, %v1270
        %v1295 = vsel %vm1247, %v1223, %v1271
        %v1296 = vsel %vm1248, %v1224, %v1272
        %v1297 = vsel %vm1249, %v1225, %v1273
        %v1298 = vsel %vm1250, %v1226, %v1274
        %v1299 = vsel %vm1251, %v1227, %v1275
        %v1300 = vsel %vm1252, %v1228, %v1276
        %v1301 = vsel %vm1253, %v1229, %v1277
        %v1302 = vmax.f32 %v1278, %v1284
        %v1303 = vmax.f32 %v1279, %v1285
        %v1304 = vmax.f32 %v1280, %v1286
        %v1305 = vmax.f32 %v1281, %v1287
        %v1306 = vmax.f32 %v1282, %v1288
        %v1307 = vmax.f32 %v1283, %v1289
        %v1308 = vmax.f32 %v1290, %v1296
        %v1309 = vmax.f32 %v1291, %v1297
        %v1310 = vmax.f32 %v1292, %v1298
        %v1311 = vmax.f32 %v1293, %v1299
        %v1312 = vmax.f32 %v1294, %v1300
        %v1313 = vmax.f32 %v1295, %v1301
        %1314 = vst [vmem:[#allocation4] sm:$0xff] %v1302
        %1315 = vst [vmem:[#allocation4 + $0x8] sm:$0xff] %v1303
        %1316 = vst [vmem:[#allocation4 + $0x10] sm:$0xff] %v1304
        %1317 = vst [vmem:[#allocation4 + $0x18] sm:$0xff] %v1305
        %1318 = vst [vmem:[#allocation4 + $0x20] sm:$0xff] %v1306
        %1319 = vst [vmem:[#allocation4 + $0x28] sm:$0xff] %v1307
        %1320 = vst [vmem:[#allocation4 + $0x30] sm:$0xff] %v1308
        %1321 = vst [vmem:[#allocation4 + $0x38] sm:$0xff] %v1309
        %1322 = vst [vmem:[#allocation4 + $0x40] sm:$0xff] %v1310
        %1323 = vst [vmem:[#allocation4 + $0x48] sm:$0xff] %v1311
        %1324 = vst [vmem:[#allocation4 + $0x50] sm:$0xff] %v1312
        %1325 = vst [vmem:[#allocation4 + $0x58] sm:$0xff] %v1313
        %1326 = vst [vmem:[#allocation2] sm:$0xff] 0.0
        %1327 = vst [vmem:[#allocation2 + $0x8] sm:$0xff] 0.0
        %1328 = vst [vmem:[#allocation2 + $0x10] sm:$0xff] 0.0
        %1329 = vst [vmem:[#allocation2 + $0x18] sm:$0xff] 0.0
        %1330 = vst [vmem:[#allocation2 + $0x20] sm:$0xff] 0.0
        %1331 = vst [vmem:[#allocation2 + $0x28] sm:$0xff] 0.0
        %1332 = vst [vmem:[#allocation2 + $0x30] sm:$0xff] 0.0
        %1333 = vst [vmem:[#allocation2 + $0x38] sm:$0xff] 0.0
        %1334 = vst [vmem:[#allocation2 + $0x40] sm:$0xff] 0.0
        %1335 = vst [vmem:[#allocation2 + $0x48] sm:$0xff] 0.0
        %1336 = vst [vmem:[#allocation2 + $0x50] sm:$0xff] 0.0
        %1337 = vst [vmem:[#allocation2 + $0x58] sm:$0xff] 0.0
        %1338 = vst [vmem:[#allocation2 + $0x60] sm:$0xff] 0.0
        %1339 = vst [vmem:[#allocation2 + $0x68] sm:$0xff] 0.0
        %1340 = vst [vmem:[#allocation2 + $0x70] sm:$0xff] 0.0
        %1341 = vst [vmem:[#allocation2 + $0x78] sm:$0xff] 0.0
        %1342 = vst [vmem:[#allocation2 + $0x80] sm:$0xff] 0.0
        %1343 = vst [vmem:[#allocation2 + $0x88] sm:$0xff] 0.0
        %1344 = vst [vmem:[#allocation2 + $0x90] sm:$0xff] 0.0
        %1345 = vst [vmem:[#allocation2 + $0x98] sm:$0xff] 0.0
        %1346 = vst [vmem:[#allocation2 + $0xa0] sm:$0xff] 0.0
        %1347 = vst [vmem:[#allocation2 + $0xa8] sm:$0xff] 0.0
        %1348 = vst [vmem:[#allocation2 + $0xb0] sm:$0xff] 0.0
        %1349 = vst [vmem:[#allocation2 + $0xb8] sm:$0xff] 0.0
        %1350 = vst [vmem:[#allocation2 + $0xc0] sm:$0xff] 0.0
        %1351 = vst [vmem:[#allocation2 + $0xc8] sm:$0xff] 0.0
        %1352 = vst [vmem:[#allocation2 + $0xd0] sm:$0xff] 0.0
        %1353 = vst [vmem:[#allocation2 + $0xd8] sm:$0xff] 0.0
        %1354 = vst [vmem:[#allocation2 + $0xe0] sm:$0xff] 0.0
        %1355 = vst [vmem:[#allocation2 + $0xe8] sm:$0xff] 0.0
        %1356 = vst [vmem:[#allocation2 + $0xf0] sm:$0xff] 0.0
        %1357 = vst [vmem:[#allocation2 + $0xf8] sm:$0xff] 0.0
        %1358 = vst [vmem:[#allocation2 + $0x100] sm:$0xff] 0.0
        %1359 = vst [vmem:[#allocation2 + $0x108] sm:$0xff] 0.0
        %1360 = vst [vmem:[#allocation2 + $0x110] sm:$0xff] 0.0
        %1361 = vst [vmem:[#allocation2 + $0x118] sm:$0xff] 0.0
        %1362 = vst [vmem:[#allocation2 + $0x120] sm:$0xff] 0.0
        %1363 = vst [vmem:[#allocation2 + $0x128] sm:$0xff] 0.0
        %1364 = vst [vmem:[#allocation2 + $0x130] sm:$0xff] 0.0
        %1365 = vst [vmem:[#allocation2 + $0x138] sm:$0xff] 0.0
        %1366 = vst [vmem:[#allocation2 + $0x140] sm:$0xff] 0.0
        %1367 = vst [vmem:[#allocation2 + $0x148] sm:$0xff] 0.0
        %1368 = vst [vmem:[#allocation2 + $0x150] sm:$0xff] 0.0
        %1369 = vst [vmem:[#allocation2 + $0x158] sm:$0xff] 0.0
        %1370 = vst [vmem:[#allocation2 + $0x160] sm:$0xff] 0.0
        %1371 = vst [vmem:[#allocation2 + $0x168] sm:$0xff] 0.0
        %1372 = vst [vmem:[#allocation2 + $0x170] sm:$0xff] 0.0
        %1373 = vst [vmem:[#allocation2 + $0x178] sm:$0xff] 0.0
        %1374 = vst [vmem:[#allocation3] sm:$0xff] 0.0
        %1375 = vst [vmem:[#allocation3 + $0x8] sm:$0xff] 0.0
        %1376 = vst [vmem:[#allocation3 + $0x10] sm:$0xff] 0.0
        %1377 = vst [vmem:[#allocation3 + $0x18] sm:$0xff] 0.0
        %vm1378 = vcmask 719872
        %1379 = vst.msk [vmem:[#allocation3 + $0x20] sm:$0xff] %vm1378, 0.0
        %v1380 = vld [vmem:[#allocation4] ss:$8 sm:$0x7]
        %v1381 = vlaneseq
        %vm1382 = vcmp.ge.s32.totalorder %v1381, 0
        %vm1383 = vcmp.lt.s32.totalorder %v1381, 384
        %vm1384 = vmand %vm1382, %vm1383
        %1385 = vst.msk [vmem:[#allocation2] ss:$8 sm:$0x7] %vm1384, %v1380
        %1386 = vst.msk [vmem:[#allocation2] ss:$8 sm:$0x0] %vm1384, %v1380
        %s1387 = scalar_lea.vmem [#allocation4], 24
        %v1388 = vld [vmem:[%s1387] ss:$8 sm:$0x7]
        %s1389 = scalar_lea.vmem [#allocation2], 1
        %1390 = vst.msk [vmem:[%s1389] ss:$8 sm:$0x7] %vm1384, %v1388
        %1391 = vst.msk [vmem:[%s1389] ss:$8 sm:$0x0] %vm1384, %v1388
        %s1392 = scalar_lea.vmem [#allocation4], 1
        %v1393 = vld [vmem:[%s1392] ss:$8 sm:$0x7]
        %s1394 = scalar_lea.vmem [#allocation2], 24
        %1395 = vst.msk [vmem:[%s1394] ss:$8 sm:$0x7] %vm1384, %v1393
        %1396 = vst.msk [vmem:[%s1394] ss:$8 sm:$0x0] %vm1384, %v1393
        %s1397 = scalar_lea.vmem [#allocation4], 25
        %v1398 = vld [vmem:[%s1397] ss:$8 sm:$0x7]
        %s1399 = scalar_lea.vmem [#allocation2], 25
        %1400 = vst.msk [vmem:[%s1399] ss:$8 sm:$0x7] %vm1384, %v1398
        %1401 = vst.msk [vmem:[%s1399] ss:$8 sm:$0x0] %vm1384, %v1398
        %s1402 = scalar_lea.vmem [#allocation4], 2
        %v1403 = vld [vmem:[%s1402] ss:$8 sm:$0x7]
        %s1404 = scalar_lea.vmem [#allocation2], 48
        %1405 = vst.msk [vmem:[%s1404] ss:$8 sm:$0x7] %vm1384, %v1403
        %1406 = vst.msk [vmem:[%s1404] ss:$8 sm:$0x0] %vm1384, %v1403
        %s1407 = scalar_lea.vmem [#allocation4], 26
        %v1408 = vld [vmem:[%s1407] ss:$8 sm:$0x7]
        %s1409 = scalar_lea.vmem [#allocation2], 49
        %1410 = vst.msk [vmem:[%s1409] ss:$8 sm:$0x7] %vm1384, %v1408
        %1411 = vst.msk [vmem:[%s1409] ss:$8 sm:$0x0] %vm1384, %v1408
        %s1412 = scalar_lea.vmem [#allocation4], 3
        %v1413 = vld [vmem:[%s1412] ss:$8 sm:$0x7]
        %s1414 = scalar_lea.vmem [#allocation2], 72
        %1415 = vst.msk [vmem:[%s1414] ss:$8 sm:$0x7] %vm1384, %v1413
        %1416 = vst.msk [vmem:[%s1414] ss:$8 sm:$0x0] %vm1384, %v1413
        %s1417 = scalar_lea.vmem [#allocation4], 27
        %v1418 = vld [vmem:[%s1417] ss:$8 sm:$0x7]
        %s1419 = scalar_lea.vmem [#allocation2], 73
        %1420 = vst.msk [vmem:[%s1419] ss:$8 sm:$0x7] %vm1384, %v1418
        %1421 = vst.msk [vmem:[%s1419] ss:$8 sm:$0x0] %vm1384, %v1418
        %s1422 = scalar_lea.vmem [#allocation4], 4
        %v1423 = vld [vmem:[%s1422] ss:$8 sm:$0x7]
        %s1424 = scalar_lea.vmem [#allocation2], 96
        %1425 = vst.msk [vmem:[%s1424] ss:$8 sm:$0x7] %vm1384, %v1423
        %1426 = vst.msk [vmem:[%s1424] ss:$8 sm:$0x0] %vm1384, %v1423
        %s1427 = scalar_lea.vmem [#allocation4], 28
        %v1428 = vld [vmem:[%s1427] ss:$8 sm:$0x7]
        %s1429 = scalar_lea.vmem %s1424, 1 [#allocation2]
        %1430 = vst.msk [vmem:[%s1429] ss:$8 sm:$0x7] %vm1384, %v1428
        %1431 = vst.msk [vmem:[%s1429] ss:$8 sm:$0x0] %vm1384, %v1428
        %s1432 = scalar_lea.vmem [#allocation4], 5
        %v1433 = vld [vmem:[%s1432] ss:$8 sm:$0x7]
        %s1434 = scalar_lea.vmem %s1424, 24 [#allocation2]
        %1435 = vst.msk [vmem:[%s1434] ss:$8 sm:$0x7] %vm1384, %v1433
        %1436 = vst.msk [vmem:[%s1434] ss:$8 sm:$0x0] %vm1384, %v1433
        %s1437 = scalar_lea.vmem [#allocation4], 29
        %v1438 = vld [vmem:[%s1437] ss:$8 sm:$0x7]
        %s1439 = scalar_lea.vmem %s1424, 25 [#allocation2]
        %1440 = vst.msk [vmem:[%s1439] ss:$8 sm:$0x7] %vm1384, %v1438
        %1441 = vst.msk [vmem:[%s1439] ss:$8 sm:$0x0] %vm1384, %v1438
        %s1442 = scalar_lea.vmem [#allocation4], 6
        %v1443 = vld [vmem:[%s1442] ss:$8 sm:$0x7]
        %s1444 = scalar_lea.vmem %s1424, 48 [#allocation2]
        %1445 = vst.msk [vmem:[%s1444] ss:$8 sm:$0x7] %vm1384, %v1443
        %1446 = vst.msk [vmem:[%s1444] ss:$8 sm:$0x0] %vm1384, %v1443
        %s1447 = scalar_lea.vmem [#allocation4], 30
        %v1448 = vld [vmem:[%s1447] ss:$8 sm:$0x7]
        %s1449 = scalar_lea.vmem %s1424, 49 [#allocation2]
        %1450 = vst.msk [vmem:[%s1449] ss:$8 sm:$0x7] %vm1384, %v1448
        %1451 = vst.msk [vmem:[%s1449] ss:$8 sm:$0x0] %vm1384, %v1448
        %s1452 = scalar_lea.vmem [#allocation4], 7
        %v1453 = vld [vmem:[%s1452] ss:$8 sm:$0x7]
        %s1454 = scalar_lea.vmem %s1424, 72 [#allocation2]
        %1455 = vst.msk [vmem:[%s1454] ss:$8 sm:$0x7] %vm1384, %v1453
        %1456 = vst.msk [vmem:[%s1454] ss:$8 sm:$0x0] %vm1384, %v1453
        %s1457 = scalar_lea.vmem [#allocation4], 31
        %v1458 = vld [vmem:[%s1457] ss:$8 sm:$0x7]
        %s1459 = scalar_lea.vmem %s1424, 73 [#allocation2]
        %1460 = vst.msk [vmem:[%s1459] ss:$8 sm:$0x7] %vm1384, %v1458
        %1461 = vst.msk [vmem:[%s1459] ss:$8 sm:$0x0] %vm1384, %v1458
        %s1462 = scalar_lea.vmem [#allocation4], 48
        %v1463 = vld [vmem:[%s1462] ss:$8 sm:$0x7]
        %s1464 = scalar_lea.vmem [#allocation2], 192
        %1465 = vst.msk [vmem:[%s1464] ss:$8 sm:$0x7] %vm1384, %v1463
        %1466 = vst.msk [vmem:[%s1464] ss:$8 sm:$0x0] %vm1384, %v1463
        %s1467 = scalar_lea.vmem [#allocation4], 72
        %v1468 = vld [vmem:[%s1467] ss:$8 sm:$0x7]
        %s1469 = scalar_lea.vmem %s1464, 1 [#allocation2]
        %1470 = vst.msk [vmem:[%s1469] ss:$8 sm:$0x7] %vm1384, %v1468
        %1471 = vst.msk [vmem:[%s1469] ss:$8 sm:$0x0] %vm1384, %v1468
        %s1472 = scalar_lea.vmem [#allocation4], 49
        %v1473 = vld [vmem:[%s1472] ss:$8 sm:$0x7]
        %s1474 = scalar_lea.vmem %s1464, 24 [#allocation2]
        %1475 = vst.msk [vmem:[%s1474] ss:$8 sm:$0x7] %vm1384, %v1473
        %1476 = vst.msk [vmem:[%s1474] ss:$8 sm:$0x0] %vm1384, %v1473
        %s1477 = scalar_lea.vmem [#allocation4], 73
        %v1478 = vld [vmem:[%s1477] ss:$8 sm:$0x7]
        %s1479 = scalar_lea.vmem %s1464, 25 [#allocation2]
        %1480 = vst.msk [vmem:[%s1479] ss:$8 sm:$0x7] %vm1384, %v1478
        %1481 = vst.msk [vmem:[%s1479] ss:$8 sm:$0x0] %vm1384, %v1478
        %s1482 = scalar_lea.vmem [#allocation4], 50
        %v1483 = vld [vmem:[%s1482] ss:$8 sm:$0x7]
        %s1484 = scalar_lea.vmem %s1464, 48 [#allocation2]
        %1485 = vst.msk [vmem:[%s1484] ss:$8 sm:$0x7] %vm1384, %v1483
        %1486 = vst.msk [vmem:[%s1484] ss:$8 sm:$0x0] %vm1384, %v1483
        %s1487 = scalar_lea.vmem [#allocation4], 74
        %v1488 = vld [vmem:[%s1487] ss:$8 sm:$0x7]
        %s1489 = scalar_lea.vmem %s1464, 49 [#allocation2]
        %1490 = vst.msk [vmem:[%s1489] ss:$8 sm:$0x7] %vm1384, %v1488
        %1491 = vst.msk [vmem:[%s1489] ss:$8 sm:$0x0] %vm1384, %v1488
        %s1492 = scalar_lea.vmem [#allocation4], 51
        %v1493 = vld [vmem:[%s1492] ss:$8 sm:$0x7]
        %s1494 = scalar_lea.vmem %s1464, 72 [#allocation2]
        %1495 = vst.msk [vmem:[%s1494] ss:$8 sm:$0x7] %vm1384, %v1493
        %1496 = vst.msk [vmem:[%s1494] ss:$8 sm:$0x0] %vm1384, %v1493
        %s1497 = scalar_lea.vmem [#allocation4], 75
        %v1498 = vld [vmem:[%s1497] ss:$8 sm:$0x7]
        %s1499 = scalar_lea.vmem %s1464, 73 [#allocation2]
        %1500 = vst.msk [vmem:[%s1499] ss:$8 sm:$0x7] %vm1384, %v1498
        %1501 = vst.msk [vmem:[%s1499] ss:$8 sm:$0x0] %vm1384, %v1498
        %s1502 = scalar_lea.vmem [#allocation4], 52
        %v1503 = vld [vmem:[%s1502] ss:$8 sm:$0x7]
        %s1504 = scalar_lea.vmem [#allocation2], 288
        %1505 = vst.msk [vmem:[%s1504] ss:$8 sm:$0x7] %vm1384, %v1503
        %1506 = vst.msk [vmem:[%s1504] ss:$8 sm:$0x0] %vm1384, %v1503
        %s1507 = scalar_lea.vmem [#allocation4], 76
        %v1508 = vld [vmem:[%s1507] ss:$8 sm:$0x7]
        %s1509 = scalar_lea.vmem %s1504, 1 [#allocation2]
        %1510 = vst.msk [vmem:[%s1509] ss:$8 sm:$0x7] %vm1384, %v1508
        %1511 = vst.msk [vmem:[%s1509] ss:$8 sm:$0x0] %vm1384, %v1508
        %s1512 = scalar_lea.vmem [#allocation4], 53
        %v1513 = vld [vmem:[%s1512] ss:$8 sm:$0x7]
        %s1514 = scalar_lea.vmem %s1504, 24 [#allocation2]
        %1515 = vst.msk [vmem:[%s1514] ss:$8 sm:$0x7] %vm1384, %v1513
        %1516 = vst.msk [vmem:[%s1514] ss:$8 sm:$0x0] %vm1384, %v1513
        %s1517 = scalar_lea.vmem [#allocation4], 77
        %v1518 = vld [vmem:[%s1517] ss:$8 sm:$0x7]
        %s1519 = scalar_lea.vmem %s1504, 25 [#allocation2]
        %1520 = vst.msk [vmem:[%s1519] ss:$8 sm:$0x7] %vm1384, %v1518
        %1521 = vst.msk [vmem:[%s1519] ss:$8 sm:$0x0] %vm1384, %v1518
        %s1522 = scalar_lea.vmem [#allocation4], 54
        %v1523 = vld [vmem:[%s1522] ss:$8 sm:$0x7]
        %s1524 = scalar_lea.vmem %s1504, 48 [#allocation2]
        %1525 = vst.msk [vmem:[%s1524] ss:$8 sm:$0x7] %vm1384, %v1523
        %1526 = vst.msk [vmem:[%s1524] ss:$8 sm:$0x0] %vm1384, %v1523
        %s1527 = scalar_lea.vmem [#allocation4], 78
        %v1528 = vld [vmem:[%s1527] ss:$8 sm:$0x7]
        %s1529 = scalar_lea.vmem %s1504, 49 [#allocation2]
        %1530 = vst.msk [vmem:[%s1529] ss:$8 sm:$0x7] %vm1384, %v1528
        %1531 = vst.msk [vmem:[%s1529] ss:$8 sm:$0x0] %vm1384, %v1528
        %s1532 = scalar_lea.vmem [#allocation4], 55
        %v1533 = vld [vmem:[%s1532] ss:$8 sm:$0x7]
        %s1534 = scalar_lea.vmem %s1504, 72 [#allocation2]
        %1535 = vst.msk [vmem:[%s1534] ss:$8 sm:$0x7] %vm1384, %v1533
        %1536 = vst.msk [vmem:[%s1534] ss:$8 sm:$0x0] %vm1384, %v1533
        %s1537 = scalar_lea.vmem [#allocation4], 79
        %v1538 = vld [vmem:[%s1537] ss:$8 sm:$0x7]
        %s1539 = scalar_lea.vmem %s1504, 73 [#allocation2]
        %1540 = vst.msk [vmem:[%s1539] ss:$8 sm:$0x7] %vm1384, %v1538
        %1541 = vst.msk [vmem:[%s1539] ss:$8 sm:$0x0] %vm1384, %v1538
      $region64: #{discriminator_forward.1} parent=59 // pred_fallthru
        _
      %s1542 = smul.u32 %s23, 12
      %s1543 = smul.addr %s1542, 8
      %s1544 = scalar_lea.vmem [#allocation2], %s1543
      %v1545 = vld [vmem:[%s1544] sm:$0xff]
      %v1546 = vld [vmem:[%s1544 + $0x8] sm:$0xff]
      %v1547 = vld [vmem:[%s1544 + $0x10] sm:$0xff]
      %v1548 = vld [vmem:[%s1544 + $0x18] sm:$0xff]
      %v1549 = vld [vmem:[%s1544 + $0x20] sm:$0xff]
      %v1550 = vld [vmem:[%s1544 + $0x28] sm:$0xff]
      %v1551 = vld [vmem:[%s1544 + $0x30] sm:$0xff]
      %v1552 = vld [vmem:[%s1544 + $0x38] sm:$0xff]
      %v1553 = vld [vmem:[%s1544 + $0x40] sm:$0xff]
      %v1554 = vld [vmem:[%s1544 + $0x48] sm:$0xff]
      %v1555 = vld [vmem:[%s1544 + $0x50] sm:$0xff]
      %v1556 = vld [vmem:[%s1544 + $0x58] sm:$0xff]
      %v1557 = vpack.c.bf16 %v1545, %v1545
      %v1558 = vpack.c.bf16 %v1546, %v1546
      %v1559 = vpack.c.bf16 %v1547, %v1547
      %v1560 = vpack.c.bf16 %v1548, %v1548
      %v1561 = vpack.c.bf16 %v1549, %v1549
      %v1562 = vpack.c.bf16 %v1550, %v1550
      %v1563 = vpack.c.bf16 %v1551, %v1551
      %v1564 = vpack.c.bf16 %v1552, %v1552
      %v1565 = vpack.c.bf16 %v1553, %v1553
      %v1566 = vpack.c.bf16 %v1554, %v1554
      %v1567 = vpack.c.bf16 %v1555, %v1555
      %v1568 = vpack.c.bf16 %v1556, %v1556
      %v1569 = vld [vmem:[#allocation3] sm:$0xff]
      %v1570 = vld [vmem:[#allocation3 + $0x8] sm:$0xff]
      %v1571 = vld [vmem:[#allocation3 + $0x10] sm:$0xff]
      %v1572 = vld [vmem:[#allocation3 + $0x18] sm:$0xff]
      %v1573 = vld [vmem:[#allocation3 + $0x20] sm:$0xff]
      %v1574 = vld [vmem:[%s350] sm:$0xff]
      %v1575 = vld [vmem:[%s350 + $0x8] sm:$0xff]
      %v1576 = vld [vmem:[%s350 + $0x10] sm:$0xf]
      %v1577 = vld [vmem:[%s350 + $0x14] sm:$0xff]
      %v1578 = vld [vmem:[%s350 + $0x1c] sm:$0xff]
      %v1579 = vld [vmem:[%s350 + $0x24] sm:$0xf]
      %v1580 = vld [vmem:[%s350 + $0x28] sm:$0xff]
      %v1581 = vld [vmem:[%s350 + $0x30] sm:$0xff]
      %v1582 = vld [vmem:[%s350 + $0x38] sm:$0xf]
      %v1583 = vld [vmem:[%s350 + $0x3c] sm:$0xff]
      %v1584 = vld [vmem:[%s350 + $0x44] sm:$0xff]
      %v1585 = vld [vmem:[%s350 + $0x4c] sm:$0xf]
      %v1586 = vld [vmem:[%s350 + $0x50] sm:$0xff]
      %v1587 = vld [vmem:[%s350 + $0x58] sm:$0xff]
      %v1588 = vld [vmem:[%s350 + $0x60] sm:$0xf]
      %v1589 = vld [vmem:[%s350 + $0x64] sm:$0xff]
      %v1590 = vld [vmem:[%s350 + $0x6c] sm:$0xff]
      %v1591 = vld [vmem:[%s350 + $0x74] sm:$0xf]
      %v1592 = vld [vmem:[%s350 + $0x78] sm:$0xff]
      %v1593 = vld [vmem:[%s350 + $0x80] sm:$0xff]
      %v1594 = vld [vmem:[%s350 + $0x88] sm:$0xf]
      %v1595 = vld [vmem:[%s350 + $0x8c] sm:$0xff]
      %v1596 = vld [vmem:[%s350 + $0x94] sm:$0xff]
      %v1597 = vld [vmem:[%s350 + $0x9c] sm:$0xf]
      %v1598 = vld [vmem:[%s350 + $0xa0] sm:$0xff]
      %v1599 = vld [vmem:[%s350 + $0xa8] sm:$0xff]
      %v1600 = vld [vmem:[%s350 + $0xb0] sm:$0xf]
      %v1601 = vld [vmem:[%s350 + $0xb4] sm:$0xff]
      %v1602 = vld [vmem:[%s350 + $0xbc] sm:$0xff]
      %v1603 = vld [vmem:[%s350 + $0xc4] sm:$0xf]
      %v1604 = vld [vmem:[%s350 + $0xc8] sm:$0xff]
      %v1605 = vld [vmem:[%s350 + $0xd0] sm:$0xff]
      %v1606 = vld [vmem:[%s350 + $0xd8] sm:$0xf]
      %v1607 = vld [vmem:[%s350 + $0xdc] sm:$0xff]
      %v1608 = vld [vmem:[%s350 + $0xe4] sm:$0xff]
      %v1609 = vld [vmem:[%s350 + $0xec] sm:$0xf]
      %v1610 = vld [vmem:[%s350 + $0xf0] sm:$0xff]
      %v1611 = vld [vmem:[%s350 + $0xf8] sm:$0xff]
      %v1612 = vld [vmem:[%s350 + $0x100] sm:$0xf]
      %v1613 = vld [vmem:[%s350 + $0x104] sm:$0xff]
      %v1614 = vld [vmem:[%s350 + $0x10c] sm:$0xff]
      %v1615 = vld [vmem:[%s350 + $0x114] sm:$0xf]
      %v1616 = vld [vmem:[%s350 + $0x118] sm:$0xff]
      %v1617 = vld [vmem:[%s350 + $0x120] sm:$0xff]
      %v1618 = vld [vmem:[%s350 + $0x128] sm:$0xf]
      %v1619 = vld [vmem:[%s350 + $0x12c] sm:$0xff]
      %v1620 = vld [vmem:[%s350 + $0x134] sm:$0xff]
      %v1621 = vld [vmem:[%s350 + $0x13c] sm:$0xf]
      %v1622 = vld [vmem:[%s350 + $0x140] sm:$0xff]
      %v1623 = vld [vmem:[%s350 + $0x148] sm:$0xff]
      %v1624 = vld [vmem:[%s350 + $0x150] sm:$0xf]
      %v1625 = vld [vmem:[%s350 + $0x154] sm:$0xff]
      %v1626 = vld [vmem:[%s350 + $0x15c] sm:$0xff]
      %v1627 = vld [vmem:[%s350 + $0x164] sm:$0xf]
      %v1628 = vld [vmem:[%s350 + $0x168] sm:$0xff]
      %v1629 = vld [vmem:[%s350 + $0x170] sm:$0xff]
      %v1630 = vld [vmem:[%s350 + $0x178] sm:$0xf]
      %v1631 = vld [vmem:[%s350 + $0x17c] sm:$0xff]
      %v1632 = vld [vmem:[%s350 + $0x184] sm:$0xff]
      %v1633 = vld [vmem:[%s350 + $0x18c] sm:$0xf]
      %v1634 = vld [vmem:[%s350 + $0x190] sm:$0xff]
      %v1635 = vld [vmem:[%s350 + $0x198] sm:$0xff]
      %v1636 = vld [vmem:[%s350 + $0x1a0] sm:$0xf]
      %v1637 = vld [vmem:[%s350 + $0x1a4] sm:$0xff]
      %v1638 = vld [vmem:[%s350 + $0x1ac] sm:$0xff]
      %v1639 = vld [vmem:[%s350 + $0x1b4] sm:$0xf]
      %v1640 = vld [vmem:[%s350 + $0x1b8] sm:$0xff]
      %v1641 = vld [vmem:[%s350 + $0x1c0] sm:$0xff]
      %v1642 = vld [vmem:[%s350 + $0x1c8] sm:$0xf]
      %v1643 = vld [vmem:[%s350 + $0x1cc] sm:$0xff]
      %v1644 = vld [vmem:[%s350 + $0x1d4] sm:$0xff]
      %v1645 = vld [vmem:[%s350 + $0x1dc] sm:$0xf]
      %v1646 = vld [vmem:[%s350 + $0x1e0] sm:$0xff]
      %v1647 = vld [vmem:[%s350 + $0x1e8] sm:$0xff]
      %v1648 = vld [vmem:[%s350 + $0x1f0] sm:$0xf]
      %v1649 = vld [vmem:[%s350 + $0x1f4] sm:$0xff]
      %v1650 = vld [vmem:[%s350 + $0x1fc] sm:$0xff]
      %v1651 = vld [vmem:[%s350 + $0x204] sm:$0xf]
      %v1652 = vld [vmem:[%s350 + $0x208] sm:$0xff]
      %v1653 = vld [vmem:[%s350 + $0x210] sm:$0xff]
      %v1654 = vld [vmem:[%s350 + $0x218] sm:$0xf]
      %v1655 = vld [vmem:[%s350 + $0x21c] sm:$0xff]
      %v1656 = vld [vmem:[%s350 + $0x224] sm:$0xff]
      %v1657 = vld [vmem:[%s350 + $0x22c] sm:$0xf]
      %v1658 = vld [vmem:[%s350 + $0x230] sm:$0xff]
      %v1659 = vld [vmem:[%s350 + $0x238] sm:$0xff]
      %v1660 = vld [vmem:[%s350 + $0x240] sm:$0xf]
      %v1661 = vld [vmem:[%s350 + $0x244] sm:$0xff]
      %v1662 = vld [vmem:[%s350 + $0x24c] sm:$0xff]
      %v1663 = vld [vmem:[%s350 + $0x254] sm:$0xf]
      %v1664 = vld [vmem:[%s350 + $0x258] sm:$0xff]
      %v1665 = vld [vmem:[%s350 + $0x260] sm:$0xff]
      %v1666 = vld [vmem:[%s350 + $0x268] sm:$0xf]
      %v1667 = vld [vmem:[%s350 + $0x26c] sm:$0xff]
      %v1668 = vld [vmem:[%s350 + $0x274] sm:$0xff]
      %v1669 = vld [vmem:[%s350 + $0x27c] sm:$0xf]
      %v1670 = vld [vmem:[%s350 + $0x280] sm:$0xff]
      %v1671 = vld [vmem:[%s350 + $0x288] sm:$0xff]
      %v1672 = vld [vmem:[%s350 + $0x290] sm:$0xf]
      %v1673 = vld [vmem:[%s350 + $0x294] sm:$0xff]
      %v1674 = vld [vmem:[%s350 + $0x29c] sm:$0xff]
      %v1675 = vld [vmem:[%s350 + $0x2a4] sm:$0xf]
      %v1676 = vld [vmem:[%s350 + $0x2a8] sm:$0xff]
      %v1677 = vld [vmem:[%s350 + $0x2b0] sm:$0xff]
      %v1678 = vld [vmem:[%s350 + $0x2b8] sm:$0xf]
      %v1679 = vld [vmem:[%s350 + $0x2bc] sm:$0xff]
      %v1680 = vld [vmem:[%s350 + $0x2c4] sm:$0xff]
      %v1681 = vld [vmem:[%s350 + $0x2cc] sm:$0xf]
      %v1682 = vld [vmem:[%s350 + $0x2d0] sm:$0xff]
      %v1683 = vld [vmem:[%s350 + $0x2d8] sm:$0xff]
      %v1684 = vld [vmem:[%s350 + $0x2e0] sm:$0xf]
      %v1685 = vld [vmem:[%s350 + $0x2e4] sm:$0xff]
      %v1686 = vld [vmem:[%s350 + $0x2ec] sm:$0xff]
      %v1687 = vld [vmem:[%s350 + $0x2f4] sm:$0xf]
      %v1688 = vld [vmem:[%s350 + $0x2f8] sm:$0xff]
      %v1689 = vld [vmem:[%s350 + $0x300] sm:$0xff]
      %v1690 = vld [vmem:[%s350 + $0x308] sm:$0xf]
      %v1691 = vld [vmem:[%s350 + $0x30c] sm:$0xff]
      %v1692 = vld [vmem:[%s350 + $0x314] sm:$0xff]
      %v1693 = vld [vmem:[%s350 + $0x31c] sm:$0xf]
      %v1694 = vld [vmem:[%s350 + $0x320] sm:$0xff]
      %v1695 = vld [vmem:[%s350 + $0x328] sm:$0xff]
      %v1696 = vld [vmem:[%s350 + $0x330] sm:$0xf]
      %v1697 = vld [vmem:[%s350 + $0x334] sm:$0xff]
      %v1698 = vld [vmem:[%s350 + $0x33c] sm:$0xff]
      %v1699 = vld [vmem:[%s350 + $0x344] sm:$0xf]
      %v1700 = vld [vmem:[%s350 + $0x348] sm:$0xff]
      %v1701 = vld [vmem:[%s350 + $0x350] sm:$0xff]
      %v1702 = vld [vmem:[%s350 + $0x358] sm:$0xf]
      %v1703 = vld [vmem:[%s350 + $0x35c] sm:$0xff]
      %v1704 = vld [vmem:[%s350 + $0x364] sm:$0xff]
      %v1705 = vld [vmem:[%s350 + $0x36c] sm:$0xf]
      %v1706 = vld [vmem:[%s350 + $0x370] sm:$0xff]
      %v1707 = vld [vmem:[%s350 + $0x378] sm:$0xff]
      %v1708 = vld [vmem:[%s350 + $0x380] sm:$0xf]
      %v1709 = vld [vmem:[%s350 + $0x384] sm:$0xff]
      %v1710 = vld [vmem:[%s350 + $0x38c] sm:$0xff]
      %v1711 = vld [vmem:[%s350 + $0x394] sm:$0xf]
      %v1712 = vld [vmem:[%s350 + $0x398] sm:$0xff]
      %v1713 = vld [vmem:[%s350 + $0x3a0] sm:$0xff]
      %v1714 = vld [vmem:[%s350 + $0x3a8] sm:$0xf]
      %v1715 = vld [vmem:[%s350 + $0x3ac] sm:$0xff]
      %v1716 = vld [vmem:[%s350 + $0x3b4] sm:$0xff]
      %v1717 = vld [vmem:[%s350 + $0x3bc] sm:$0xf]
      %v1718 = vld [vmem:[%s350 + $0x3c0] sm:$0xff]
      %v1719 = vld [vmem:[%s350 + $0x3c8] sm:$0xff]
      %v1720 = vld [vmem:[%s350 + $0x3d0] sm:$0xf]
      %v1721 = vld [vmem:[%s350 + $0x3d4] sm:$0xff]
      %v1722 = vld [vmem:[%s350 + $0x3dc] sm:$0xff]
      %v1723 = vld [vmem:[%s350 + $0x3e4] sm:$0xf]
      %v1724 = vld [vmem:[%s350 + $0x3e8] sm:$0xff]
      %v1725 = vld [vmem:[%s350 + $0x3f0] sm:$0xff]
      %v1726 = vld [vmem:[%s350 + $0x3f8] sm:$0xf]
      %v1727 = vld [vmem:[%s350 + $0x3fc] sm:$0xff]
      %v1728 = vld [vmem:[%s350 + $0x404] sm:$0xff]
      %v1729 = vld [vmem:[%s350 + $0x40c] sm:$0xf]
      %v1730 = vld [vmem:[%s350 + $0x410] sm:$0xff]
      %v1731 = vld [vmem:[%s350 + $0x418] sm:$0xff]
      %v1732 = vld [vmem:[%s350 + $0x420] sm:$0xf]
      %v1733 = vld [vmem:[%s350 + $0x424] sm:$0xff]
      %v1734 = vld [vmem:[%s350 + $0x42c] sm:$0xff]
      %v1735 = vld [vmem:[%s350 + $0x434] sm:$0xf]
      %v1736 = vld [vmem:[%s350 + $0x438] sm:$0xff]
      %v1737 = vld [vmem:[%s350 + $0x440] sm:$0xff]
      %v1738 = vld [vmem:[%s350 + $0x448] sm:$0xf]
      %v1739 = vld [vmem:[%s350 + $0x44c] sm:$0xff]
      %v1740 = vld [vmem:[%s350 + $0x454] sm:$0xff]
      %v1741 = vld [vmem:[%s350 + $0x45c] sm:$0xf]
      %v1742 = vld [vmem:[%s350 + $0x460] sm:$0xff]
      %v1743 = vld [vmem:[%s350 + $0x468] sm:$0xff]
      %v1744 = vld [vmem:[%s350 + $0x470] sm:$0xf]
      %v1745 = vld [vmem:[%s350 + $0x474] sm:$0xff]
      %v1746 = vld [vmem:[%s350 + $0x47c] sm:$0xff]
      %v1747 = vld [vmem:[%s350 + $0x484] sm:$0xf]
      %v1748 = vld [vmem:[%s350 + $0x488] sm:$0xff]
      %v1749 = vld [vmem:[%s350 + $0x490] sm:$0xff]
      %v1750 = vld [vmem:[%s350 + $0x498] sm:$0xf]
      %v1751 = vld [vmem:[%s350 + $0x49c] sm:$0xff]
      %v1752 = vld [vmem:[%s350 + $0x4a4] sm:$0xff]
      %v1753 = vld [vmem:[%s350 + $0x4ac] sm:$0xf]
      %v1754 = vld [vmem:[%s350 + $0x4b0] sm:$0xff]
      %v1755 = vld [vmem:[%s350 + $0x4b8] sm:$0xff]
      %v1756 = vld [vmem:[%s350 + $0x4c0] sm:$0xf]
      %v1757 = vld [vmem:[%s350 + $0x4c4] sm:$0xff]
      %v1758 = vld [vmem:[%s350 + $0x4cc] sm:$0xff]
      %v1759 = vld [vmem:[%s350 + $0x4d4] sm:$0xf]
      %v1760 = vld [vmem:[%s350 + $0x4d8] sm:$0xff]
      %v1761 = vld [vmem:[%s350 + $0x4e0] sm:$0xff]
      %v1762 = vld [vmem:[%s350 + $0x4e8] sm:$0xf]
      %v1763 = vld [vmem:[%s350 + $0x4ec] sm:$0xff]
      %v1764 = vld [vmem:[%s350 + $0x4f4] sm:$0xff]
      %v1765 = vld [vmem:[%s350 + $0x4fc] sm:$0xf]
      %v1766 = vld [vmem:[%s350 + $0x500] sm:$0xff]
      %v1767 = vld [vmem:[%s350 + $0x508] sm:$0xff]
      %v1768 = vld [vmem:[%s350 + $0x510] sm:$0xf]
      %v1769 = vld [vmem:[%s350 + $0x514] sm:$0xff]
      %v1770 = vld [vmem:[%s350 + $0x51c] sm:$0xff]
      %v1771 = vld [vmem:[%s350 + $0x524] sm:$0xf]
      %v1772 = vld [vmem:[%s350 + $0x528] sm:$0xff]
      %v1773 = vld [vmem:[%s350 + $0x530] sm:$0xff]
      %v1774 = vld [vmem:[%s350 + $0x538] sm:$0xf]
      %v1775 = vld [vmem:[%s350 + $0x53c] sm:$0xff]
      %v1776 = vld [vmem:[%s350 + $0x544] sm:$0xff]
      %v1777 = vld [vmem:[%s350 + $0x54c] sm:$0xf]
      %v1778 = vld [vmem:[%s350 + $0x550] sm:$0xff]
      %v1779 = vld [vmem:[%s350 + $0x558] sm:$0xff]
      %v1780 = vld [vmem:[%s350 + $0x560] sm:$0xf]
      %v1781 = vld [vmem:[%s350 + $0x564] sm:$0xff]
      %v1782 = vld [vmem:[%s350 + $0x56c] sm:$0xff]
      %v1783 = vld [vmem:[%s350 + $0x574] sm:$0xf]
      %v1784 = vld [vmem:[%s350 + $0x578] sm:$0xff]
      %v1785 = vld [vmem:[%s350 + $0x580] sm:$0xff]
      %v1786 = vld [vmem:[%s350 + $0x588] sm:$0xf]
      %v1787 = vld [vmem:[%s350 + $0x58c] sm:$0xff]
      %v1788 = vld [vmem:[%s350 + $0x594] sm:$0xff]
      %v1789 = vld [vmem:[%s350 + $0x59c] sm:$0xf]
      %v1790 = vld [vmem:[%s350 + $0x5a0] sm:$0xff]
      %v1791 = vld [vmem:[%s350 + $0x5a8] sm:$0xff]
      %v1792 = vld [vmem:[%s350 + $0x5b0] sm:$0xf]
      %v1793 = vld [vmem:[%s350 + $0x5b4] sm:$0xff]
      %v1794 = vld [vmem:[%s350 + $0x5bc] sm:$0xff]
      %v1795 = vld [vmem:[%s350 + $0x5c4] sm:$0xf]
      %v1796 = vld [vmem:[%s350 + $0x5c8] sm:$0xff]
      %v1797 = vld [vmem:[%s350 + $0x5d0] sm:$0xff]
      %v1798 = vld [vmem:[%s350 + $0x5d8] sm:$0xf]
      %v1799 = vld [vmem:[%s350 + $0x5dc] sm:$0xff]
      %v1800 = vld [vmem:[%s350 + $0x5e4] sm:$0xff]
      %v1801 = vld [vmem:[%s350 + $0x5ec] sm:$0xf]
      %v1802 = vld [vmem:[%s350 + $0x5f0] sm:$0xff]
      %v1803 = vld [vmem:[%s350 + $0x5f8] sm:$0xff]
      %v1804 = vld [vmem:[%s350 + $0x600] sm:$0xf]
      %v1805 = vld [vmem:[%s350 + $0x604] sm:$0xff]
      %v1806 = vld [vmem:[%s350 + $0x60c] sm:$0xff]
      %v1807 = vld [vmem:[%s350 + $0x614] sm:$0xf]
      %v1808 = vld [vmem:[%s350 + $0x618] sm:$0xff]
      %v1809 = vld [vmem:[%s350 + $0x620] sm:$0xff]
      %v1810 = vld [vmem:[%s350 + $0x628] sm:$0xf]
      %v1811 = vld [vmem:[%s350 + $0x62c] sm:$0xff]
      %v1812 = vld [vmem:[%s350 + $0x634] sm:$0xff]
      %v1813 = vld [vmem:[%s350 + $0x63c] sm:$0xf]
      %v1814 = vld [vmem:[%s350 + $0x640] sm:$0xff]
      %v1815 = vld [vmem:[%s350 + $0x648] sm:$0xff]
      %v1816 = vld [vmem:[%s350 + $0x650] sm:$0xf]
      %v1817 = vld [vmem:[%s350 + $0x654] sm:$0xff]
      %v1818 = vld [vmem:[%s350 + $0x65c] sm:$0xff]
      %v1819 = vld [vmem:[%s350 + $0x664] sm:$0xf]
      %v1820 = vld [vmem:[%s350 + $0x668] sm:$0xff]
      %v1821 = vld [vmem:[%s350 + $0x670] sm:$0xff]
      %v1822 = vld [vmem:[%s350 + $0x678] sm:$0xf]
      %v1823 = vld [vmem:[%s350 + $0x67c] sm:$0xff]
      %v1824 = vld [vmem:[%s350 + $0x684] sm:$0xff]
      %v1825 = vld [vmem:[%s350 + $0x68c] sm:$0xf]
      %v1826 = vld [vmem:[%s350 + $0x690] sm:$0xff]
      %v1827 = vld [vmem:[%s350 + $0x698] sm:$0xff]
      %v1828 = vld [vmem:[%s350 + $0x6a0] sm:$0xf]
      %v1829 = vld [vmem:[%s350 + $0x6a4] sm:$0xff]
      %v1830 = vld [vmem:[%s350 + $0x6ac] sm:$0xff]
      %v1831 = vld [vmem:[%s350 + $0x6b4] sm:$0xf]
      %v1832 = vld [vmem:[%s350 + $0x6b8] sm:$0xff]
      %v1833 = vld [vmem:[%s350 + $0x6c0] sm:$0xff]
      %v1834 = vld [vmem:[%s350 + $0x6c8] sm:$0xf]
      %v1835 = vld [vmem:[%s350 + $0x6cc] sm:$0xff]
      %v1836 = vld [vmem:[%s350 + $0x6d4] sm:$0xff]
      %v1837 = vld [vmem:[%s350 + $0x6dc] sm:$0xf]
      %v1838 = vld [vmem:[%s350 + $0x6e0] sm:$0xff]
      %v1839 = vld [vmem:[%s350 + $0x6e8] sm:$0xff]
      %v1840 = vld [vmem:[%s350 + $0x6f0] sm:$0xf]
      %v1841 = vld [vmem:[%s350 + $0x6f4] sm:$0xff]
      %v1842 = vld [vmem:[%s350 + $0x6fc] sm:$0xff]
      %v1843 = vld [vmem:[%s350 + $0x704] sm:$0xf]
      %v1844 = vld [vmem:[%s350 + $0x708] sm:$0xff]
      %v1845 = vld [vmem:[%s350 + $0x710] sm:$0xff]
      %v1846 = vld [vmem:[%s350 + $0x718] sm:$0xf]
      %v1847 = vld [vmem:[%s350 + $0x71c] sm:$0xff]
      %v1848 = vld [vmem:[%s350 + $0x724] sm:$0xff]
      %v1849 = vld [vmem:[%s350 + $0x72c] sm:$0xf]
      %v1850 = vld [vmem:[%s350 + $0x730] sm:$0xff]
      %v1851 = vld [vmem:[%s350 + $0x738] sm:$0xff]
      %v1852 = vld [vmem:[%s350 + $0x740] sm:$0xf]
      %v1853 = vld [vmem:[%s350 + $0x744] sm:$0xff]
      %v1854 = vld [vmem:[%s350 + $0x74c] sm:$0xff]
      %v1855 = vld [vmem:[%s350 + $0x754] sm:$0xf]
      %v1856 = vld [vmem:[%s350 + $0x758] sm:$0xff]
      %v1857 = vld [vmem:[%s350 + $0x760] sm:$0xff]
      %v1858 = vld [vmem:[%s350 + $0x768] sm:$0xf]
      %v1859 = vld [vmem:[%s350 + $0x76c] sm:$0xff]
      %v1860 = vld [vmem:[%s350 + $0x774] sm:$0xff]
      %v1861 = vld [vmem:[%s350 + $0x77c] sm:$0xf]
      %v1862 = vld [vmem:[%s350 + $0x780] sm:$0xff]
      %v1863 = vld [vmem:[%s350 + $0x788] sm:$0xff]
      %v1864 = vld [vmem:[%s350 + $0x790] sm:$0xf]
      %v1865 = vld [vmem:[%s350 + $0x794] sm:$0xff]
      %v1866 = vld [vmem:[%s350 + $0x79c] sm:$0xff]
      %v1867 = vld [vmem:[%s350 + $0x7a4] sm:$0xf]
      %v1868 = vld [vmem:[%s350 + $0x7a8] sm:$0xff]
      %v1869 = vld [vmem:[%s350 + $0x7b0] sm:$0xff]
      %v1870 = vld [vmem:[%s350 + $0x7b8] sm:$0xf]
      %v1871 = vld [vmem:[%s350 + $0x7bc] sm:$0xff]
      %v1872 = vld [vmem:[%s350 + $0x7c4] sm:$0xff]
      %v1873 = vld [vmem:[%s350 + $0x7cc] sm:$0xf]
      %v1874 = vld [vmem:[%s350 + $0x7d0] sm:$0xff]
      %v1875 = vld [vmem:[%s350 + $0x7d8] sm:$0xff]
      %v1876 = vld [vmem:[%s350 + $0x7e0] sm:$0xf]
      %v1877 = vld [vmem:[%s350 + $0x7e4] sm:$0xff]
      %v1878 = vld [vmem:[%s350 + $0x7ec] sm:$0xff]
      %v1879 = vld [vmem:[%s350 + $0x7f4] sm:$0xf]
      %v1880 = vld [vmem:[%s350 + $0x7f8] sm:$0xff]
      %v1881 = vld [vmem:[%s350 + $0x800] sm:$0xff]
      %v1882 = vld [vmem:[%s350 + $0x808] sm:$0xf]
      %v1883 = vld [vmem:[%s350 + $0x80c] sm:$0xff]
      %v1884 = vld [vmem:[%s350 + $0x814] sm:$0xff]
      %v1885 = vld [vmem:[%s350 + $0x81c] sm:$0xf]
      %v1886 = vld [vmem:[%s350 + $0x820] sm:$0xff]
      %v1887 = vld [vmem:[%s350 + $0x828] sm:$0xff]
      %v1888 = vld [vmem:[%s350 + $0x830] sm:$0xf]
      %v1889 = vld [vmem:[%s350 + $0x834] sm:$0xff]
      %v1890 = vld [vmem:[%s350 + $0x83c] sm:$0xff]
      %v1891 = vld [vmem:[%s350 + $0x844] sm:$0xf]
      %v1892 = vld [vmem:[%s350 + $0x848] sm:$0xff]
      %v1893 = vld [vmem:[%s350 + $0x850] sm:$0xff]
      %v1894 = vld [vmem:[%s350 + $0x858] sm:$0xf]
      %v1895 = vld [vmem:[%s350 + $0x85c] sm:$0xff]
      %v1896 = vld [vmem:[%s350 + $0x864] sm:$0xff]
      %v1897 = vld [vmem:[%s350 + $0x86c] sm:$0xf]
      %v1898 = vld [vmem:[%s350 + $0x870] sm:$0xff]
      %v1899 = vld [vmem:[%s350 + $0x878] sm:$0xff]
      %v1900 = vld [vmem:[%s350 + $0x880] sm:$0xf]
      %v1901 = vld [vmem:[%s350 + $0x884] sm:$0xff]
      %v1902 = vld [vmem:[%s350 + $0x88c] sm:$0xff]
      %v1903 = vld [vmem:[%s350 + $0x894] sm:$0xf]
      %v1904 = vld [vmem:[%s350 + $0x898] sm:$0xff]
      %v1905 = vld [vmem:[%s350 + $0x8a0] sm:$0xff]
      %v1906 = vld [vmem:[%s350 + $0x8a8] sm:$0xf]
      %v1907 = vld [vmem:[%s350 + $0x8ac] sm:$0xff]
      %v1908 = vld [vmem:[%s350 + $0x8b4] sm:$0xff]
      %v1909 = vld [vmem:[%s350 + $0x8bc] sm:$0xf]
      %v1910 = vld [vmem:[%s350 + $0x8c0] sm:$0xff]
      %v1911 = vld [vmem:[%s350 + $0x8c8] sm:$0xff]
      %v1912 = vld [vmem:[%s350 + $0x8d0] sm:$0xf]
      %v1913 = vld [vmem:[%s350 + $0x8d4] sm:$0xff]
      %v1914 = vld [vmem:[%s350 + $0x8dc] sm:$0xff]
      %v1915 = vld [vmem:[%s350 + $0x8e4] sm:$0xf]
      %v1916 = vld [vmem:[%s350 + $0x8e8] sm:$0xff]
      %v1917 = vld [vmem:[%s350 + $0x8f0] sm:$0xff]
      %v1918 = vld [vmem:[%s350 + $0x8f8] sm:$0xf]
      %v1919 = vld [vmem:[%s350 + $0x8fc] sm:$0xff]
      %v1920 = vld [vmem:[%s350 + $0x904] sm:$0xff]
      %v1921 = vld [vmem:[%s350 + $0x90c] sm:$0xf]
      %v1922 = vld [vmem:[%s350 + $0x910] sm:$0xff]
      %v1923 = vld [vmem:[%s350 + $0x918] sm:$0xff]
      %v1924 = vld [vmem:[%s350 + $0x920] sm:$0xf]
      %v1925 = vld [vmem:[%s350 + $0x924] sm:$0xff]
      %v1926 = vld [vmem:[%s350 + $0x92c] sm:$0xff]
      %v1927 = vld [vmem:[%s350 + $0x934] sm:$0xf]
      %v1928 = vld [vmem:[%s350 + $0x938] sm:$0xff]
      %v1929 = vld [vmem:[%s350 + $0x940] sm:$0xff]
      %v1930 = vld [vmem:[%s350 + $0x948] sm:$0xf]
      %v1931 = vld [vmem:[%s350 + $0x94c] sm:$0xff]
      %v1932 = vld [vmem:[%s350 + $0x954] sm:$0xff]
      %v1933 = vld [vmem:[%s350 + $0x95c] sm:$0xf]
      %v1934 = vld [vmem:[%s350 + $0x960] sm:$0xff]
      %v1935 = vld [vmem:[%s350 + $0x968] sm:$0xff]
      %v1936 = vld [vmem:[%s350 + $0x970] sm:$0xf]
      %v1937 = vld [vmem:[%s350 + $0x974] sm:$0xff]
      %v1938 = vld [vmem:[%s350 + $0x97c] sm:$0xff]
      %v1939 = vld [vmem:[%s350 + $0x984] sm:$0xf]
      %v1940 = vld [vmem:[%s350 + $0x988] sm:$0xff]
      %v1941 = vld [vmem:[%s350 + $0x990] sm:$0xff]
      %v1942 = vld [vmem:[%s350 + $0x998] sm:$0xf]
      %v1943 = vld [vmem:[%s350 + $0x99c] sm:$0xff]
      %v1944 = vld [vmem:[%s350 + $0x9a4] sm:$0xff]
      %v1945 = vld [vmem:[%s350 + $0x9ac] sm:$0xf]
      %v1946 = vld [vmem:[%s350 + $0x9b0] sm:$0xff]
      %v1947 = vld [vmem:[%s350 + $0x9b8] sm:$0xff]
      %v1948 = vld [vmem:[%s350 + $0x9c0] sm:$0xf]
      %v1949 = vld [vmem:[%s350 + $0x9c4] sm:$0xff]
      %v1950 = vld [vmem:[%s350 + $0x9cc] sm:$0xff]
      %v1951 = vld [vmem:[%s350 + $0x9d4] sm:$0xf]
      %v1952 = vld [vmem:[%s350 + $0x9d8] sm:$0xff]
      %v1953 = vld [vmem:[%s350 + $0x9e0] sm:$0xff]
      %v1954 = vld [vmem:[%s350 + $0x9e8] sm:$0xf]
      %v1955 = vld [vmem:[%s350 + $0x9ec] sm:$0xff]
      %v1956 = vld [vmem:[%s350 + $0x9f4] sm:$0xff]
      %v1957 = vld [vmem:[%s350 + $0x9fc] sm:$0xf]
      %v1958 = vld [vmem:[%s350 + $0xa00] sm:$0xff]
      %v1959 = vld [vmem:[%s350 + $0xa08] sm:$0xff]
      %v1960 = vld [vmem:[%s350 + $0xa10] sm:$0xf]
      %v1961 = vld [vmem:[%s350 + $0xa14] sm:$0xff]
      %v1962 = vld [vmem:[%s350 + $0xa1c] sm:$0xff]
      %v1963 = vld [vmem:[%s350 + $0xa24] sm:$0xf]
      %v1964 = vld [vmem:[%s350 + $0xa28] sm:$0xff]
      %v1965 = vld [vmem:[%s350 + $0xa30] sm:$0xff]
      %v1966 = vld [vmem:[%s350 + $0xa38] sm:$0xf]
      %v1967 = vld [vmem:[%s350 + $0xa3c] sm:$0xff]
      %v1968 = vld [vmem:[%s350 + $0xa44] sm:$0xff]
      %v1969 = vld [vmem:[%s350 + $0xa4c] sm:$0xf]
      %v1970 = vld [vmem:[%s350 + $0xa50] sm:$0xff]
      %v1971 = vld [vmem:[%s350 + $0xa58] sm:$0xff]
      %v1972 = vld [vmem:[%s350 + $0xa60] sm:$0xf]
      %v1973 = vld [vmem:[%s350 + $0xa64] sm:$0xff]
      %v1974 = vld [vmem:[%s350 + $0xa6c] sm:$0xff]
      %v1975 = vld [vmem:[%s350 + $0xa74] sm:$0xf]
      %v1976 = vld [vmem:[%s350 + $0xa78] sm:$0xff]
      %v1977 = vld [vmem:[%s350 + $0xa80] sm:$0xff]
      %v1978 = vld [vmem:[%s350 + $0xa88] sm:$0xf]
      %v1979 = vld [vmem:[%s350 + $0xa8c] sm:$0xff]
      %v1980 = vld [vmem:[%s350 + $0xa94] sm:$0xff]
      %v1981 = vld [vmem:[%s350 + $0xa9c] sm:$0xf]
      %v1982 = vld [vmem:[%s350 + $0xaa0] sm:$0xff]
      %v1983 = vld [vmem:[%s350 + $0xaa8] sm:$0xff]
      %v1984 = vld [vmem:[%s350 + $0xab0] sm:$0xf]
      %v1985 = vld [vmem:[%s350 + $0xab4] sm:$0xff]
      %v1986 = vld [vmem:[%s350 + $0xabc] sm:$0xff]
      %v1987 = vld [vmem:[%s350 + $0xac4] sm:$0xf]
      %v1988 = vld [vmem:[%s350 + $0xac8] sm:$0xff]
      %v1989 = vld [vmem:[%s350 + $0xad0] sm:$0xff]
      %v1990 = vld [vmem:[%s350 + $0xad8] sm:$0xf]
      %v1991 = vld [vmem:[%s350 + $0xadc] sm:$0xff]
      %v1992 = vld [vmem:[%s350 + $0xae4] sm:$0xff]
      %v1993 = vld [vmem:[%s350 + $0xaec] sm:$0xf]
      %v1994 = vld [vmem:[%s350 + $0xaf0] sm:$0xff]
      %v1995 = vld [vmem:[%s350 + $0xaf8] sm:$0xff]
      %v1996 = vld [vmem:[%s350 + $0xb00] sm:$0xf]
      %v1997 = vld [vmem:[%s350 + $0xb04] sm:$0xff]
      %v1998 = vld [vmem:[%s350 + $0xb0c] sm:$0xff]
      %v1999 = vld [vmem:[%s350 + $0xb14] sm:$0xf]
      %v2000 = vld [vmem:[%s350 + $0xb18] sm:$0xff]
      %v2001 = vld [vmem:[%s350 + $0xb20] sm:$0xff]
      %v2002 = vld [vmem:[%s350 + $0xb28] sm:$0xf]
      %v2003 = vld [vmem:[%s350 + $0xb2c] sm:$0xff]
      %v2004 = vld [vmem:[%s350 + $0xb34] sm:$0xff]
      %v2005 = vld [vmem:[%s350 + $0xb3c] sm:$0xf]
      %v2006 = vld [vmem:[%s350 + $0xb40] sm:$0xff]
      %v2007 = vld [vmem:[%s350 + $0xb48] sm:$0xff]
      %v2008 = vld [vmem:[%s350 + $0xb50] sm:$0xf]
      %v2009 = vld [vmem:[%s350 + $0xb54] sm:$0xff]
      %v2010 = vld [vmem:[%s350 + $0xb5c] sm:$0xff]
      %v2011 = vld [vmem:[%s350 + $0xb64] sm:$0xf]
      %v2012 = vld [vmem:[%s350 + $0xb68] sm:$0xff]
      %v2013 = vld [vmem:[%s350 + $0xb70] sm:$0xff]
      %v2014 = vld [vmem:[%s350 + $0xb78] sm:$0xf]
      %v2015 = vld [vmem:[%s350 + $0xb7c] sm:$0xff]
      %v2016 = vld [vmem:[%s350 + $0xb84] sm:$0xff]
      %v2017 = vld [vmem:[%s350 + $0xb8c] sm:$0xf]
      %v2018 = vld [vmem:[%s350 + $0xb90] sm:$0xff]
      %v2019 = vld [vmem:[%s350 + $0xb98] sm:$0xff]
      %v2020 = vld [vmem:[%s350 + $0xba0] sm:$0xf]
      %v2021 = vld [vmem:[%s350 + $0xba4] sm:$0xff]
      %v2022 = vld [vmem:[%s350 + $0xbac] sm:$0xff]
      %v2023 = vld [vmem:[%s350 + $0xbb4] sm:$0xf]
      %v2024 = vld [vmem:[%s350 + $0xbb8] sm:$0xff]
      %v2025 = vld [vmem:[%s350 + $0xbc0] sm:$0xff]
      %v2026 = vld [vmem:[%s350 + $0xbc8] sm:$0xf]
      %v2027 = vld [vmem:[%s350 + $0xbcc] sm:$0xff]
      %v2028 = vld [vmem:[%s350 + $0xbd4] sm:$0xff]
      %v2029 = vld [vmem:[%s350 + $0xbdc] sm:$0xf]
      %v2030 = vld [vmem:[%s350 + $0xbe0] sm:$0xff]
      %v2031 = vld [vmem:[%s350 + $0xbe8] sm:$0xff]
      %v2032 = vld [vmem:[%s350 + $0xbf0] sm:$0xf]
      %v2033 = vld [vmem:[%s350 + $0xbf4] sm:$0xff]
      %v2034 = vld [vmem:[%s350 + $0xbfc] sm:$0xff]
      %v2035 = vld [vmem:[%s350 + $0xc04] sm:$0xf]
      %v2036 = vld [vmem:[%s350 + $0xc08] sm:$0xff]
      %v2037 = vld [vmem:[%s350 + $0xc10] sm:$0xff]
      %v2038 = vld [vmem:[%s350 + $0xc18] sm:$0xf]
      %v2039 = vld [vmem:[%s350 + $0xc1c] sm:$0xff]
      %v2040 = vld [vmem:[%s350 + $0xc24] sm:$0xff]
      %v2041 = vld [vmem:[%s350 + $0xc2c] sm:$0xf]
      %v2042 = vld [vmem:[%s350 + $0xc30] sm:$0xff]
      %v2043 = vld [vmem:[%s350 + $0xc38] sm:$0xff]
      %v2044 = vld [vmem:[%s350 + $0xc40] sm:$0xf]
      %v2045 = vld [vmem:[%s350 + $0xc44] sm:$0xff]
      %v2046 = vld [vmem:[%s350 + $0xc4c] sm:$0xff]
      %v2047 = vld [vmem:[%s350 + $0xc54] sm:$0xf]
      %v2048 = vld [vmem:[%s350 + $0xc58] sm:$0xff]
      %v2049 = vld [vmem:[%s350 + $0xc60] sm:$0xff]
      %v2050 = vld [vmem:[%s350 + $0xc68] sm:$0xf]
      %v2051 = vld [vmem:[%s350 + $0xc6c] sm:$0xff]
      %v2052 = vld [vmem:[%s350 + $0xc74] sm:$0xff]
      %v2053 = vld [vmem:[%s350 + $0xc7c] sm:$0xf]
      %v2054 = vld [vmem:[%s350 + $0xc80] sm:$0xff]
      %v2055 = vld [vmem:[%s350 + $0xc88] sm:$0xff]
      %v2056 = vld [vmem:[%s350 + $0xc90] sm:$0xf]
      %v2057 = vld [vmem:[%s350 + $0xc94] sm:$0xff]
      %v2058 = vld [vmem:[%s350 + $0xc9c] sm:$0xff]
      %v2059 = vld [vmem:[%s350 + $0xca4] sm:$0xf]
      %v2060 = vld [vmem:[%s350 + $0xca8] sm:$0xff]
      %v2061 = vld [vmem:[%s350 + $0xcb0] sm:$0xff]
      %v2062 = vld [vmem:[%s350 + $0xcb8] sm:$0xf]
      %v2063 = vld [vmem:[%s350 + $0xcbc] sm:$0xff]
      %v2064 = vld [vmem:[%s350 + $0xcc4] sm:$0xff]
      %v2065 = vld [vmem:[%s350 + $0xccc] sm:$0xf]
      %v2066 = vld [vmem:[%s350 + $0xcd0] sm:$0xff]
      %v2067 = vld [vmem:[%s350 + $0xcd8] sm:$0xff]
      %v2068 = vld [vmem:[%s350 + $0xce0] sm:$0xf]
      %v2069 = vld [vmem:[%s350 + $0xce4] sm:$0xff]
      %v2070 = vld [vmem:[%s350 + $0xcec] sm:$0xff]
      %v2071 = vld [vmem:[%s350 + $0xcf4] sm:$0xf]
      %v2072 = vld [vmem:[%s350 + $0xcf8] sm:$0xff]
      %v2073 = vld [vmem:[%s350 + $0xd00] sm:$0xff]
      %v2074 = vld [vmem:[%s350 + $0xd08] sm:$0xf]
      %v2075 = vld [vmem:[%s350 + $0xd0c] sm:$0xff]
      %v2076 = vld [vmem:[%s350 + $0xd14] sm:$0xff]
      %v2077 = vld [vmem:[%s350 + $0xd1c] sm:$0xf]
      %v2078 = vld [vmem:[%s350 + $0xd20] sm:$0xff]
      %v2079 = vld [vmem:[%s350 + $0xd28] sm:$0xff]
      %v2080 = vld [vmem:[%s350 + $0xd30] sm:$0xf]
      %v2081 = vld [vmem:[%s350 + $0xd34] sm:$0xff]
      %v2082 = vld [vmem:[%s350 + $0xd3c] sm:$0xff]
      %v2083 = vld [vmem:[%s350 + $0xd44] sm:$0xf]
      %v2084 = vld [vmem:[%s350 + $0xd48] sm:$0xff]
      %v2085 = vld [vmem:[%s350 + $0xd50] sm:$0xff]
      %v2086 = vld [vmem:[%s350 + $0xd58] sm:$0xf]
      %v2087 = vld [vmem:[%s350 + $0xd5c] sm:$0xff]
      %v2088 = vld [vmem:[%s350 + $0xd64] sm:$0xff]
      %v2089 = vld [vmem:[%s350 + $0xd6c] sm:$0xf]
      %v2090 = vld [vmem:[%s350 + $0xd70] sm:$0xff]
      %v2091 = vld [vmem:[%s350 + $0xd78] sm:$0xff]
      %v2092 = vld [vmem:[%s350 + $0xd80] sm:$0xf]
      %v2093 = vld [vmem:[%s350 + $0xd84] sm:$0xff]
      %v2094 = vld [vmem:[%s350 + $0xd8c] sm:$0xff]
      %v2095 = vld [vmem:[%s350 + $0xd94] sm:$0xf]
      %v2096 = vld [vmem:[%s350 + $0xd98] sm:$0xff]
      %v2097 = vld [vmem:[%s350 + $0xda0] sm:$0xff]
      %v2098 = vld [vmem:[%s350 + $0xda8] sm:$0xf]
      %v2099 = vld [vmem:[%s350 + $0xdac] sm:$0xff]
      %v2100 = vld [vmem:[%s350 + $0xdb4] sm:$0xff]
      %v2101 = vld [vmem:[%s350 + $0xdbc] sm:$0xf]
      %v2102 = vld [vmem:[%s350 + $0xdc0] sm:$0xff]
      %v2103 = vld [vmem:[%s350 + $0xdc8] sm:$0xff]
      %v2104 = vld [vmem:[%s350 + $0xdd0] sm:$0xf]
      %v2105 = vld [vmem:[%s350 + $0xdd4] sm:$0xff]
      %v2106 = vld [vmem:[%s350 + $0xddc] sm:$0xff]
      %v2107 = vld [vmem:[%s350 + $0xde4] sm:$0xf]
      %v2108 = vld [vmem:[%s350 + $0xde8] sm:$0xff]
      %v2109 = vld [vmem:[%s350 + $0xdf0] sm:$0xff]
      %v2110 = vld [vmem:[%s350 + $0xdf8] sm:$0xf]
      %v2111 = vld [vmem:[%s350 + $0xdfc] sm:$0xff]
      %v2112 = vld [vmem:[%s350 + $0xe04] sm:$0xff]
      %v2113 = vld [vmem:[%s350 + $0xe0c] sm:$0xf]
      %v2114 = vld [vmem:[%s350 + $0xe10] sm:$0xff]
      %v2115 = vld [vmem:[%s350 + $0xe18] sm:$0xff]
      %v2116 = vld [vmem:[%s350 + $0xe20] sm:$0xf]
      %v2117 = vld [vmem:[%s350 + $0xe24] sm:$0xff]
      %v2118 = vld [vmem:[%s350 + $0xe2c] sm:$0xff]
      %v2119 = vld [vmem:[%s350 + $0xe34] sm:$0xf]
      %v2120 = vld [vmem:[%s350 + $0xe38] sm:$0xff]
      %v2121 = vld [vmem:[%s350 + $0xe40] sm:$0xff]
      %v2122 = vld [vmem:[%s350 + $0xe48] sm:$0xf]
      %v2123 = vld [vmem:[%s350 + $0xe4c] sm:$0xff]
      %v2124 = vld [vmem:[%s350 + $0xe54] sm:$0xff]
      %v2125 = vld [vmem:[%s350 + $0xe5c] sm:$0xf]
      %v2126 = vld [vmem:[%s350 + $0xe60] sm:$0xff]
      %v2127 = vld [vmem:[%s350 + $0xe68] sm:$0xff]
      %v2128 = vld [vmem:[%s350 + $0xe70] sm:$0xf]
      %v2129 = vld [vmem:[%s350 + $0xe74] sm:$0xff]
      %v2130 = vld [vmem:[%s350 + $0xe7c] sm:$0xff]
      %v2131 = vld [vmem:[%s350 + $0xe84] sm:$0xf]
      %v2132 = vld [vmem:[%s350 + $0xe88] sm:$0xff]
      %v2133 = vld [vmem:[%s350 + $0xe90] sm:$0xff]
      %v2134 = vld [vmem:[%s350 + $0xe98] sm:$0xf]
      %v2135 = vld [vmem:[%s350 + $0xe9c] sm:$0xff]
      %v2136 = vld [vmem:[%s350 + $0xea4] sm:$0xff]
      %v2137 = vld [vmem:[%s350 + $0xeac] sm:$0xf]
      %v2138 = vld [vmem:[%s350 + $0xeb0] sm:$0xff]
      %v2139 = vld [vmem:[%s350 + $0xeb8] sm:$0xff]
      %v2140 = vld [vmem:[%s350 + $0xec0] sm:$0xf]
      %v2141 = vld [vmem:[%s350 + $0xec4] sm:$0xff]
      %v2142 = vld [vmem:[%s350 + $0xecc] sm:$0xff]
      %v2143 = vld [vmem:[%s350 + $0xed4] sm:$0xf]
      %v2144 = vld [vmem:[%s350 + $0xed8] sm:$0xff]
      %v2145 = vld [vmem:[%s350 + $0xee0] sm:$0xff]
      %v2146 = vld [vmem:[%s350 + $0xee8] sm:$0xf]
      %v2147 = vld [vmem:[%s350 + $0xeec] sm:$0xff]
      %v2148 = vld [vmem:[%s350 + $0xef4] sm:$0xff]
      %v2149 = vld [vmem:[%s350 + $0xefc] sm:$0xf]
      %v2726 = vunpack.c.l.b16 %v1574
      %v2727 = vunpack.c.h.b16 %v1574
      %v2728 = vunpack.c.l.b16 %v1575
      %v2729 = vunpack.c.h.b16 %v1575
      %v2730 = vunpack.c.l.b16 %v1576
      %v2731 = vunpack.c.l.b16 %v1577
      %v2732 = vunpack.c.h.b16 %v1577
      %v2733 = vunpack.c.l.b16 %v1578
      %v2734 = vunpack.c.h.b16 %v1578
      %v2735 = vunpack.c.l.b16 %v1579
      %v2736 = vunpack.c.l.b16 %v1580
      %v2737 = vunpack.c.h.b16 %v1580
      %v2738 = vunpack.c.l.b16 %v1581
      %v2739 = vunpack.c.h.b16 %v1581
      %v2740 = vunpack.c.l.b16 %v1582
      %v2741 = vunpack.c.l.b16 %v1583
      %v2742 = vunpack.c.h.b16 %v1583
      %v2743 = vunpack.c.l.b16 %v1584
      %v2744 = vunpack.c.h.b16 %v1584
      %v2745 = vunpack.c.l.b16 %v1585
      %v2746 = vunpack.c.l.b16 %v1586
      %v2747 = vunpack.c.h.b16 %v1586
      %v2748 = vunpack.c.l.b16 %v1587
      %v2749 = vunpack.c.h.b16 %v1587
      %v2750 = vunpack.c.l.b16 %v1588
      %v2751 = vunpack.c.l.b16 %v1589
      %v2752 = vunpack.c.h.b16 %v1589
      %v2753 = vunpack.c.l.b16 %v1590
      %v2754 = vunpack.c.h.b16 %v1590
      %v2755 = vunpack.c.l.b16 %v1591
      %v2756 = vunpack.c.l.b16 %v1592
      %v2757 = vunpack.c.h.b16 %v1592
      %v2758 = vunpack.c.l.b16 %v1593
      %v2759 = vunpack.c.h.b16 %v1593
      %v2760 = vunpack.c.l.b16 %v1594
      %v2761 = vunpack.c.l.b16 %v1595
      %v2762 = vunpack.c.h.b16 %v1595
      %v2763 = vunpack.c.l.b16 %v1596
      %v2764 = vunpack.c.h.b16 %v1596
      %v2765 = vunpack.c.l.b16 %v1597
      %v2766 = vunpack.c.l.b16 %v1598
      %v2767 = vunpack.c.h.b16 %v1598
      %v2768 = vunpack.c.l.b16 %v1599
      %v2769 = vunpack.c.h.b16 %v1599
      %v2770 = vunpack.c.l.b16 %v1600
      %v2771 = vunpack.c.l.b16 %v1601
      %v2772 = vunpack.c.h.b16 %v1601
      %v2773 = vunpack.c.l.b16 %v1602
      %v2774 = vunpack.c.h.b16 %v1602
      %v2775 = vunpack.c.l.b16 %v1603
      %v2776 = vunpack.c.l.b16 %v1604
      %v2777 = vunpack.c.h.b16 %v1604
      %v2778 = vunpack.c.l.b16 %v1605
      %v2779 = vunpack.c.h.b16 %v1605
      %v2780 = vunpack.c.l.b16 %v1606
      %v2781 = vunpack.c.l.b16 %v1607
      %v2782 = vunpack.c.h.b16 %v1607
      %v2783 = vunpack.c.l.b16 %v1608
      %v2784 = vunpack.c.h.b16 %v1608
      %v2785 = vunpack.c.l.b16 %v1609
      %v2786 = vunpack.c.l.b16 %v1610
      %v2787 = vunpack.c.h.b16 %v1610
      %v2788 = vunpack.c.l.b16 %v1611
      %v2789 = vunpack.c.h.b16 %v1611
      %v2790 = vunpack.c.l.b16 %v1612
      %v2791 = vunpack.c.l.b16 %v1613
      %v2792 = vunpack.c.h.b16 %v1613
      %v2793 = vunpack.c.l.b16 %v1614
      %v2794 = vunpack.c.h.b16 %v1614
      %v2795 = vunpack.c.l.b16 %v1615
      %v2796 = vunpack.c.l.b16 %v1616
      %v2797 = vunpack.c.h.b16 %v1616
      %v2798 = vunpack.c.l.b16 %v1617
      %v2799 = vunpack.c.h.b16 %v1617
      %v2800 = vunpack.c.l.b16 %v1618
      %v2801 = vunpack.c.l.b16 %v1619
      %v2802 = vunpack.c.h.b16 %v1619
      %v2803 = vunpack.c.l.b16 %v1620
      %v2804 = vunpack.c.h.b16 %v1620
      %v2805 = vunpack.c.l.b16 %v1621
      %v2806 = vunpack.c.l.b16 %v1622
      %v2807 = vunpack.c.h.b16 %v1622
      %v2808 = vunpack.c.l.b16 %v1623
      %v2809 = vunpack.c.h.b16 %v1623
      %v2810 = vunpack.c.l.b16 %v1624
      %v2811 = vunpack.c.l.b16 %v1625
      %v2812 = vunpack.c.h.b16 %v1625
      %v2813 = vunpack.c.l.b16 %v1626
      %v2814 = vunpack.c.h.b16 %v1626
      %v2815 = vunpack.c.l.b16 %v1627
      %v2816 = vunpack.c.l.b16 %v1628
      %v2817 = vunpack.c.h.b16 %v1628
      %v2818 = vunpack.c.l.b16 %v1629
      %v2819 = vunpack.c.h.b16 %v1629
      %v2820 = vunpack.c.l.b16 %v1630
      %v2821 = vunpack.c.l.b16 %v1631
      %v2822 = vunpack.c.h.b16 %v1631
      %v2823 = vunpack.c.l.b16 %v1632
      %v2824 = vunpack.c.h.b16 %v1632
      %v2825 = vunpack.c.l.b16 %v1633
      %v2826 = vunpack.c.l.b16 %v1634
      %v2827 = vunpack.c.h.b16 %v1634
      %v2828 = vunpack.c.l.b16 %v1635
      %v2829 = vunpack.c.h.b16 %v1635
      %v2830 = vunpack.c.l.b16 %v1636
      %v2831 = vunpack.c.l.b16 %v1637
      %v2832 = vunpack.c.h.b16 %v1637
      %v2833 = vunpack.c.l.b16 %v1638
      %v2834 = vunpack.c.h.b16 %v1638
      %v2835 = vunpack.c.l.b16 %v1639
      %v2836 = vunpack.c.l.b16 %v1640
      %v2837 = vunpack.c.h.b16 %v1640
      %v2838 = vunpack.c.l.b16 %v1641
      %v2839 = vunpack.c.h.b16 %v1641
      %v2840 = vunpack.c.l.b16 %v1642
      %v2841 = vunpack.c.l.b16 %v1643
      %v2842 = vunpack.c.h.b16 %v1643
      %v2843 = vunpack.c.l.b16 %v1644
      %v2844 = vunpack.c.h.b16 %v1644
      %v2845 = vunpack.c.l.b16 %v1645
      %v2846 = vunpack.c.l.b16 %v1646
      %v2847 = vunpack.c.h.b16 %v1646
      %v2848 = vunpack.c.l.b16 %v1647
      %v2849 = vunpack.c.h.b16 %v1647
      %v2850 = vunpack.c.l.b16 %v1648
      %v2851 = vunpack.c.l.b16 %v1649
      %v2852 = vunpack.c.h.b16 %v1649
      %v2853 = vunpack.c.l.b16 %v1650
      %v2854 = vunpack.c.h.b16 %v1650
      %v2855 = vunpack.c.l.b16 %v1651
      %v2856 = vunpack.c.l.b16 %v1652
      %v2857 = vunpack.c.h.b16 %v1652
      %v2858 = vunpack.c.l.b16 %v1653
      %v2859 = vunpack.c.h.b16 %v1653
      %v2860 = vunpack.c.l.b16 %v1654
      %v2861 = vunpack.c.l.b16 %v1655
      %v2862 = vunpack.c.h.b16 %v1655
      %v2863 = vunpack.c.l.b16 %v1656
      %v2864 = vunpack.c.h.b16 %v1656
      %v2865 = vunpack.c.l.b16 %v1657
      %v2866 = vunpack.c.l.b16 %v1658
      %v2867 = vunpack.c.h.b16 %v1658
      %v2868 = vunpack.c.l.b16 %v1659
      %v2869 = vunpack.c.h.b16 %v1659
      %v2870 = vunpack.c.l.b16 %v1660
      %v2871 = vunpack.c.l.b16 %v1661
      %v2872 = vunpack.c.h.b16 %v1661
      %v2873 = vunpack.c.l.b16 %v1662
      %v2874 = vunpack.c.h.b16 %v1662
      %v2875 = vunpack.c.l.b16 %v1663
      %v2876 = vunpack.c.l.b16 %v1664
      %v2877 = vunpack.c.h.b16 %v1664
      %v2878 = vunpack.c.l.b16 %v1665
      %v2879 = vunpack.c.h.b16 %v1665
      %v2880 = vunpack.c.l.b16 %v1666
      %v2881 = vunpack.c.l.b16 %v1667
      %v2882 = vunpack.c.h.b16 %v1667
      %v2883 = vunpack.c.l.b16 %v1668
      %v2884 = vunpack.c.h.b16 %v1668
      %v2885 = vunpack.c.l.b16 %v1669
      %v2886 = vunpack.c.l.b16 %v1670
      %v2887 = vunpack.c.h.b16 %v1670
      %v2888 = vunpack.c.l.b16 %v1671
      %v2889 = vunpack.c.h.b16 %v1671
      %v2890 = vunpack.c.l.b16 %v1672
      %v2891 = vunpack.c.l.b16 %v1673
      %v2892 = vunpack.c.h.b16 %v1673
      %v2893 = vunpack.c.l.b16 %v1674
      %v2894 = vunpack.c.h.b16 %v1674
      %v2895 = vunpack.c.l.b16 %v1675
      %v2896 = vunpack.c.l.b16 %v1676
      %v2897 = vunpack.c.h.b16 %v1676
      %v2898 = vunpack.c.l.b16 %v1677
      %v2899 = vunpack.c.h.b16 %v1677
      %v2900 = vunpack.c.l.b16 %v1678
      %v2901 = vunpack.c.l.b16 %v1679
      %v2902 = vunpack.c.h.b16 %v1679
      %v2903 = vunpack.c.l.b16 %v1680
      %v2904 = vunpack.c.h.b16 %v1680
      %v2905 = vunpack.c.l.b16 %v1681
      %v2906 = vunpack.c.l.b16 %v1682
      %v2907 = vunpack.c.h.b16 %v1682
      %v2908 = vunpack.c.l.b16 %v1683
      %v2909 = vunpack.c.h.b16 %v1683
      %v2910 = vunpack.c.l.b16 %v1684
      %v2911 = vunpack.c.l.b16 %v1685
      %v2912 = vunpack.c.h.b16 %v1685
      %v2913 = vunpack.c.l.b16 %v1686
      %v2914 = vunpack.c.h.b16 %v1686
      %v2915 = vunpack.c.l.b16 %v1687
      %v2916 = vunpack.c.l.b16 %v1688
      %v2917 = vunpack.c.h.b16 %v1688
      %v2918 = vunpack.c.l.b16 %v1689
      %v2919 = vunpack.c.h.b16 %v1689
      %v2920 = vunpack.c.l.b16 %v1690
      %v2921 = vunpack.c.l.b16 %v1691
      %v2922 = vunpack.c.h.b16 %v1691
      %v2923 = vunpack.c.l.b16 %v1692
      %v2924 = vunpack.c.h.b16 %v1692
      %v2925 = vunpack.c.l.b16 %v1693
      %v2926 = vunpack.c.l.b16 %v1694
      %v2927 = vunpack.c.h.b16 %v1694
      %v2928 = vunpack.c.l.b16 %v1695
      %v2929 = vunpack.c.h.b16 %v1695
      %v2930 = vunpack.c.l.b16 %v1696
      %v2931 = vunpack.c.l.b16 %v1697
      %v2932 = vunpack.c.h.b16 %v1697
      %v2933 = vunpack.c.l.b16 %v1698
      %v2934 = vunpack.c.h.b16 %v1698
      %v2935 = vunpack.c.l.b16 %v1699
      %v2936 = vunpack.c.l.b16 %v1700
      %v2937 = vunpack.c.h.b16 %v1700
      %v2938 = vunpack.c.l.b16 %v1701
      %v2939 = vunpack.c.h.b16 %v1701
      %v2940 = vunpack.c.l.b16 %v1702
      %v2941 = vunpack.c.l.b16 %v1703
      %v2942 = vunpack.c.h.b16 %v1703
      %v2943 = vunpack.c.l.b16 %v1704
      %v2944 = vunpack.c.h.b16 %v1704
      %v2945 = vunpack.c.l.b16 %v1705
      %v2946 = vunpack.c.l.b16 %v1706
      %v2947 = vunpack.c.h.b16 %v1706
      %v2948 = vunpack.c.l.b16 %v1707
      %v2949 = vunpack.c.h.b16 %v1707
      %v2950 = vunpack.c.l.b16 %v1708
      %v2951 = vunpack.c.l.b16 %v1709
      %v2952 = vunpack.c.h.b16 %v1709
      %v2953 = vunpack.c.l.b16 %v1710
      %v2954 = vunpack.c.h.b16 %v1710
      %v2955 = vunpack.c.l.b16 %v1711
      %v2956 = vunpack.c.l.b16 %v1712
      %v2957 = vunpack.c.h.b16 %v1712
      %v2958 = vunpack.c.l.b16 %v1713
      %v2959 = vunpack.c.h.b16 %v1713
      %v2960 = vunpack.c.l.b16 %v1714
      %v2961 = vunpack.c.l.b16 %v1715
      %v2962 = vunpack.c.h.b16 %v1715
      %v2963 = vunpack.c.l.b16 %v1716
      %v2964 = vunpack.c.h.b16 %v1716
      %v2965 = vunpack.c.l.b16 %v1717
      %v2966 = vunpack.c.l.b16 %v1718
      %v2967 = vunpack.c.h.b16 %v1718
      %v2968 = vunpack.c.l.b16 %v1719
      %v2969 = vunpack.c.h.b16 %v1719
      %v2970 = vunpack.c.l.b16 %v1720
      %v2971 = vunpack.c.l.b16 %v1721
      %v2972 = vunpack.c.h.b16 %v1721
      %v2973 = vunpack.c.l.b16 %v1722
      %v2974 = vunpack.c.h.b16 %v1722
      %v2975 = vunpack.c.l.b16 %v1723
      %v2976 = vunpack.c.l.b16 %v1724
      %v2977 = vunpack.c.h.b16 %v1724
      %v2978 = vunpack.c.l.b16 %v1725
      %v2979 = vunpack.c.h.b16 %v1725
      %v2980 = vunpack.c.l.b16 %v1726
      %v2981 = vunpack.c.l.b16 %v1727
      %v2982 = vunpack.c.h.b16 %v1727
      %v2983 = vunpack.c.l.b16 %v1728
      %v2984 = vunpack.c.h.b16 %v1728
      %v2985 = vunpack.c.l.b16 %v1729
      %v2986 = vunpack.c.l.b16 %v1730
      %v2987 = vunpack.c.h.b16 %v1730
      %v2988 = vunpack.c.l.b16 %v1731
      %v2989 = vunpack.c.h.b16 %v1731
      %v2990 = vunpack.c.l.b16 %v1732
      %v2991 = vunpack.c.l.b16 %v1733
      %v2992 = vunpack.c.h.b16 %v1733
      %v2993 = vunpack.c.l.b16 %v1734
      %v2994 = vunpack.c.h.b16 %v1734
      %v2995 = vunpack.c.l.b16 %v1735
      %v2996 = vunpack.c.l.b16 %v1736
      %v2997 = vunpack.c.h.b16 %v1736
      %v2998 = vunpack.c.l.b16 %v1737
      %v2999 = vunpack.c.h.b16 %v1737
      %v3000 = vunpack.c.l.b16 %v1738
      %v3001 = vunpack.c.l.b16 %v1739
      %v3002 = vunpack.c.h.b16 %v1739
      %v3003 = vunpack.c.l.b16 %v1740
      %v3004 = vunpack.c.h.b16 %v1740
      %v3005 = vunpack.c.l.b16 %v1741
      %v3006 = vunpack.c.l.b16 %v1742
      %v3007 = vunpack.c.h.b16 %v1742
      %v3008 = vunpack.c.l.b16 %v1743
      %v3009 = vunpack.c.h.b16 %v1743
      %v3010 = vunpack.c.l.b16 %v1744
      %v3011 = vunpack.c.l.b16 %v1745
      %v3012 = vunpack.c.h.b16 %v1745
      %v3013 = vunpack.c.l.b16 %v1746
      %v3014 = vunpack.c.h.b16 %v1746
      %v3015 = vunpack.c.l.b16 %v1747
      %v3016 = vunpack.c.l.b16 %v1748
      %v3017 = vunpack.c.h.b16 %v1748
      %v3018 = vunpack.c.l.b16 %v1749
      %v3019 = vunpack.c.h.b16 %v1749
      %v3020 = vunpack.c.l.b16 %v1750
      %v3021 = vunpack.c.l.b16 %v1751
      %v3022 = vunpack.c.h.b16 %v1751
      %v3023 = vunpack.c.l.b16 %v1752
      %v3024 = vunpack.c.h.b16 %v1752
      %v3025 = vunpack.c.l.b16 %v1753
      %v3026 = vunpack.c.l.b16 %v1754
      %v3027 = vunpack.c.h.b16 %v1754
      %v3028 = vunpack.c.l.b16 %v1755
      %v3029 = vunpack.c.h.b16 %v1755
      %v3030 = vunpack.c.l.b16 %v1756
      %v3031 = vunpack.c.l.b16 %v1757
      %v3032 = vunpack.c.h.b16 %v1757
      %v3033 = vunpack.c.l.b16 %v1758
      %v3034 = vunpack.c.h.b16 %v1758
      %v3035 = vunpack.c.l.b16 %v1759
      %v3036 = vunpack.c.l.b16 %v1760
      %v3037 = vunpack.c.h.b16 %v1760
      %v3038 = vunpack.c.l.b16 %v1761
      %v3039 = vunpack.c.h.b16 %v1761
      %v3040 = vunpack.c.l.b16 %v1762
      %v3041 = vunpack.c.l.b16 %v1763
      %v3042 = vunpack.c.h.b16 %v1763
      %v3043 = vunpack.c.l.b16 %v1764
      %v3044 = vunpack.c.h.b16 %v1764
      %v3045 = vunpack.c.l.b16 %v1765
      %v3046 = vunpack.c.l.b16 %v1766
      %v3047 = vunpack.c.h.b16 %v1766
      %v3048 = vunpack.c.l.b16 %v1767
      %v3049 = vunpack.c.h.b16 %v1767
      %v3050 = vunpack.c.l.b16 %v1768
      %v3051 = vunpack.c.l.b16 %v1769
      %v3052 = vunpack.c.h.b16 %v1769
      %v3053 = vunpack.c.l.b16 %v1770
      %v3054 = vunpack.c.h.b16 %v1770
      %v3055 = vunpack.c.l.b16 %v1771
      %v3056 = vunpack.c.l.b16 %v1772
      %v3057 = vunpack.c.h.b16 %v1772
      %v3058 = vunpack.c.l.b16 %v1773
      %v3059 = vunpack.c.h.b16 %v1773
      %v3060 = vunpack.c.l.b16 %v1774
      %v3061 = vunpack.c.l.b16 %v1775
      %v3062 = vunpack.c.h.b16 %v1775
      %v3063 = vunpack.c.l.b16 %v1776
      %v3064 = vunpack.c.h.b16 %v1776
      %v3065 = vunpack.c.l.b16 %v1777
      %v3066 = vunpack.c.l.b16 %v1778
      %v3067 = vunpack.c.h.b16 %v1778
      %v3068 = vunpack.c.l.b16 %v1779
      %v3069 = vunpack.c.h.b16 %v1779
      %v3070 = vunpack.c.l.b16 %v1780
      %v3071 = vunpack.c.l.b16 %v1781
      %v3072 = vunpack.c.h.b16 %v1781
      %v3073 = vunpack.c.l.b16 %v1782
      %v3074 = vunpack.c.h.b16 %v1782
      %v3075 = vunpack.c.l.b16 %v1783
      %v3076 = vunpack.c.l.b16 %v1784
      %v3077 = vunpack.c.h.b16 %v1784
      %v3078 = vunpack.c.l.b16 %v1785
      %v3079 = vunpack.c.h.b16 %v1785
      %v3080 = vunpack.c.l.b16 %v1786
      %v3081 = vunpack.c.l.b16 %v1787
      %v3082 = vunpack.c.h.b16 %v1787
      %v3083 = vunpack.c.l.b16 %v1788
      %v3084 = vunpack.c.h.b16 %v1788
      %v3085 = vunpack.c.l.b16 %v1789
      %v3086 = vunpack.c.l.b16 %v1790
      %v3087 = vunpack.c.h.b16 %v1790
      %v3088 = vunpack.c.l.b16 %v1791
      %v3089 = vunpack.c.h.b16 %v1791
      %v3090 = vunpack.c.l.b16 %v1792
      %v3091 = vunpack.c.l.b16 %v1793
      %v3092 = vunpack.c.h.b16 %v1793
      %v3093 = vunpack.c.l.b16 %v1794
      %v3094 = vunpack.c.h.b16 %v1794
      %v3095 = vunpack.c.l.b16 %v1795
      %v3096 = vunpack.c.l.b16 %v1796
      %v3097 = vunpack.c.h.b16 %v1796
      %v3098 = vunpack.c.l.b16 %v1797
      %v3099 = vunpack.c.h.b16 %v1797
      %v3100 = vunpack.c.l.b16 %v1798
      %v3101 = vunpack.c.l.b16 %v1799
      %v3102 = vunpack.c.h.b16 %v1799
      %v3103 = vunpack.c.l.b16 %v1800
      %v3104 = vunpack.c.h.b16 %v1800
      %v3105 = vunpack.c.l.b16 %v1801
      %v3106 = vunpack.c.l.b16 %v1802
      %v3107 = vunpack.c.h.b16 %v1802
      %v3108 = vunpack.c.l.b16 %v1803
      %v3109 = vunpack.c.h.b16 %v1803
      %v3110 = vunpack.c.l.b16 %v1804
      %v3111 = vunpack.c.l.b16 %v1805
      %v3112 = vunpack.c.h.b16 %v1805
      %v3113 = vunpack.c.l.b16 %v1806
      %v3114 = vunpack.c.h.b16 %v1806
      %v3115 = vunpack.c.l.b16 %v1807
      %v3116 = vunpack.c.l.b16 %v1808
      %v3117 = vunpack.c.h.b16 %v1808
      %v3118 = vunpack.c.l.b16 %v1809
      %v3119 = vunpack.c.h.b16 %v1809
      %v3120 = vunpack.c.l.b16 %v1810
      %v3121 = vunpack.c.l.b16 %v1811
      %v3122 = vunpack.c.h.b16 %v1811
      %v3123 = vunpack.c.l.b16 %v1812
      %v3124 = vunpack.c.h.b16 %v1812
      %v3125 = vunpack.c.l.b16 %v1813
      %v3126 = vunpack.c.l.b16 %v1814
      %v3127 = vunpack.c.h.b16 %v1814
      %v3128 = vunpack.c.l.b16 %v1815
      %v3129 = vunpack.c.h.b16 %v1815
      %v3130 = vunpack.c.l.b16 %v1816
      %v3131 = vunpack.c.l.b16 %v1817
      %v3132 = vunpack.c.h.b16 %v1817
      %v3133 = vunpack.c.l.b16 %v1818
      %v3134 = vunpack.c.h.b16 %v1818
      %v3135 = vunpack.c.l.b16 %v1819
      %v3136 = vunpack.c.l.b16 %v1820
      %v3137 = vunpack.c.h.b16 %v1820
      %v3138 = vunpack.c.l.b16 %v1821
      %v3139 = vunpack.c.h.b16 %v1821
      %v3140 = vunpack.c.l.b16 %v1822
      %v3141 = vunpack.c.l.b16 %v1823
      %v3142 = vunpack.c.h.b16 %v1823
      %v3143 = vunpack.c.l.b16 %v1824
      %v3144 = vunpack.c.h.b16 %v1824
      %v3145 = vunpack.c.l.b16 %v1825
      %v3146 = vunpack.c.l.b16 %v1826
      %v3147 = vunpack.c.h.b16 %v1826
      %v3148 = vunpack.c.l.b16 %v1827
      %v3149 = vunpack.c.h.b16 %v1827
      %v3150 = vunpack.c.l.b16 %v1828
      %v3151 = vunpack.c.l.b16 %v1829
      %v3152 = vunpack.c.h.b16 %v1829
      %v3153 = vunpack.c.l.b16 %v1830
      %v3154 = vunpack.c.h.b16 %v1830
      %v3155 = vunpack.c.l.b16 %v1831
      %v3156 = vunpack.c.l.b16 %v1832
      %v3157 = vunpack.c.h.b16 %v1832
      %v3158 = vunpack.c.l.b16 %v1833
      %v3159 = vunpack.c.h.b16 %v1833
      %v3160 = vunpack.c.l.b16 %v1834
      %v3161 = vunpack.c.l.b16 %v1835
      %v3162 = vunpack.c.h.b16 %v1835
      %v3163 = vunpack.c.l.b16 %v1836
      %v3164 = vunpack.c.h.b16 %v1836
      %v3165 = vunpack.c.l.b16 %v1837
      %v3166 = vunpack.c.l.b16 %v1838
      %v3167 = vunpack.c.h.b16 %v1838
      %v3168 = vunpack.c.l.b16 %v1839
      %v3169 = vunpack.c.h.b16 %v1839
      %v3170 = vunpack.c.l.b16 %v1840
      %v3171 = vunpack.c.l.b16 %v1841
      %v3172 = vunpack.c.h.b16 %v1841
      %v3173 = vunpack.c.l.b16 %v1842
      %v3174 = vunpack.c.h.b16 %v1842
      %v3175 = vunpack.c.l.b16 %v1843
      %v3176 = vunpack.c.l.b16 %v1844
      %v3177 = vunpack.c.h.b16 %v1844
      %v3178 = vunpack.c.l.b16 %v1845
      %v3179 = vunpack.c.h.b16 %v1845
      %v3180 = vunpack.c.l.b16 %v1846
      %v3181 = vunpack.c.l.b16 %v1847
      %v3182 = vunpack.c.h.b16 %v1847
      %v3183 = vunpack.c.l.b16 %v1848
      %v3184 = vunpack.c.h.b16 %v1848
      %v3185 = vunpack.c.l.b16 %v1849
      %v3186 = vunpack.c.l.b16 %v1850
      %v3187 = vunpack.c.h.b16 %v1850
      %v3188 = vunpack.c.l.b16 %v1851
      %v3189 = vunpack.c.h.b16 %v1851
      %v3190 = vunpack.c.l.b16 %v1852
      %v3191 = vunpack.c.l.b16 %v1853
      %v3192 = vunpack.c.h.b16 %v1853
      %v3193 = vunpack.c.l.b16 %v1854
      %v3194 = vunpack.c.h.b16 %v1854
      %v3195 = vunpack.c.l.b16 %v1855
      %v3196 = vunpack.c.l.b16 %v1856
      %v3197 = vunpack.c.h.b16 %v1856
      %v3198 = vunpack.c.l.b16 %v1857
      %v3199 = vunpack.c.h.b16 %v1857
      %v3200 = vunpack.c.l.b16 %v1858
      %v3201 = vunpack.c.l.b16 %v1859
      %v3202 = vunpack.c.h.b16 %v1859
      %v3203 = vunpack.c.l.b16 %v1860
      %v3204 = vunpack.c.h.b16 %v1860
      %v3205 = vunpack.c.l.b16 %v1861
      %v3206 = vunpack.c.l.b16 %v1862
      %v3207 = vunpack.c.h.b16 %v1862
      %v3208 = vunpack.c.l.b16 %v1863
      %v3209 = vunpack.c.h.b16 %v1863
      %v3210 = vunpack.c.l.b16 %v1864
      %v3211 = vunpack.c.l.b16 %v1865
      %v3212 = vunpack.c.h.b16 %v1865
      %v3213 = vunpack.c.l.b16 %v1866
      %v3214 = vunpack.c.h.b16 %v1866
      %v3215 = vunpack.c.l.b16 %v1867
      %v3216 = vunpack.c.l.b16 %v1868
      %v3217 = vunpack.c.h.b16 %v1868
      %v3218 = vunpack.c.l.b16 %v1869
      %v3219 = vunpack.c.h.b16 %v1869
      %v3220 = vunpack.c.l.b16 %v1870
      %v3221 = vunpack.c.l.b16 %v1871
      %v3222 = vunpack.c.h.b16 %v1871
      %v3223 = vunpack.c.l.b16 %v1872
      %v3224 = vunpack.c.h.b16 %v1872
      %v3225 = vunpack.c.l.b16 %v1873
      %v3226 = vunpack.c.l.b16 %v1874
      %v3227 = vunpack.c.h.b16 %v1874
      %v3228 = vunpack.c.l.b16 %v1875
      %v3229 = vunpack.c.h.b16 %v1875
      %v3230 = vunpack.c.l.b16 %v1876
      %v3231 = vunpack.c.l.b16 %v1877
      %v3232 = vunpack.c.h.b16 %v1877
      %v3233 = vunpack.c.l.b16 %v1878
      %v3234 = vunpack.c.h.b16 %v1878
      %v3235 = vunpack.c.l.b16 %v1879
      %v3236 = vunpack.c.l.b16 %v1880
      %v3237 = vunpack.c.h.b16 %v1880
      %v3238 = vunpack.c.l.b16 %v1881
      %v3239 = vunpack.c.h.b16 %v1881
      %v3240 = vunpack.c.l.b16 %v1882
      %v3241 = vunpack.c.l.b16 %v1883
      %v3242 = vunpack.c.h.b16 %v1883
      %v3243 = vunpack.c.l.b16 %v1884
      %v3244 = vunpack.c.h.b16 %v1884
      %v3245 = vunpack.c.l.b16 %v1885
      %v3246 = vunpack.c.l.b16 %v1886
      %v3247 = vunpack.c.h.b16 %v1886
      %v3248 = vunpack.c.l.b16 %v1887
      %v3249 = vunpack.c.h.b16 %v1887
      %v3250 = vunpack.c.l.b16 %v1888
      %v3251 = vunpack.c.l.b16 %v1889
      %v3252 = vunpack.c.h.b16 %v1889
      %v3253 = vunpack.c.l.b16 %v1890
      %v3254 = vunpack.c.h.b16 %v1890
      %v3255 = vunpack.c.l.b16 %v1891
      %v3256 = vunpack.c.l.b16 %v1892
      %v3257 = vunpack.c.h.b16 %v1892
      %v3258 = vunpack.c.l.b16 %v1893
      %v3259 = vunpack.c.h.b16 %v1893
      %v3260 = vunpack.c.l.b16 %v1894
      %v3261 = vunpack.c.l.b16 %v1895
      %v3262 = vunpack.c.h.b16 %v1895
      %v3263 = vunpack.c.l.b16 %v1896
      %v3264 = vunpack.c.h.b16 %v1896
      %v3265 = vunpack.c.l.b16 %v1897
      %v3266 = vunpack.c.l.b16 %v1898
      %v3267 = vunpack.c.h.b16 %v1898
      %v3268 = vunpack.c.l.b16 %v1899
      %v3269 = vunpack.c.h.b16 %v1899
      %v3270 = vunpack.c.l.b16 %v1900
      %v3271 = vunpack.c.l.b16 %v1901
      %v3272 = vunpack.c.h.b16 %v1901
      %v3273 = vunpack.c.l.b16 %v1902
      %v3274 = vunpack.c.h.b16 %v1902
      %v3275 = vunpack.c.l.b16 %v1903
      %v3276 = vunpack.c.l.b16 %v1904
      %v3277 = vunpack.c.h.b16 %v1904
      %v3278 = vunpack.c.l.b16 %v1905
      %v3279 = vunpack.c.h.b16 %v1905
      %v3280 = vunpack.c.l.b16 %v1906
      %v3281 = vunpack.c.l.b16 %v1907
      %v3282 = vunpack.c.h.b16 %v1907
      %v3283 = vunpack.c.l.b16 %v1908
      %v3284 = vunpack.c.h.b16 %v1908
      %v3285 = vunpack.c.l.b16 %v1909
      %v3286 = vunpack.c.l.b16 %v1910
      %v3287 = vunpack.c.h.b16 %v1910
      %v3288 = vunpack.c.l.b16 %v1911
      %v3289 = vunpack.c.h.b16 %v1911
      %v3290 = vunpack.c.l.b16 %v1912
      %v3291 = vunpack.c.l.b16 %v1913
      %v3292 = vunpack.c.h.b16 %v1913
      %v3293 = vunpack.c.l.b16 %v1914
      %v3294 = vunpack.c.h.b16 %v1914
      %v3295 = vunpack.c.l.b16 %v1915
      %v3296 = vunpack.c.l.b16 %v1916
      %v3297 = vunpack.c.h.b16 %v1916
      %v3298 = vunpack.c.l.b16 %v1917
      %v3299 = vunpack.c.h.b16 %v1917
      %v3300 = vunpack.c.l.b16 %v1918
      %v3301 = vunpack.c.l.b16 %v1919
      %v3302 = vunpack.c.h.b16 %v1919
      %v3303 = vunpack.c.l.b16 %v1920
      %v3304 = vunpack.c.h.b16 %v1920
      %v3305 = vunpack.c.l.b16 %v1921
      %v3306 = vunpack.c.l.b16 %v1922
      %v3307 = vunpack.c.h.b16 %v1922
      %v3308 = vunpack.c.l.b16 %v1923
      %v3309 = vunpack.c.h.b16 %v1923
      %v3310 = vunpack.c.l.b16 %v1924
      %v3311 = vunpack.c.l.b16 %v1925
      %v3312 = vunpack.c.h.b16 %v1925
      %v3313 = vunpack.c.l.b16 %v1926
      %v3314 = vunpack.c.h.b16 %v1926
      %v3315 = vunpack.c.l.b16 %v1927
      %v3316 = vunpack.c.l.b16 %v1928
      %v3317 = vunpack.c.h.b16 %v1928
      %v3318 = vunpack.c.l.b16 %v1929
      %v3319 = vunpack.c.h.b16 %v1929
      %v3320 = vunpack.c.l.b16 %v1930
      %v3321 = vunpack.c.l.b16 %v1931
      %v3322 = vunpack.c.h.b16 %v1931
      %v3323 = vunpack.c.l.b16 %v1932
      %v3324 = vunpack.c.h.b16 %v1932
      %v3325 = vunpack.c.l.b16 %v1933
      %v3326 = vunpack.c.l.b16 %v1934
      %v3327 = vunpack.c.h.b16 %v1934
      %v3328 = vunpack.c.l.b16 %v1935
      %v3329 = vunpack.c.h.b16 %v1935
      %v3330 = vunpack.c.l.b16 %v1936
      %v3331 = vunpack.c.l.b16 %v1937
      %v3332 = vunpack.c.h.b16 %v1937
      %v3333 = vunpack.c.l.b16 %v1938
      %v3334 = vunpack.c.h.b16 %v1938
      %v3335 = vunpack.c.l.b16 %v1939
      %v3336 = vunpack.c.l.b16 %v1940
      %v3337 = vunpack.c.h.b16 %v1940
      %v3338 = vunpack.c.l.b16 %v1941
      %v3339 = vunpack.c.h.b16 %v1941
      %v3340 = vunpack.c.l.b16 %v1942
      %v3341 = vunpack.c.l.b16 %v1943
      %v3342 = vunpack.c.h.b16 %v1943
      %v3343 = vunpack.c.l.b16 %v1944
      %v3344 = vunpack.c.h.b16 %v1944
      %v3345 = vunpack.c.l.b16 %v1945
      %v3346 = vunpack.c.l.b16 %v1946
      %v3347 = vunpack.c.h.b16 %v1946
      %v3348 = vunpack.c.l.b16 %v1947
      %v3349 = vunpack.c.h.b16 %v1947
      %v3350 = vunpack.c.l.b16 %v1948
      %v3351 = vunpack.c.l.b16 %v1949
      %v3352 = vunpack.c.h.b16 %v1949
      %v3353 = vunpack.c.l.b16 %v1950
      %v3354 = vunpack.c.h.b16 %v1950
      %v3355 = vunpack.c.l.b16 %v1951
      %v3356 = vunpack.c.l.b16 %v1952
      %v3357 = vunpack.c.h.b16 %v1952
      %v3358 = vunpack.c.l.b16 %v1953
      %v3359 = vunpack.c.h.b16 %v1953
      %v3360 = vunpack.c.l.b16 %v1954
      %v3361 = vunpack.c.l.b16 %v1955
      %v3362 = vunpack.c.h.b16 %v1955
      %v3363 = vunpack.c.l.b16 %v1956
      %v3364 = vunpack.c.h.b16 %v1956
      %v3365 = vunpack.c.l.b16 %v1957
      %v3366 = vunpack.c.l.b16 %v1958
      %v3367 = vunpack.c.h.b16 %v1958
      %v3368 = vunpack.c.l.b16 %v1959
      %v3369 = vunpack.c.h.b16 %v1959
      %v3370 = vunpack.c.l.b16 %v1960
      %v3371 = vunpack.c.l.b16 %v1961
      %v3372 = vunpack.c.h.b16 %v1961
      %v3373 = vunpack.c.l.b16 %v1962
      %v3374 = vunpack.c.h.b16 %v1962
      %v3375 = vunpack.c.l.b16 %v1963
      %v3376 = vunpack.c.l.b16 %v1964
      %v3377 = vunpack.c.h.b16 %v1964
      %v3378 = vunpack.c.l.b16 %v1965
      %v3379 = vunpack.c.h.b16 %v1965
      %v3380 = vunpack.c.l.b16 %v1966
      %v3381 = vunpack.c.l.b16 %v1967
      %v3382 = vunpack.c.h.b16 %v1967
      %v3383 = vunpack.c.l.b16 %v1968
      %v3384 = vunpack.c.h.b16 %v1968
      %v3385 = vunpack.c.l.b16 %v1969
      %v3386 = vunpack.c.l.b16 %v1970
      %v3387 = vunpack.c.h.b16 %v1970
      %v3388 = vunpack.c.l.b16 %v1971
      %v3389 = vunpack.c.h.b16 %v1971
      %v3390 = vunpack.c.l.b16 %v1972
      %v3391 = vunpack.c.l.b16 %v1973
      %v3392 = vunpack.c.h.b16 %v1973
      %v3393 = vunpack.c.l.b16 %v1974
      %v3394 = vunpack.c.h.b16 %v1974
      %v3395 = vunpack.c.l.b16 %v1975
      %v3396 = vunpack.c.l.b16 %v1976
      %v3397 = vunpack.c.h.b16 %v1976
      %v3398 = vunpack.c.l.b16 %v1977
      %v3399 = vunpack.c.h.b16 %v1977
      %v3400 = vunpack.c.l.b16 %v1978
      %v3401 = vunpack.c.l.b16 %v1979
      %v3402 = vunpack.c.h.b16 %v1979
      %v3403 = vunpack.c.l.b16 %v1980
      %v3404 = vunpack.c.h.b16 %v1980
      %v3405 = vunpack.c.l.b16 %v1981
      %v3406 = vunpack.c.l.b16 %v1982
      %v3407 = vunpack.c.h.b16 %v1982
      %v3408 = vunpack.c.l.b16 %v1983
      %v3409 = vunpack.c.h.b16 %v1983
      %v3410 = vunpack.c.l.b16 %v1984
      %v3411 = vunpack.c.l.b16 %v1985
      %v3412 = vunpack.c.h.b16 %v1985
      %v3413 = vunpack.c.l.b16 %v1986
      %v3414 = vunpack.c.h.b16 %v1986
      %v3415 = vunpack.c.l.b16 %v1987
      %v3416 = vunpack.c.l.b16 %v1988
      %v3417 = vunpack.c.h.b16 %v1988
      %v3418 = vunpack.c.l.b16 %v1989
      %v3419 = vunpack.c.h.b16 %v1989
      %v3420 = vunpack.c.l.b16 %v1990
      %v3421 = vunpack.c.l.b16 %v1991
      %v3422 = vunpack.c.h.b16 %v1991
      %v3423 = vunpack.c.l.b16 %v1992
      %v3424 = vunpack.c.h.b16 %v1992
      %v3425 = vunpack.c.l.b16 %v1993
      %v3426 = vunpack.c.l.b16 %v1994
      %v3427 = vunpack.c.h.b16 %v1994
      %v3428 = vunpack.c.l.b16 %v1995
      %v3429 = vunpack.c.h.b16 %v1995
      %v3430 = vunpack.c.l.b16 %v1996
      %v3431 = vunpack.c.l.b16 %v1997
      %v3432 = vunpack.c.h.b16 %v1997
      %v3433 = vunpack.c.l.b16 %v1998
      %v3434 = vunpack.c.h.b16 %v1998
      %v3435 = vunpack.c.l.b16 %v1999
      %v3436 = vunpack.c.l.b16 %v2000
      %v3437 = vunpack.c.h.b16 %v2000
      %v3438 = vunpack.c.l.b16 %v2001
      %v3439 = vunpack.c.h.b16 %v2001
      %v3440 = vunpack.c.l.b16 %v2002
      %v3441 = vunpack.c.l.b16 %v2003
      %v3442 = vunpack.c.h.b16 %v2003
      %v3443 = vunpack.c.l.b16 %v2004
      %v3444 = vunpack.c.h.b16 %v2004
      %v3445 = vunpack.c.l.b16 %v2005
      %v3446 = vunpack.c.l.b16 %v2006
      %v3447 = vunpack.c.h.b16 %v2006
      %v3448 = vunpack.c.l.b16 %v2007
      %v3449 = vunpack.c.h.b16 %v2007
      %v3450 = vunpack.c.l.b16 %v2008
      %v3451 = vunpack.c.l.b16 %v2009
      %v3452 = vunpack.c.h.b16 %v2009
      %v3453 = vunpack.c.l.b16 %v2010
      %v3454 = vunpack.c.h.b16 %v2010
      %v3455 = vunpack.c.l.b16 %v2011
      %v3456 = vunpack.c.l.b16 %v2012
      %v3457 = vunpack.c.h.b16 %v2012
      %v3458 = vunpack.c.l.b16 %v2013
      %v3459 = vunpack.c.h.b16 %v2013
      %v3460 = vunpack.c.l.b16 %v2014
      %v3461 = vunpack.c.l.b16 %v2015
      %v3462 = vunpack.c.h.b16 %v2015
      %v3463 = vunpack.c.l.b16 %v2016
      %v3464 = vunpack.c.h.b16 %v2016
      %v3465 = vunpack.c.l.b16 %v2017
      %v3466 = vunpack.c.l.b16 %v2018
      %v3467 = vunpack.c.h.b16 %v2018
      %v3468 = vunpack.c.l.b16 %v2019
      %v3469 = vunpack.c.h.b16 %v2019
      %v3470 = vunpack.c.l.b16 %v2020
      %v3471 = vunpack.c.l.b16 %v2021
      %v3472 = vunpack.c.h.b16 %v2021
      %v3473 = vunpack.c.l.b16 %v2022
      %v3474 = vunpack.c.h.b16 %v2022
      %v3475 = vunpack.c.l.b16 %v2023
      %v3476 = vunpack.c.l.b16 %v2024
      %v3477 = vunpack.c.h.b16 %v2024
      %v3478 = vunpack.c.l.b16 %v2025
      %v3479 = vunpack.c.h.b16 %v2025
      %v3480 = vunpack.c.l.b16 %v2026
      %v3481 = vunpack.c.l.b16 %v2027
      %v3482 = vunpack.c.h.b16 %v2027
      %v3483 = vunpack.c.l.b16 %v2028
      %v3484 = vunpack.c.h.b16 %v2028
      %v3485 = vunpack.c.l.b16 %v2029
      %v3486 = vunpack.c.l.b16 %v2030
      %v3487 = vunpack.c.h.b16 %v2030
      %v3488 = vunpack.c.l.b16 %v2031
      %v3489 = vunpack.c.h.b16 %v2031
      %v3490 = vunpack.c.l.b16 %v2032
      %v3491 = vunpack.c.l.b16 %v2033
      %v3492 = vunpack.c.h.b16 %v2033
      %v3493 = vunpack.c.l.b16 %v2034
      %v3494 = vunpack.c.h.b16 %v2034
      %v3495 = vunpack.c.l.b16 %v2035
      %v3496 = vunpack.c.l.b16 %v2036
      %v3497 = vunpack.c.h.b16 %v2036
      %v3498 = vunpack.c.l.b16 %v2037
      %v3499 = vunpack.c.h.b16 %v2037
      %v3500 = vunpack.c.l.b16 %v2038
      %v3501 = vunpack.c.l.b16 %v2039
      %v3502 = vunpack.c.h.b16 %v2039
      %v3503 = vunpack.c.l.b16 %v2040
      %v3504 = vunpack.c.h.b16 %v2040
      %v3505 = vunpack.c.l.b16 %v2041
      %v3506 = vunpack.c.l.b16 %v2042
      %v3507 = vunpack.c.h.b16 %v2042
      %v3508 = vunpack.c.l.b16 %v2043
      %v3509 = vunpack.c.h.b16 %v2043
      %v3510 = vunpack.c.l.b16 %v2044
      %v3511 = vunpack.c.l.b16 %v2045
      %v3512 = vunpack.c.h.b16 %v2045
      %v3513 = vunpack.c.l.b16 %v2046
      %v3514 = vunpack.c.h.b16 %v2046
      %v3515 = vunpack.c.l.b16 %v2047
      %v3516 = vunpack.c.l.b16 %v2048
      %v3517 = vunpack.c.h.b16 %v2048
      %v3518 = vunpack.c.l.b16 %v2049
      %v3519 = vunpack.c.h.b16 %v2049
      %v3520 = vunpack.c.l.b16 %v2050
      %v3521 = vunpack.c.l.b16 %v2051
      %v3522 = vunpack.c.h.b16 %v2051
      %v3523 = vunpack.c.l.b16 %v2052
      %v3524 = vunpack.c.h.b16 %v2052
      %v3525 = vunpack.c.l.b16 %v2053
      %v3526 = vunpack.c.l.b16 %v2054
      %v3527 = vunpack.c.h.b16 %v2054
      %v3528 = vunpack.c.l.b16 %v2055
      %v3529 = vunpack.c.h.b16 %v2055
      %v3530 = vunpack.c.l.b16 %v2056
      %v3531 = vunpack.c.l.b16 %v2057
      %v3532 = vunpack.c.h.b16 %v2057
      %v3533 = vunpack.c.l.b16 %v2058
      %v3534 = vunpack.c.h.b16 %v2058
      %v3535 = vunpack.c.l.b16 %v2059
      %v3536 = vunpack.c.l.b16 %v2060
      %v3537 = vunpack.c.h.b16 %v2060
      %v3538 = vunpack.c.l.b16 %v2061
      %v3539 = vunpack.c.h.b16 %v2061
      %v3540 = vunpack.c.l.b16 %v2062
      %v3541 = vunpack.c.l.b16 %v2063
      %v3542 = vunpack.c.h.b16 %v2063
      %v3543 = vunpack.c.l.b16 %v2064
      %v3544 = vunpack.c.h.b16 %v2064
      %v3545 = vunpack.c.l.b16 %v2065
      %v3546 = vunpack.c.l.b16 %v2066
      %v3547 = vunpack.c.h.b16 %v2066
      %v3548 = vunpack.c.l.b16 %v2067
      %v3549 = vunpack.c.h.b16 %v2067
      %v3550 = vunpack.c.l.b16 %v2068
      %v3551 = vunpack.c.l.b16 %v2069
      %v3552 = vunpack.c.h.b16 %v2069
      %v3553 = vunpack.c.l.b16 %v2070
      %v3554 = vunpack.c.h.b16 %v2070
      %v3555 = vunpack.c.l.b16 %v2071
      %v3556 = vunpack.c.l.b16 %v2072
      %v3557 = vunpack.c.h.b16 %v2072
      %v3558 = vunpack.c.l.b16 %v2073
      %v3559 = vunpack.c.h.b16 %v2073
      %v3560 = vunpack.c.l.b16 %v2074
      %v3561 = vunpack.c.l.b16 %v2075
      %v3562 = vunpack.c.h.b16 %v2075
      %v3563 = vunpack.c.l.b16 %v2076
      %v3564 = vunpack.c.h.b16 %v2076
      %v3565 = vunpack.c.l.b16 %v2077
      %v3566 = vunpack.c.l.b16 %v2078
      %v3567 = vunpack.c.h.b16 %v2078
      %v3568 = vunpack.c.l.b16 %v2079
      %v3569 = vunpack.c.h.b16 %v2079
      %v3570 = vunpack.c.l.b16 %v2080
      %v3571 = vunpack.c.l.b16 %v2081
      %v3572 = vunpack.c.h.b16 %v2081
      %v3573 = vunpack.c.l.b16 %v2082
      %v3574 = vunpack.c.h.b16 %v2082
      %v3575 = vunpack.c.l.b16 %v2083
      %v3576 = vunpack.c.l.b16 %v2084
      %v3577 = vunpack.c.h.b16 %v2084
      %v3578 = vunpack.c.l.b16 %v2085
      %v3579 = vunpack.c.h.b16 %v2085
      %v3580 = vunpack.c.l.b16 %v2086
      %v3581 = vunpack.c.l.b16 %v2087
      %v3582 = vunpack.c.h.b16 %v2087
      %v3583 = vunpack.c.l.b16 %v2088
      %v3584 = vunpack.c.h.b16 %v2088
      %v3585 = vunpack.c.l.b16 %v2089
      %v3586 = vunpack.c.l.b16 %v2090
      %v3587 = vunpack.c.h.b16 %v2090
      %v3588 = vunpack.c.l.b16 %v2091
      %v3589 = vunpack.c.h.b16 %v2091
      %v3590 = vunpack.c.l.b16 %v2092
      %v3591 = vunpack.c.l.b16 %v2093
      %v3592 = vunpack.c.h.b16 %v2093
      %v3593 = vunpack.c.l.b16 %v2094
      %v3594 = vunpack.c.h.b16 %v2094
      %v3595 = vunpack.c.l.b16 %v2095
      %v3596 = vunpack.c.l.b16 %v2096
      %v3597 = vunpack.c.h.b16 %v2096
      %v3598 = vunpack.c.l.b16 %v2097
      %v3599 = vunpack.c.h.b16 %v2097
      %v3600 = vunpack.c.l.b16 %v2098
      %v3601 = vunpack.c.l.b16 %v2099
      %v3602 = vunpack.c.h.b16 %v2099
      %v3603 = vunpack.c.l.b16 %v2100
      %v3604 = vunpack.c.h.b16 %v2100
      %v3605 = vunpack.c.l.b16 %v2101
      %v3606 = vunpack.c.l.b16 %v2102
      %v3607 = vunpack.c.h.b16 %v2102
      %v3608 = vunpack.c.l.b16 %v2103
      %v3609 = vunpack.c.h.b16 %v2103
      %v3610 = vunpack.c.l.b16 %v2104
      %v3611 = vunpack.c.l.b16 %v2105
      %v3612 = vunpack.c.h.b16 %v2105
      %v3613 = vunpack.c.l.b16 %v2106
      %v3614 = vunpack.c.h.b16 %v2106
      %v3615 = vunpack.c.l.b16 %v2107
      %v3616 = vunpack.c.l.b16 %v2108
      %v3617 = vunpack.c.h.b16 %v2108
      %v3618 = vunpack.c.l.b16 %v2109
      %v3619 = vunpack.c.h.b16 %v2109
      %v3620 = vunpack.c.l.b16 %v2110
      %v3621 = vunpack.c.l.b16 %v2111
      %v3622 = vunpack.c.h.b16 %v2111
      %v3623 = vunpack.c.l.b16 %v2112
      %v3624 = vunpack.c.h.b16 %v2112
      %v3625 = vunpack.c.l.b16 %v2113
      %v3626 = vunpack.c.l.b16 %v2114
      %v3627 = vunpack.c.h.b16 %v2114
      %v3628 = vunpack.c.l.b16 %v2115
      %v3629 = vunpack.c.h.b16 %v2115
      %v3630 = vunpack.c.l.b16 %v2116
      %v3631 = vunpack.c.l.b16 %v2117
      %v3632 = vunpack.c.h.b16 %v2117
      %v3633 = vunpack.c.l.b16 %v2118
      %v3634 = vunpack.c.h.b16 %v2118
      %v3635 = vunpack.c.l.b16 %v2119
      %v3636 = vunpack.c.l.b16 %v2120
      %v3637 = vunpack.c.h.b16 %v2120
      %v3638 = vunpack.c.l.b16 %v2121
      %v3639 = vunpack.c.h.b16 %v2121
      %v3640 = vunpack.c.l.b16 %v2122
      %v3641 = vunpack.c.l.b16 %v2123
      %v3642 = vunpack.c.h.b16 %v2123
      %v3643 = vunpack.c.l.b16 %v2124
      %v3644 = vunpack.c.h.b16 %v2124
      %v3645 = vunpack.c.l.b16 %v2125
      %v3646 = vunpack.c.l.b16 %v2126
      %v3647 = vunpack.c.h.b16 %v2126
      %v3648 = vunpack.c.l.b16 %v2127
      %v3649 = vunpack.c.h.b16 %v2127
      %v3650 = vunpack.c.l.b16 %v2128
      %v3651 = vunpack.c.l.b16 %v2129
      %v3652 = vunpack.c.h.b16 %v2129
      %v3653 = vunpack.c.l.b16 %v2130
      %v3654 = vunpack.c.h.b16 %v2130
      %v3655 = vunpack.c.l.b16 %v2131
      %v3656 = vunpack.c.l.b16 %v2132
      %v3657 = vunpack.c.h.b16 %v2132
      %v3658 = vunpack.c.l.b16 %v2133
      %v3659 = vunpack.c.h.b16 %v2133
      %v3660 = vunpack.c.l.b16 %v2134
      %v3661 = vunpack.c.l.b16 %v2135
      %v3662 = vunpack.c.h.b16 %v2135
      %v3663 = vunpack.c.l.b16 %v2136
      %v3664 = vunpack.c.h.b16 %v2136
      %v3665 = vunpack.c.l.b16 %v2137
      %v3666 = vunpack.c.l.b16 %v2138
      %v3667 = vunpack.c.h.b16 %v2138
      %v3668 = vunpack.c.l.b16 %v2139
      %v3669 = vunpack.c.h.b16 %v2139
      %v3670 = vunpack.c.l.b16 %v2140
      %v3671 = vunpack.c.l.b16 %v2141
      %v3672 = vunpack.c.h.b16 %v2141
      %v3673 = vunpack.c.l.b16 %v2142
      %v3674 = vunpack.c.h.b16 %v2142
      %v3675 = vunpack.c.l.b16 %v2143
      %v3676 = vunpack.c.l.b16 %v2144
      %v3677 = vunpack.c.h.b16 %v2144
      %v3678 = vunpack.c.l.b16 %v2145
      %v3679 = vunpack.c.h.b16 %v2145
      %v3680 = vunpack.c.l.b16 %v2146
      %v3681 = vunpack.c.l.b16 %v2147
      %v3682 = vunpack.c.h.b16 %v2147
      %v3683 = vunpack.c.l.b16 %v2148
      %v3684 = vunpack.c.h.b16 %v2148
      %v3685 = vunpack.c.l.b16 %v2149
      %v3686 = vpack.c.b16 %v2731, %v2726
      %v3687 = vpack.c.b16 %v2732, %v2727
      %v3688 = vpack.c.b16 %v2733, %v2728
      %v3689 = vpack.c.b16 %v2734, %v2729
      %v3690 = vpack.c.b16 %v2735, %v2730
      %v3691 = vpack.c.b16 %v2741, %v2736
      %v3692 = vpack.c.b16 %v2742, %v2737
      %v3693 = vpack.c.b16 %v2743, %v2738
      %v3694 = vpack.c.b16 %v2744, %v2739
      %v3695 = vpack.c.b16 %v2745, %v2740
      %v3696 = vpack.c.b16 %v2751, %v2746
      %v3697 = vpack.c.b16 %v2752, %v2747
      %v3698 = vpack.c.b16 %v2753, %v2748
      %v3699 = vpack.c.b16 %v2754, %v2749
      %v3700 = vpack.c.b16 %v2755, %v2750
      %v3701 = vpack.c.b16 %v2761, %v2756
      %v3702 = vpack.c.b16 %v2762, %v2757
      %v3703 = vpack.c.b16 %v2763, %v2758
      %v3704 = vpack.c.b16 %v2764, %v2759
      %v3705 = vpack.c.b16 %v2765, %v2760
      %v3706 = vpack.c.b16 %v2771, %v2766
      %v3707 = vpack.c.b16 %v2772, %v2767
      %v3708 = vpack.c.b16 %v2773, %v2768
      %v3709 = vpack.c.b16 %v2774, %v2769
      %v3710 = vpack.c.b16 %v2775, %v2770
      %v3711 = vpack.c.b16 %v2781, %v2776
      %v3712 = vpack.c.b16 %v2782, %v2777
      %v3713 = vpack.c.b16 %v2783, %v2778
      %v3714 = vpack.c.b16 %v2784, %v2779
      %v3715 = vpack.c.b16 %v2785, %v2780
      %v3716 = vpack.c.b16 %v2791, %v2786
      %v3717 = vpack.c.b16 %v2792, %v2787
      %v3718 = vpack.c.b16 %v2793, %v2788
      %v3719 = vpack.c.b16 %v2794, %v2789
      %v3720 = vpack.c.b16 %v2795, %v2790
      %v3721 = vpack.c.b16 %v2801, %v2796
      %v3722 = vpack.c.b16 %v2802, %v2797
      %v3723 = vpack.c.b16 %v2803, %v2798
      %v3724 = vpack.c.b16 %v2804, %v2799
      %v3725 = vpack.c.b16 %v2805, %v2800
      %v3726 = vpack.c.b16 %v2811, %v2806
      %v3727 = vpack.c.b16 %v2812, %v2807
      %v3728 = vpack.c.b16 %v2813, %v2808
      %v3729 = vpack.c.b16 %v2814, %v2809
      %v3730 = vpack.c.b16 %v2815, %v2810
      %v3731 = vpack.c.b16 %v2821, %v2816
      %v3732 = vpack.c.b16 %v2822, %v2817
      %v3733 = vpack.c.b16 %v2823, %v2818
      %v3734 = vpack.c.b16 %v2824, %v2819
      %v3735 = vpack.c.b16 %v2825, %v2820
      %v3736 = vpack.c.b16 %v2831, %v2826
      %v3737 = vpack.c.b16 %v2832, %v2827
      %v3738 = vpack.c.b16 %v2833, %v2828
      %v3739 = vpack.c.b16 %v2834, %v2829
      %v3740 = vpack.c.b16 %v2835, %v2830
      %v3741 = vpack.c.b16 %v2841, %v2836
      %v3742 = vpack.c.b16 %v2842, %v2837
      %v3743 = vpack.c.b16 %v2843, %v2838
      %v3744 = vpack.c.b16 %v2844, %v2839
      %v3745 = vpack.c.b16 %v2845, %v2840
      %v3746 = vpack.c.b16 %v2851, %v2846
      %v3747 = vpack.c.b16 %v2852, %v2847
      %v3748 = vpack.c.b16 %v2853, %v2848
      %v3749 = vpack.c.b16 %v2854, %v2849
      %v3750 = vpack.c.b16 %v2855, %v2850
      %v3751 = vpack.c.b16 %v2861, %v2856
      %v3752 = vpack.c.b16 %v2862, %v2857
      %v3753 = vpack.c.b16 %v2863, %v2858
      %v3754 = vpack.c.b16 %v2864, %v2859
      %v3755 = vpack.c.b16 %v2865, %v2860
      %v3756 = vpack.c.b16 %v2871, %v2866
      %v3757 = vpack.c.b16 %v2872, %v2867
      %v3758 = vpack.c.b16 %v2873, %v2868
      %v3759 = vpack.c.b16 %v2874, %v2869
      %v3760 = vpack.c.b16 %v2875, %v2870
      %v3761 = vpack.c.b16 %v2881, %v2876
      %v3762 = vpack.c.b16 %v2882, %v2877
      %v3763 = vpack.c.b16 %v2883, %v2878
      %v3764 = vpack.c.b16 %v2884, %v2879
      %v3765 = vpack.c.b16 %v2885, %v2880
      %v3766 = vpack.c.b16 %v2891, %v2886
      %v3767 = vpack.c.b16 %v2892, %v2887
      %v3768 = vpack.c.b16 %v2893, %v2888
      %v3769 = vpack.c.b16 %v2894, %v2889
      %v3770 = vpack.c.b16 %v2895, %v2890
      %v3771 = vpack.c.b16 %v2901, %v2896
      %v3772 = vpack.c.b16 %v2902, %v2897
      %v3773 = vpack.c.b16 %v2903, %v2898
      %v3774 = vpack.c.b16 %v2904, %v2899
      %v3775 = vpack.c.b16 %v2905, %v2900
      %v3776 = vpack.c.b16 %v2911, %v2906
      %v3777 = vpack.c.b16 %v2912, %v2907
      %v3778 = vpack.c.b16 %v2913, %v2908
      %v3779 = vpack.c.b16 %v2914, %v2909
      %v3780 = vpack.c.b16 %v2915, %v2910
      %v3781 = vpack.c.b16 %v2921, %v2916
      %v3782 = vpack.c.b16 %v2922, %v2917
      %v3783 = vpack.c.b16 %v2923, %v2918
      %v3784 = vpack.c.b16 %v2924, %v2919
      %v3785 = vpack.c.b16 %v2925, %v2920
      %v3786 = vpack.c.b16 %v2931, %v2926
      %v3787 = vpack.c.b16 %v2932, %v2927
      %v3788 = vpack.c.b16 %v2933, %v2928
      %v3789 = vpack.c.b16 %v2934, %v2929
      %v3790 = vpack.c.b16 %v2935, %v2930
      %v3791 = vpack.c.b16 %v2941, %v2936
      %v3792 = vpack.c.b16 %v2942, %v2937
      %v3793 = vpack.c.b16 %v2943, %v2938
      %v3794 = vpack.c.b16 %v2944, %v2939
      %v3795 = vpack.c.b16 %v2945, %v2940
      %v3796 = vpack.c.b16 %v2951, %v2946
      %v3797 = vpack.c.b16 %v2952, %v2947
      %v3798 = vpack.c.b16 %v2953, %v2948
      %v3799 = vpack.c.b16 %v2954, %v2949
      %v3800 = vpack.c.b16 %v2955, %v2950
      %v3801 = vpack.c.b16 %v2961, %v2956
      %v3802 = vpack.c.b16 %v2962, %v2957
      %v3803 = vpack.c.b16 %v2963, %v2958
      %v3804 = vpack.c.b16 %v2964, %v2959
      %v3805 = vpack.c.b16 %v2965, %v2960
      %v3806 = vpack.c.b16 %v2971, %v2966
      %v3807 = vpack.c.b16 %v2972, %v2967
      %v3808 = vpack.c.b16 %v2973, %v2968
      %v3809 = vpack.c.b16 %v2974, %v2969
      %v3810 = vpack.c.b16 %v2975, %v2970
      %v3811 = vpack.c.b16 %v2981, %v2976
      %v3812 = vpack.c.b16 %v2982, %v2977
      %v3813 = vpack.c.b16 %v2983, %v2978
      %v3814 = vpack.c.b16 %v2984, %v2979
      %v3815 = vpack.c.b16 %v2985, %v2980
      %v3816 = vpack.c.b16 %v2991, %v2986
      %v3817 = vpack.c.b16 %v2992, %v2987
      %v3818 = vpack.c.b16 %v2993, %v2988
      %v3819 = vpack.c.b16 %v2994, %v2989
      %v3820 = vpack.c.b16 %v2995, %v2990
      %v3821 = vpack.c.b16 %v3001, %v2996
      %v3822 = vpack.c.b16 %v3002, %v2997
      %v3823 = vpack.c.b16 %v3003, %v2998
      %v3824 = vpack.c.b16 %v3004, %v2999
      %v3825 = vpack.c.b16 %v3005, %v3000
      %v3826 = vpack.c.b16 %v3011, %v3006
      %v3827 = vpack.c.b16 %v3012, %v3007
      %v3828 = vpack.c.b16 %v3013, %v3008
      %v3829 = vpack.c.b16 %v3014, %v3009
      %v3830 = vpack.c.b16 %v3015, %v3010
      %v3831 = vpack.c.b16 %v3021, %v3016
      %v3832 = vpack.c.b16 %v3022, %v3017
      %v3833 = vpack.c.b16 %v3023, %v3018
      %v3834 = vpack.c.b16 %v3024, %v3019
      %v3835 = vpack.c.b16 %v3025, %v3020
      %v3836 = vpack.c.b16 %v3031, %v3026
      %v3837 = vpack.c.b16 %v3032, %v3027
      %v3838 = vpack.c.b16 %v3033, %v3028
      %v3839 = vpack.c.b16 %v3034, %v3029
      %v3840 = vpack.c.b16 %v3035, %v3030
      %v3841 = vpack.c.b16 %v3041, %v3036
      %v3842 = vpack.c.b16 %v3042, %v3037
      %v3843 = vpack.c.b16 %v3043, %v3038
      %v3844 = vpack.c.b16 %v3044, %v3039
      %v3845 = vpack.c.b16 %v3045, %v3040
      %v3846 = vpack.c.b16 %v3051, %v3046
      %v3847 = vpack.c.b16 %v3052, %v3047
      %v3848 = vpack.c.b16 %v3053, %v3048
      %v3849 = vpack.c.b16 %v3054, %v3049
      %v3850 = vpack.c.b16 %v3055, %v3050
      %v3851 = vpack.c.b16 %v3061, %v3056
      %v3852 = vpack.c.b16 %v3062, %v3057
      %v3853 = vpack.c.b16 %v3063, %v3058
      %v3854 = vpack.c.b16 %v3064, %v3059
      %v3855 = vpack.c.b16 %v3065, %v3060
      %v3856 = vpack.c.b16 %v3071, %v3066
      %v3857 = vpack.c.b16 %v3072, %v3067
      %v3858 = vpack.c.b16 %v3073, %v3068
      %v3859 = vpack.c.b16 %v3074, %v3069
      %v3860 = vpack.c.b16 %v3075, %v3070
      %v3861 = vpack.c.b16 %v3081, %v3076
      %v3862 = vpack.c.b16 %v3082, %v3077
      %v3863 = vpack.c.b16 %v3083, %v3078
      %v3864 = vpack.c.b16 %v3084, %v3079
      %v3865 = vpack.c.b16 %v3085, %v3080
      %v3866 = vpack.c.b16 %v3091, %v3086
      %v3867 = vpack.c.b16 %v3092, %v3087
      %v3868 = vpack.c.b16 %v3093, %v3088
      %v3869 = vpack.c.b16 %v3094, %v3089
      %v3870 = vpack.c.b16 %v3095, %v3090
      %v3871 = vpack.c.b16 %v3101, %v3096
      %v3872 = vpack.c.b16 %v3102, %v3097
      %v3873 = vpack.c.b16 %v3103, %v3098
      %v3874 = vpack.c.b16 %v3104, %v3099
      %v3875 = vpack.c.b16 %v3105, %v3100
      %v3876 = vpack.c.b16 %v3111, %v3106
      %v3877 = vpack.c.b16 %v3112, %v3107
      %v3878 = vpack.c.b16 %v3113, %v3108
      %v3879 = vpack.c.b16 %v3114, %v3109
      %v3880 = vpack.c.b16 %v3115, %v3110
      %v3881 = vpack.c.b16 %v3121, %v3116
      %v3882 = vpack.c.b16 %v3122, %v3117
      %v3883 = vpack.c.b16 %v3123, %v3118
      %v3884 = vpack.c.b16 %v3124, %v3119
      %v3885 = vpack.c.b16 %v3125, %v3120
      %v3886 = vpack.c.b16 %v3131, %v3126
      %v3887 = vpack.c.b16 %v3132, %v3127
      %v3888 = vpack.c.b16 %v3133, %v3128
      %v3889 = vpack.c.b16 %v3134, %v3129
      %v3890 = vpack.c.b16 %v3135, %v3130
      %v3891 = vpack.c.b16 %v3141, %v3136
      %v3892 = vpack.c.b16 %v3142, %v3137
      %v3893 = vpack.c.b16 %v3143, %v3138
      %v3894 = vpack.c.b16 %v3144, %v3139
      %v3895 = vpack.c.b16 %v3145, %v3140
      %v3896 = vpack.c.b16 %v3151, %v3146
      %v3897 = vpack.c.b16 %v3152, %v3147
      %v3898 = vpack.c.b16 %v3153, %v3148
      %v3899 = vpack.c.b16 %v3154, %v3149
      %v3900 = vpack.c.b16 %v3155, %v3150
      %v3901 = vpack.c.b16 %v3161, %v3156
      %v3902 = vpack.c.b16 %v3162, %v3157
      %v3903 = vpack.c.b16 %v3163, %v3158
      %v3904 = vpack.c.b16 %v3164, %v3159
      %v3905 = vpack.c.b16 %v3165, %v3160
      %v3906 = vpack.c.b16 %v3171, %v3166
      %v3907 = vpack.c.b16 %v3172, %v3167
      %v3908 = vpack.c.b16 %v3173, %v3168
      %v3909 = vpack.c.b16 %v3174, %v3169
      %v3910 = vpack.c.b16 %v3175, %v3170
      %v3911 = vpack.c.b16 %v3181, %v3176
      %v3912 = vpack.c.b16 %v3182, %v3177
      %v3913 = vpack.c.b16 %v3183, %v3178
      %v3914 = vpack.c.b16 %v3184, %v3179
      %v3915 = vpack.c.b16 %v3185, %v3180
      %v3916 = vpack.c.b16 %v3191, %v3186
      %v3917 = vpack.c.b16 %v3192, %v3187
      %v3918 = vpack.c.b16 %v3193, %v3188
      %v3919 = vpack.c.b16 %v3194, %v3189
      %v3920 = vpack.c.b16 %v3195, %v3190
      %v3921 = vpack.c.b16 %v3201, %v3196
      %v3922 = vpack.c.b16 %v3202, %v3197
      %v3923 = vpack.c.b16 %v3203, %v3198
      %v3924 = vpack.c.b16 %v3204, %v3199
      %v3925 = vpack.c.b16 %v3205, %v3200
      %v3926 = vpack.c.b16 %v3211, %v3206
      %v3927 = vpack.c.b16 %v3212, %v3207
      %v3928 = vpack.c.b16 %v3213, %v3208
      %v3929 = vpack.c.b16 %v3214, %v3209
      %v3930 = vpack.c.b16 %v3215, %v3210
      %v3931 = vpack.c.b16 %v3221, %v3216
      %v3932 = vpack.c.b16 %v3222, %v3217
      %v3933 = vpack.c.b16 %v3223, %v3218
      %v3934 = vpack.c.b16 %v3224, %v3219
      %v3935 = vpack.c.b16 %v3225, %v3220
      %v3936 = vpack.c.b16 %v3231, %v3226
      %v3937 = vpack.c.b16 %v3232, %v3227
      %v3938 = vpack.c.b16 %v3233, %v3228
      %v3939 = vpack.c.b16 %v3234, %v3229
      %v3940 = vpack.c.b16 %v3235, %v3230
      %v3941 = vpack.c.b16 %v3241, %v3236
      %v3942 = vpack.c.b16 %v3242, %v3237
      %v3943 = vpack.c.b16 %v3243, %v3238
      %v3944 = vpack.c.b16 %v3244, %v3239
      %v3945 = vpack.c.b16 %v3245, %v3240
      %v3946 = vpack.c.b16 %v3251, %v3246
      %v3947 = vpack.c.b16 %v3252, %v3247
      %v3948 = vpack.c.b16 %v3253, %v3248
      %v3949 = vpack.c.b16 %v3254, %v3249
      %v3950 = vpack.c.b16 %v3255, %v3250
      %v3951 = vpack.c.b16 %v3261, %v3256
      %v3952 = vpack.c.b16 %v3262, %v3257
      %v3953 = vpack.c.b16 %v3263, %v3258
      %v3954 = vpack.c.b16 %v3264, %v3259
      %v3955 = vpack.c.b16 %v3265, %v3260
      %v3956 = vpack.c.b16 %v3271, %v3266
      %v3957 = vpack.c.b16 %v3272, %v3267
      %v3958 = vpack.c.b16 %v3273, %v3268
      %v3959 = vpack.c.b16 %v3274, %v3269
      %v3960 = vpack.c.b16 %v3275, %v3270
      %v3961 = vpack.c.b16 %v3281, %v3276
      %v3962 = vpack.c.b16 %v3282, %v3277
      %v3963 = vpack.c.b16 %v3283, %v3278
      %v3964 = vpack.c.b16 %v3284, %v3279
      %v3965 = vpack.c.b16 %v3285, %v3280
      %v3966 = vpack.c.b16 %v3291, %v3286
      %v3967 = vpack.c.b16 %v3292, %v3287
      %v3968 = vpack.c.b16 %v3293, %v3288
      %v3969 = vpack.c.b16 %v3294, %v3289
      %v3970 = vpack.c.b16 %v3295, %v3290
      %v3971 = vpack.c.b16 %v3301, %v3296
      %v3972 = vpack.c.b16 %v3302, %v3297
      %v3973 = vpack.c.b16 %v3303, %v3298
      %v3974 = vpack.c.b16 %v3304, %v3299
      %v3975 = vpack.c.b16 %v3305, %v3300
      %v3976 = vpack.c.b16 %v3311, %v3306
      %v3977 = vpack.c.b16 %v3312, %v3307
      %v3978 = vpack.c.b16 %v3313, %v3308
      %v3979 = vpack.c.b16 %v3314, %v3309
      %v3980 = vpack.c.b16 %v3315, %v3310
      %v3981 = vpack.c.b16 %v3321, %v3316
      %v3982 = vpack.c.b16 %v3322, %v3317
      %v3983 = vpack.c.b16 %v3323, %v3318
      %v3984 = vpack.c.b16 %v3324, %v3319
      %v3985 = vpack.c.b16 %v3325, %v3320
      %v3986 = vpack.c.b16 %v3331, %v3326
      %v3987 = vpack.c.b16 %v3332, %v3327
      %v3988 = vpack.c.b16 %v3333, %v3328
      %v3989 = vpack.c.b16 %v3334, %v3329
      %v3990 = vpack.c.b16 %v3335, %v3330
      %v3991 = vpack.c.b16 %v3341, %v3336
      %v3992 = vpack.c.b16 %v3342, %v3337
      %v3993 = vpack.c.b16 %v3343, %v3338
      %v3994 = vpack.c.b16 %v3344, %v3339
      %v3995 = vpack.c.b16 %v3345, %v3340
      %v3996 = vpack.c.b16 %v3351, %v3346
      %v3997 = vpack.c.b16 %v3352, %v3347
      %v3998 = vpack.c.b16 %v3353, %v3348
      %v3999 = vpack.c.b16 %v3354, %v3349
      %v4000 = vpack.c.b16 %v3355, %v3350
      %v4001 = vpack.c.b16 %v3361, %v3356
      %v4002 = vpack.c.b16 %v3362, %v3357
      %v4003 = vpack.c.b16 %v3363, %v3358
      %v4004 = vpack.c.b16 %v3364, %v3359
      %v4005 = vpack.c.b16 %v3365, %v3360
      %v4006 = vpack.c.b16 %v3371, %v3366
      %v4007 = vpack.c.b16 %v3372, %v3367
      %v4008 = vpack.c.b16 %v3373, %v3368
      %v4009 = vpack.c.b16 %v3374, %v3369
      %v4010 = vpack.c.b16 %v3375, %v3370
      %v4011 = vpack.c.b16 %v3381, %v3376
      %v4012 = vpack.c.b16 %v3382, %v3377
      %v4013 = vpack.c.b16 %v3383, %v3378
      %v4014 = vpack.c.b16 %v3384, %v3379
      %v4015 = vpack.c.b16 %v3385, %v3380
      %v4016 = vpack.c.b16 %v3391, %v3386
      %v4017 = vpack.c.b16 %v3392, %v3387
      %v4018 = vpack.c.b16 %v3393, %v3388
      %v4019 = vpack.c.b16 %v3394, %v3389
      %v4020 = vpack.c.b16 %v3395, %v3390
      %v4021 = vpack.c.b16 %v3401, %v3396
      %v4022 = vpack.c.b16 %v3402, %v3397
      %v4023 = vpack.c.b16 %v3403, %v3398
      %v4024 = vpack.c.b16 %v3404, %v3399
      %v4025 = vpack.c.b16 %v3405, %v3400
      %v4026 = vpack.c.b16 %v3411, %v3406
      %v4027 = vpack.c.b16 %v3412, %v3407
      %v4028 = vpack.c.b16 %v3413, %v3408
      %v4029 = vpack.c.b16 %v3414, %v3409
      %v4030 = vpack.c.b16 %v3415, %v3410
      %v4031 = vpack.c.b16 %v3421, %v3416
      %v4032 = vpack.c.b16 %v3422, %v3417
      %v4033 = vpack.c.b16 %v3423, %v3418
      %v4034 = vpack.c.b16 %v3424, %v3419
      %v4035 = vpack.c.b16 %v3425, %v3420
      %v4036 = vpack.c.b16 %v3431, %v3426
      %v4037 = vpack.c.b16 %v3432, %v3427
      %v4038 = vpack.c.b16 %v3433, %v3428
      %v4039 = vpack.c.b16 %v3434, %v3429
      %v4040 = vpack.c.b16 %v3435, %v3430
      %v4041 = vpack.c.b16 %v3441, %v3436
      %v4042 = vpack.c.b16 %v3442, %v3437
      %v4043 = vpack.c.b16 %v3443, %v3438
      %v4044 = vpack.c.b16 %v3444, %v3439
      %v4045 = vpack.c.b16 %v3445, %v3440
      %v4046 = vpack.c.b16 %v3451, %v3446
      %v4047 = vpack.c.b16 %v3452, %v3447
      %v4048 = vpack.c.b16 %v3453, %v3448
      %v4049 = vpack.c.b16 %v3454, %v3449
      %v4050 = vpack.c.b16 %v3455, %v3450
      %v4051 = vpack.c.b16 %v3461, %v3456
      %v4052 = vpack.c.b16 %v3462, %v3457
      %v4053 = vpack.c.b16 %v3463, %v3458
      %v4054 = vpack.c.b16 %v3464, %v3459
      %v4055 = vpack.c.b16 %v3465, %v3460
      %v4056 = vpack.c.b16 %v3471, %v3466
      %v4057 = vpack.c.b16 %v3472, %v3467
      %v4058 = vpack.c.b16 %v3473, %v3468
      %v4059 = vpack.c.b16 %v3474, %v3469
      %v4060 = vpack.c.b16 %v3475, %v3470
      %v4061 = vpack.c.b16 %v3481, %v3476
      %v4062 = vpack.c.b16 %v3482, %v3477
      %v4063 = vpack.c.b16 %v3483, %v3478
      %v4064 = vpack.c.b16 %v3484, %v3479
      %v4065 = vpack.c.b16 %v3485, %v3480
      %v4066 = vpack.c.b16 %v3491, %v3486
      %v4067 = vpack.c.b16 %v3492, %v3487
      %v4068 = vpack.c.b16 %v3493, %v3488
      %v4069 = vpack.c.b16 %v3494, %v3489
      %v4070 = vpack.c.b16 %v3495, %v3490
      %v4071 = vpack.c.b16 %v3501, %v3496
      %v4072 = vpack.c.b16 %v3502, %v3497
      %v4073 = vpack.c.b16 %v3503, %v3498
      %v4074 = vpack.c.b16 %v3504, %v3499
      %v4075 = vpack.c.b16 %v3505, %v3500
      %v4076 = vpack.c.b16 %v3511, %v3506
      %v4077 = vpack.c.b16 %v3512, %v3507
      %v4078 = vpack.c.b16 %v3513, %v3508
      %v4079 = vpack.c.b16 %v3514, %v3509
      %v4080 = vpack.c.b16 %v3515, %v3510
      %v4081 = vpack.c.b16 %v3521, %v3516
      %v4082 = vpack.c.b16 %v3522, %v3517
      %v4083 = vpack.c.b16 %v3523, %v3518
      %v4084 = vpack.c.b16 %v3524, %v3519
      %v4085 = vpack.c.b16 %v3525, %v3520
      %v4086 = vpack.c.b16 %v3531, %v3526
      %v4087 = vpack.c.b16 %v3532, %v3527
      %v4088 = vpack.c.b16 %v3533, %v3528
      %v4089 = vpack.c.b16 %v3534, %v3529
      %v4090 = vpack.c.b16 %v3535, %v3530
      %v4091 = vpack.c.b16 %v3541, %v3536
      %v4092 = vpack.c.b16 %v3542, %v3537
      %v4093 = vpack.c.b16 %v3543, %v3538
      %v4094 = vpack.c.b16 %v3544, %v3539
      %v4095 = vpack.c.b16 %v3545, %v3540
      %v4096 = vpack.c.b16 %v3551, %v3546
      %v4097 = vpack.c.b16 %v3552, %v3547
      %v4098 = vpack.c.b16 %v3553, %v3548
      %v4099 = vpack.c.b16 %v3554, %v3549
      %v4100 = vpack.c.b16 %v3555, %v3550
      %v4101 = vpack.c.b16 %v3561, %v3556
      %v4102 = vpack.c.b16 %v3562, %v3557
      %v4103 = vpack.c.b16 %v3563, %v3558
      %v4104 = vpack.c.b16 %v3564, %v3559
      %v4105 = vpack.c.b16 %v3565, %v3560
      %v4106 = vpack.c.b16 %v3571, %v3566
      %v4107 = vpack.c.b16 %v3572, %v3567
      %v4108 = vpack.c.b16 %v3573, %v3568
      %v4109 = vpack.c.b16 %v3574, %v3569
      %v4110 = vpack.c.b16 %v3575, %v3570
      %v4111 = vpack.c.b16 %v3581, %v3576
      %v4112 = vpack.c.b16 %v3582, %v3577
      %v4113 = vpack.c.b16 %v3583, %v3578
      %v4114 = vpack.c.b16 %v3584, %v3579
      %v4115 = vpack.c.b16 %v3585, %v3580
      %v4116 = vpack.c.b16 %v3591, %v3586
      %v4117 = vpack.c.b16 %v3592, %v3587
      %v4118 = vpack.c.b16 %v3593, %v3588
      %v4119 = vpack.c.b16 %v3594, %v3589
      %v4120 = vpack.c.b16 %v3595, %v3590
      %v4121 = vpack.c.b16 %v3601, %v3596
      %v4122 = vpack.c.b16 %v3602, %v3597
      %v4123 = vpack.c.b16 %v3603, %v3598
      %v4124 = vpack.c.b16 %v3604, %v3599
      %v4125 = vpack.c.b16 %v3605, %v3600
      %v4126 = vpack.c.b16 %v3611, %v3606
      %v4127 = vpack.c.b16 %v3612, %v3607
      %v4128 = vpack.c.b16 %v3613, %v3608
      %v4129 = vpack.c.b16 %v3614, %v3609
      %v4130 = vpack.c.b16 %v3615, %v3610
      %v4131 = vpack.c.b16 %v3621, %v3616
      %v4132 = vpack.c.b16 %v3622, %v3617
      %v4133 = vpack.c.b16 %v3623, %v3618
      %v4134 = vpack.c.b16 %v3624, %v3619
      %v4135 = vpack.c.b16 %v3625, %v3620
      %v4136 = vpack.c.b16 %v3631, %v3626
      %v4137 = vpack.c.b16 %v3632, %v3627
      %v4138 = vpack.c.b16 %v3633, %v3628
      %v4139 = vpack.c.b16 %v3634, %v3629
      %v4140 = vpack.c.b16 %v3635, %v3630
      %v4141 = vpack.c.b16 %v3641, %v3636
      %v4142 = vpack.c.b16 %v3642, %v3637
      %v4143 = vpack.c.b16 %v3643, %v3638
      %v4144 = vpack.c.b16 %v3644, %v3639
      %v4145 = vpack.c.b16 %v3645, %v3640
      %v4146 = vpack.c.b16 %v3651, %v3646
      %v4147 = vpack.c.b16 %v3652, %v3647
      %v4148 = vpack.c.b16 %v3653, %v3648
      %v4149 = vpack.c.b16 %v3654, %v3649
      %v4150 = vpack.c.b16 %v3655, %v3650
      %v4151 = vpack.c.b16 %v3661, %v3656
      %v4152 = vpack.c.b16 %v3662, %v3657
      %v4153 = vpack.c.b16 %v3663, %v3658
      %v4154 = vpack.c.b16 %v3664, %v3659
      %v4155 = vpack.c.b16 %v3665, %v3660
      %v4156 = vpack.c.b16 %v3671, %v3666
      %v4157 = vpack.c.b16 %v3672, %v3667
      %v4158 = vpack.c.b16 %v3673, %v3668
      %v4159 = vpack.c.b16 %v3674, %v3669
      %v4160 = vpack.c.b16 %v3675, %v3670
      %v4161 = vpack.c.b16 %v3681, %v3676
      %v4162 = vpack.c.b16 %v3682, %v3677
      %v4163 = vpack.c.b16 %v3683, %v3678
      %v4164 = vpack.c.b16 %v3684, %v3679
      %v4165 = vpack.c.b16 %v3685, %v3680
      %4646 = vmatprep.subr.bf16.mxu0 %v3687
      %4647 = vmatpush1.bf16.msra.mxu0 %v3686
      %4648 = vmatprep.subr.bf16.mxu0 %v3692
      %4649 = vmatpush1.bf16.msra.mxu0 %v3691
      %4650 = vmatprep.subr.bf16.mxu0 %v3697
      %4651 = vmatpush1.bf16.msra.mxu0 %v3696
      %4652 = vmatprep.subr.bf16.mxu0 %v3702
      %4653 = vmatpush1.bf16.msra.mxu0 %v3701
      %4654 = vmatprep.subr.bf16.mxu0 %v3707
      %4655 = vmatpush1.bf16.msra.mxu0 %v3706
      %4656 = vmatprep.subr.bf16.mxu0 %v3712
      %4657 = vmatpush1.bf16.msra.mxu0 %v3711
      %4658 = vmatprep.subr.bf16.mxu0 %v3717
      %4659 = vmatpush1.bf16.msra.mxu0 %v3716
      %4660 = vmatprep.subr.bf16.mxu0 %v3722
      %4661 = vmatpush1.bf16.msra.mxu0 %v3721
      %4662 = vmatprep.subr.bf16.mxu0 %v3727
      %4663 = vmatpush1.bf16.msra.mxu0 %v3726
      %4664 = vmatprep.subr.bf16.mxu0 %v3732
      %4665 = vmatpush1.bf16.msra.mxu0 %v3731
      %4666 = vmatprep.subr.bf16.mxu0 %v3737
      %4667 = vmatpush1.bf16.msra.mxu0 %v3736
      %4668 = vmatprep.subr.bf16.mxu0 %v3742
      %4669 = vmatpush1.bf16.msra.mxu0 %v3741
      %4670 = vmatprep.subr.bf16.mxu0 %v3747
      %4671 = vmatpush1.bf16.msra.mxu0 %v3746
      %4672 = vmatprep.subr.bf16.mxu0 %v3752
      %4673 = vmatpush1.bf16.msra.mxu0 %v3751
      %4674 = vmatprep.subr.bf16.mxu0 %v3757
      %4675 = vmatpush1.bf16.msra.mxu0 %v3756
      %4676 = vmatprep.subr.bf16.mxu0 %v3762
      %4677 = vmatpush1.bf16.msra.mxu0 %v3761
      %4678 = vmatprep.mubr.bf16.mxu0 %v1558
      %4679 = vmatmul.mubr.bf16.gmra.mrb[0].mxu0 %v1557
      %v4680 = vpop.f32.mrb[0].mxu0
      %v4681 = vadd.f32 0.0, %v4680
      %v4682 = vpop.f32.mrb[0].mxu0
      %v4683 = vadd.f32 0.0, %v4682
      %v4684 = vpop.f32.mrb[0].mxu0
      %v4685 = vpop.f32.mrb[0].mxu0
      %4686 = vdwg.mxu0
      %4687 = vmatprep.subr.bf16.mxu0 %v3767
      %4688 = vmatpush1.bf16.msra.mxu0 %v3766
      %4689 = vmatprep.subr.bf16.mxu0 %v3772
      %4690 = vmatpush1.bf16.msra.mxu0 %v3771
      %4691 = vmatprep.subr.bf16.mxu0 %v3777
      %4692 = vmatpush1.bf16.msra.mxu0 %v3776
      %4693 = vmatprep.subr.bf16.mxu0 %v3782
      %4694 = vmatpush1.bf16.msra.mxu0 %v3781
      %4695 = vmatprep.subr.bf16.mxu0 %v3787
      %4696 = vmatpush1.bf16.msra.mxu0 %v3786
      %4697 = vmatprep.subr.bf16.mxu0 %v3792
      %4698 = vmatpush1.bf16.msra.mxu0 %v3791
      %4699 = vmatprep.subr.bf16.mxu0 %v3797
      %4700 = vmatpush1.bf16.msra.mxu0 %v3796
      %4701 = vmatprep.subr.bf16.mxu0 %v3802
      %4702 = vmatpush1.bf16.msra.mxu0 %v3801
      %4703 = vmatprep.subr.bf16.mxu0 %v3807
      %4704 = vmatpush1.bf16.msra.mxu0 %v3806
      %4705 = vmatprep.subr.bf16.mxu0 %v3812
      %4706 = vmatpush1.bf16.msra.mxu0 %v3811
      %4707 = vmatprep.subr.bf16.mxu0 %v3817
      %4708 = vmatpush1.bf16.msra.mxu0 %v3816
      %4709 = vmatprep.subr.bf16.mxu0 %v3822
      %4710 = vmatpush1.bf16.msra.mxu0 %v3821
      %4711 = vmatprep.subr.bf16.mxu0 %v3827
      %4712 = vmatpush1.bf16.msra.mxu0 %v3826
      %4713 = vmatprep.subr.bf16.mxu0 %v3832
      %4714 = vmatpush1.bf16.msra.mxu0 %v3831
      %4715 = vmatprep.subr.bf16.mxu0 %v3837
      %4716 = vmatpush1.bf16.msra.mxu0 %v3836
      %4717 = vmatprep.subr.bf16.mxu0 %v3842
      %4718 = vmatpush1.bf16.msra.mxu0 %v3841
      %4719 = vmatprep.mubr.bf16.mxu0 %v1560
      %4720 = vmatmul.mubr.bf16.gmra.mrb[0].mxu0 %v1559
      %v4721 = vpop.f32.mrb[0].mxu0
      %v4722 = vadd.f32 %v4681, %v4721
      %v4723 = vpop.f32.mrb[0].mxu0
      %v4724 = vadd.f32 %v4683, %v4723
      %v4725 = vpop.f32.mrb[0].mxu0
      %v4726 = vpop.f32.mrb[0].mxu0
      %4727 = vdwg.mxu0
      %4728 = vmatprep.subr.bf16.mxu0 %v3847
      %4729 = vmatpush1.bf16.msra.mxu0 %v3846
      %4730 = vmatprep.subr.bf16.mxu0 %v3852
      %4731 = vmatpush1.bf16.msra.mxu0 %v3851
      %4732 = vmatprep.subr.bf16.mxu0 %v3857
      %4733 = vmatpush1.bf16.msra.mxu0 %v3856
      %4734 = vmatprep.subr.bf16.mxu0 %v3862
      %4735 = vmatpush1.bf16.msra.mxu0 %v3861
      %4736 = vmatprep.subr.bf16.mxu0 %v3867
      %4737 = vmatpush1.bf16.msra.mxu0 %v3866
      %4738 = vmatprep.subr.bf16.mxu0 %v3872
      %4739 = vmatpush1.bf16.msra.mxu0 %v3871
      %4740 = vmatprep.subr.bf16.mxu0 %v3877
      %4741 = vmatpush1.bf16.msra.mxu0 %v3876
      %4742 = vmatprep.subr.bf16.mxu0 %v3882
      %4743 = vmatpush1.bf16.msra.mxu0 %v3881
      %4744 = vmatprep.subr.bf16.mxu0 %v3887
      %4745 = vmatpush1.bf16.msra.mxu0 %v3886
      %4746 = vmatprep.subr.bf16.mxu0 %v3892
      %4747 = vmatpush1.bf16.msra.mxu0 %v3891
      %4748 = vmatprep.subr.bf16.mxu0 %v3897
      %4749 = vmatpush1.bf16.msra.mxu0 %v3896
      %4750 = vmatprep.subr.bf16.mxu0 %v3902
      %4751 = vmatpush1.bf16.msra.mxu0 %v3901
      %4752 = vmatprep.subr.bf16.mxu0 %v3907
      %4753 = vmatpush1.bf16.msra.mxu0 %v3906
      %4754 = vmatprep.subr.bf16.mxu0 %v3912
      %4755 = vmatpush1.bf16.msra.mxu0 %v3911
      %4756 = vmatprep.subr.bf16.mxu0 %v3917
      %4757 = vmatpush1.bf16.msra.mxu0 %v3916
      %4758 = vmatprep.subr.bf16.mxu0 %v3922
      %4759 = vmatpush1.bf16.msra.mxu0 %v3921
      %4760 = vmatprep.mubr.bf16.mxu0 %v1562
      %4761 = vmatmul.mubr.bf16.gmra.mrb[0].mxu0 %v1561
      %v4762 = vpop.f32.mrb[0].mxu0
      %v4763 = vadd.f32 %v4722, %v4762
      %v4764 = vpop.f32.mrb[0].mxu0
      %v4765 = vadd.f32 %v4724, %v4764
      %v4766 = vpop.f32.mrb[0].mxu0
      %v4767 = vpop.f32.mrb[0].mxu0
      %4768 = vdwg.mxu0
      %4769 = vmatprep.subr.bf16.mxu0 %v3927
      %4770 = vmatpush1.bf16.msra.mxu0 %v3926
      %4771 = vmatprep.subr.bf16.mxu0 %v3932
      %4772 = vmatpush1.bf16.msra.mxu0 %v3931
      %4773 = vmatprep.subr.bf16.mxu0 %v3937
      %4774 = vmatpush1.bf16.msra.mxu0 %v3936
      %4775 = vmatprep.subr.bf16.mxu0 %v3942
      %4776 = vmatpush1.bf16.msra.mxu0 %v3941
      %4777 = vmatprep.subr.bf16.mxu0 %v3947
      %4778 = vmatpush1.bf16.msra.mxu0 %v3946
      %4779 = vmatprep.subr.bf16.mxu0 %v3952
      %4780 = vmatpush1.bf16.msra.mxu0 %v3951
      %4781 = vmatprep.subr.bf16.mxu0 %v3957
      %4782 = vmatpush1.bf16.msra.mxu0 %v3956
      %4783 = vmatprep.subr.bf16.mxu0 %v3962
      %4784 = vmatpush1.bf16.msra.mxu0 %v3961
      %4785 = vmatprep.subr.bf16.mxu0 %v3967
      %4786 = vmatpush1.bf16.msra.mxu0 %v3966
      %4787 = vmatprep.subr.bf16.mxu0 %v3972
      %4788 = vmatpush1.bf16.msra.mxu0 %v3971
      %4789 = vmatprep.subr.bf16.mxu0 %v3977
      %4790 = vmatpush1.bf16.msra.mxu0 %v3976
      %4791 = vmatprep.subr.bf16.mxu0 %v3982
      %4792 = vmatpush1.bf16.msra.mxu0 %v3981
      %4793 = vmatprep.subr.bf16.mxu0 %v3987
      %4794 = vmatpush1.bf16.msra.mxu0 %v3986
      %4795 = vmatprep.subr.bf16.mxu0 %v3992
      %4796 = vmatpush1.bf16.msra.mxu0 %v3991
      %4797 = vmatprep.subr.bf16.mxu0 %v3997
      %4798 = vmatpush1.bf16.msra.mxu0 %v3996
      %4799 = vmatprep.subr.bf16.mxu0 %v4002
      %4800 = vmatpush1.bf16.msra.mxu0 %v4001
      %4801 = vmatprep.mubr.bf16.mxu0 %v1564
      %4802 = vmatmul.mubr.bf16.gmra.mrb[0].mxu0 %v1563
      %v4803 = vpop.f32.mrb[0].mxu0
      %v4804 = vadd.f32 %v4763, %v4803
      %v4805 = vpop.f32.mrb[0].mxu0
      %v4806 = vadd.f32 %v4765, %v4805
      %v4807 = vpop.f32.mrb[0].mxu0
      %v4808 = vpop.f32.mrb[0].mxu0
      %4809 = vdwg.mxu0
      %4810 = vmatprep.subr.bf16.mxu0 %v4007
      %4811 = vmatpush1.bf16.msra.mxu0 %v4006
      %4812 = vmatprep.subr.bf16.mxu0 %v4012
      %4813 = vmatpush1.bf16.msra.mxu0 %v4011
      %4814 = vmatprep.subr.bf16.mxu0 %v4017
      %4815 = vmatpush1.bf16.msra.mxu0 %v4016
      %4816 = vmatprep.subr.bf16.mxu0 %v4022
      %4817 = vmatpush1.bf16.msra.mxu0 %v4021
      %4818 = vmatprep.subr.bf16.mxu0 %v4027
      %4819 = vmatpush1.bf16.msra.mxu0 %v4026
      %4820 = vmatprep.subr.bf16.mxu0 %v4032
      %4821 = vmatpush1.bf16.msra.mxu0 %v4031
      %4822 = vmatprep.subr.bf16.mxu0 %v4037
      %4823 = vmatpush1.bf16.msra.mxu0 %v4036
      %4824 = vmatprep.subr.bf16.mxu0 %v4042
      %4825 = vmatpush1.bf16.msra.mxu0 %v4041
      %4826 = vmatprep.subr.bf16.mxu0 %v4047
      %4827 = vmatpush1.bf16.msra.mxu0 %v4046
      %4828 = vmatprep.subr.bf16.mxu0 %v4052
      %4829 = vmatpush1.bf16.msra.mxu0 %v4051
      %4830 = vmatprep.subr.bf16.mxu0 %v4057
      %4831 = vmatpush1.bf16.msra.mxu0 %v4056
      %4832 = vmatprep.subr.bf16.mxu0 %v4062
      %4833 = vmatpush1.bf16.msra.mxu0 %v4061
      %4834 = vmatprep.subr.bf16.mxu0 %v4067
      %4835 = vmatpush1.bf16.msra.mxu0 %v4066
      %4836 = vmatprep.subr.bf16.mxu0 %v4072
      %4837 = vmatpush1.bf16.msra.mxu0 %v4071
      %4838 = vmatprep.subr.bf16.mxu0 %v4077
      %4839 = vmatpush1.bf16.msra.mxu0 %v4076
      %4840 = vmatprep.subr.bf16.mxu0 %v4082
      %4841 = vmatpush1.bf16.msra.mxu0 %v4081
      %4842 = vmatprep.mubr.bf16.mxu0 %v1566
      %4843 = vmatmul.mubr.bf16.gmra.mrb[0].mxu0 %v1565
      %v4844 = vpop.f32.mrb[0].mxu0
      %v4845 = vadd.f32 %v4804, %v4844
      %v4846 = vpop.f32.mrb[0].mxu0
      %v4847 = vadd.f32 %v4806, %v4846
      %v4848 = vpop.f32.mrb[0].mxu0
      %v4849 = vpop.f32.mrb[0].mxu0
      %4850 = vdwg.mxu0
      %4851 = vmatprep.subr.bf16.mxu0 %v4087
      %4852 = vmatpush1.bf16.msra.mxu0 %v4086
      %4853 = vmatprep.subr.bf16.mxu0 %v4092
      %4854 = vmatpush1.bf16.msra.mxu0 %v4091
      %4855 = vmatprep.subr.bf16.mxu0 %v4097
      %4856 = vmatpush1.bf16.msra.mxu0 %v4096
      %4857 = vmatprep.subr.bf16.mxu0 %v4102
      %4858 = vmatpush1.bf16.msra.mxu0 %v4101
      %4859 = vmatprep.subr.bf16.mxu0 %v4107
      %4860 = vmatpush1.bf16.msra.mxu0 %v4106
      %4861 = vmatprep.subr.bf16.mxu0 %v4112
      %4862 = vmatpush1.bf16.msra.mxu0 %v4111
      %4863 = vmatprep.subr.bf16.mxu0 %v4117
      %4864 = vmatpush1.bf16.msra.mxu0 %v4116
      %4865 = vmatprep.subr.bf16.mxu0 %v4122
      %4866 = vmatpush1.bf16.msra.mxu0 %v4121
      %4867 = vmatprep.subr.bf16.mxu0 %v4127
      %4868 = vmatpush1.bf16.msra.mxu0 %v4126
      %4869 = vmatprep.subr.bf16.mxu0 %v4132
      %4870 = vmatpush1.bf16.msra.mxu0 %v4131
      %4871 = vmatprep.subr.bf16.mxu0 %v4137
      %4872 = vmatpush1.bf16.msra.mxu0 %v4136
      %4873 = vmatprep.subr.bf16.mxu0 %v4142
      %4874 = vmatpush1.bf16.msra.mxu0 %v4141
      %4875 = vmatprep.subr.bf16.mxu0 %v4147
      %4876 = vmatpush1.bf16.msra.mxu0 %v4146
      %4877 = vmatprep.subr.bf16.mxu0 %v4152
      %4878 = vmatpush1.bf16.msra.mxu0 %v4151
      %4879 = vmatprep.subr.bf16.mxu0 %v4157
      %4880 = vmatpush1.bf16.msra.mxu0 %v4156
      %4881 = vmatprep.subr.bf16.mxu0 %v4162
      %4882 = vmatpush1.bf16.msra.mxu0 %v4161
      %4883 = vmatprep.mubr.bf16.mxu0 %v1568
      %4884 = vmatmul.mubr.bf16.gmra.mrb[0].mxu0 %v1567
      %v4885 = vpop.f32.mrb[0].mxu0
      %v4886 = vadd.f32 %v4845, %v4885
      %v4887 = vpop.f32.mrb[0].mxu0
      %v4888 = vadd.f32 %v4847, %v4887
      %v4889 = vpop.f32.mrb[0].mxu0
      %v4890 = vpop.f32.mrb[0].mxu0
      %4891 = vdwg.mxu0
      %4892 = vmatprep.subr.bf16.mxu0 %v3689
      %4893 = vmatpush1.bf16.msra.mxu0 %v3688
      %4894 = vmatprep.subr.bf16.mxu0 %v3694
      %4895 = vmatpush1.bf16.msra.mxu0 %v3693
      %4896 = vmatprep.subr.bf16.mxu0 %v3699
      %4897 = vmatpush1.bf16.msra.mxu0 %v3698
      %4898 = vmatprep.subr.bf16.mxu0 %v3704
      %4899 = vmatpush1.bf16.msra.mxu0 %v3703
      %4900 = vmatprep.subr.bf16.mxu0 %v3709
      %4901 = vmatpush1.bf16.msra.mxu0 %v3708
      %4902 = vmatprep.subr.bf16.mxu0 %v3714
      %4903 = vmatpush1.bf16.msra.mxu0 %v3713
      %4904 = vmatprep.subr.bf16.mxu0 %v3719
      %4905 = vmatpush1.bf16.msra.mxu0 %v3718
      %4906 = vmatprep.subr.bf16.mxu0 %v3724
      %4907 = vmatpush1.bf16.msra.mxu0 %v3723
      %4908 = vmatprep.subr.bf16.mxu0 %v3729
      %4909 = vmatpush1.bf16.msra.mxu0 %v3728
      %4910 = vmatprep.subr.bf16.mxu0 %v3734
      %4911 = vmatpush1.bf16.msra.mxu0 %v3733
      %4912 = vmatprep.subr.bf16.mxu0 %v3739
      %4913 = vmatpush1.bf16.msra.mxu0 %v3738
      %4914 = vmatprep.subr.bf16.mxu0 %v3744
      %4915 = vmatpush1.bf16.msra.mxu0 %v3743
      %4916 = vmatprep.subr.bf16.mxu0 %v3749
      %4917 = vmatpush1.bf16.msra.mxu0 %v3748
      %4918 = vmatprep.subr.bf16.mxu0 %v3754
      %4919 = vmatpush1.bf16.msra.mxu0 %v3753
      %4920 = vmatprep.subr.bf16.mxu0 %v3759
      %4921 = vmatpush1.bf16.msra.mxu0 %v3758
      %4922 = vmatprep.subr.bf16.mxu0 %v3764
      %4923 = vmatpush1.bf16.msra.mxu0 %v3763
      %4924 = vmatprep.mubr.bf16.mxu0 %v1558
      %4925 = vmatmul.mubr.bf16.gmra.mrb[0].mxu0 %v1557
      %v4926 = vpop.f32.mrb[0].mxu0
      %v4927 = vadd.f32 0.0, %v4926
      %v4928 = vpop.f32.mrb[0].mxu0
      %v4929 = vadd.f32 0.0, %v4928
      %v4930 = vpop.f32.mrb[0].mxu0
      %v4931 = vpop.f32.mrb[0].mxu0
      %4932 = vdwg.mxu0
      %4933 = vmatprep.subr.bf16.mxu0 %v3769
      %4934 = vmatpush1.bf16.msra.mxu0 %v3768
      %4935 = vmatprep.subr.bf16.mxu0 %v3774
      %4936 = vmatpush1.bf16.msra.mxu0 %v3773
      %4937 = vmatprep.subr.bf16.mxu0 %v3779
      %4938 = vmatpush1.bf16.msra.mxu0 %v3778
      %4939 = vmatprep.subr.bf16.mxu0 %v3784
      %4940 = vmatpush1.bf16.msra.mxu0 %v3783
      %4941 = vmatprep.subr.bf16.mxu0 %v3789
      %4942 = vmatpush1.bf16.msra.mxu0 %v3788
      %4943 = vmatprep.subr.bf16.mxu0 %v3794
      %4944 = vmatpush1.bf16.msra.mxu0 %v3793
      %4945 = vmatprep.subr.bf16.mxu0 %v3799
      %4946 = vmatpush1.bf16.msra.mxu0 %v3798
      %4947 = vmatprep.subr.bf16.mxu0 %v3804
      %4948 = vmatpush1.bf16.msra.mxu0 %v3803
      %4949 = vmatprep.subr.bf16.mxu0 %v3809
      %4950 = vmatpush1.bf16.msra.mxu0 %v3808
      %4951 = vmatprep.subr.bf16.mxu0 %v3814
      %4952 = vmatpush1.bf16.msra.mxu0 %v3813
      %4953 = vmatprep.subr.bf16.mxu0 %v3819
      %4954 = vmatpush1.bf16.msra.mxu0 %v3818
      %4955 = vmatprep.subr.bf16.mxu0 %v3824
      %4956 = vmatpush1.bf16.msra.mxu0 %v3823
      %4957 = vmatprep.subr.bf16.mxu0 %v3829
      %4958 = vmatpush1.bf16.msra.mxu0 %v3828
      %4959 = vmatprep.subr.bf16.mxu0 %v3834
      %4960 = vmatpush1.bf16.msra.mxu0 %v3833
      %4961 = vmatprep.subr.bf16.mxu0 %v3839
      %4962 = vmatpush1.bf16.msra.mxu0 %v3838
      %4963 = vmatprep.subr.bf16.mxu0 %v3844
      %4964 = vmatpush1.bf16.msra.mxu0 %v3843
      %4965 = vmatprep.mubr.bf16.mxu0 %v1560
      %4966 = vmatmul.mubr.bf16.gmra.mrb[0].mxu0 %v1559
      %v4967 = vpop.f32.mrb[0].mxu0
      %v4968 = vadd.f32 %v4927, %v4967
      %v4969 = vpop.f32.mrb[0].mxu0
      %v4970 = vadd.f32 %v4929, %v4969
      %v4971 = vpop.f32.mrb[0].mxu0
      %v4972 = vpop.f32.mrb[0].mxu0
      %4973 = vdwg.mxu0
      %4974 = vmatprep.subr.bf16.mxu0 %v3849
      %4975 = vmatpush1.bf16.msra.mxu0 %v3848
      %4976 = vmatprep.subr.bf16.mxu0 %v3854
      %4977 = vmatpush1.bf16.msra.mxu0 %v3853
      %4978 = vmatprep.subr.bf16.mxu0 %v3859
      %4979 = vmatpush1.bf16.msra.mxu0 %v3858
      %4980 = vmatprep.subr.bf16.mxu0 %v3864
      %4981 = vmatpush1.bf16.msra.mxu0 %v3863
      %4982 = vmatprep.subr.bf16.mxu0 %v3869
      %4983 = vmatpush1.bf16.msra.mxu0 %v3868
      %4984 = vmatprep.subr.bf16.mxu0 %v3874
      %4985 = vmatpush1.bf16.msra.mxu0 %v3873
      %4986 = vmatprep.subr.bf16.mxu0 %v3879
      %4987 = vmatpush1.bf16.msra.mxu0 %v3878
      %4988 = vmatprep.subr.bf16.mxu0 %v3884
      %4989 = vmatpush1.bf16.msra.mxu0 %v3883
      %4990 = vmatprep.subr.bf16.mxu0 %v3889
      %4991 = vmatpush1.bf16.msra.mxu0 %v3888
      %4992 = vmatprep.subr.bf16.mxu0 %v3894
      %4993 = vmatpush1.bf16.msra.mxu0 %v3893
      %4994 = vmatprep.subr.bf16.mxu0 %v3899
      %4995 = vmatpush1.bf16.msra.mxu0 %v3898
      %4996 = vmatprep.subr.bf16.mxu0 %v3904
      %4997 = vmatpush1.bf16.msra.mxu0 %v3903
      %4998 = vmatprep.subr.bf16.mxu0 %v3909
      %4999 = vmatpush1.bf16.msra.mxu0 %v3908
      %5000 = vmatprep.subr.bf16.mxu0 %v3914
      %5001 = vmatpush1.bf16.msra.mxu0 %v3913
      %5002 = vmatprep.subr.bf16.mxu0 %v3919
      %5003 = vmatpush1.bf16.msra.mxu0 %v3918
      %5004 = vmatprep.subr.bf16.mxu0 %v3924
      %5005 = vmatpush1.bf16.msra.mxu0 %v3923
      %5006 = vmatprep.mubr.bf16.mxu0 %v1562
      %5007 = vmatmul.mubr.bf16.gmra.mrb[0].mxu0 %v1561
      %v5008 = vpop.f32.mrb[0].mxu0
      %v5009 = vadd.f32 %v4968, %v5008
      %v5010 = vpop.f32.mrb[0].mxu0
      %v5011 = vadd.f32 %v4970, %v5010
      %v5012 = vpop.f32.mrb[0].mxu0
      %v5013 = vpop.f32.mrb[0].mxu0
      %5014 = vdwg.mxu0
      %5015 = vmatprep.subr.bf16.mxu0 %v3929
      %5016 = vmatpush1.bf16.msra.mxu0 %v3928
      %5017 = vmatprep.subr.bf16.mxu0 %v3934
      %5018 = vmatpush1.bf16.msra.mxu0 %v3933
      %5019 = vmatprep.subr.bf16.mxu0 %v3939
      %5020 = vmatpush1.bf16.msra.mxu0 %v3938
      %5021 = vmatprep.subr.bf16.mxu0 %v3944
      %5022 = vmatpush1.bf16.msra.mxu0 %v3943
      %5023 = vmatprep.subr.bf16.mxu0 %v3949
      %5024 = vmatpush1.bf16.msra.mxu0 %v3948
      %5025 = vmatprep.subr.bf16.mxu0 %v3954
      %5026 = vmatpush1.bf16.msra.mxu0 %v3953
      %5027 = vmatprep.subr.bf16.mxu0 %v3959
      %5028 = vmatpush1.bf16.msra.mxu0 %v3958
      %5029 = vmatprep.subr.bf16.mxu0 %v3964
      %5030 = vmatpush1.bf16.msra.mxu0 %v3963
      %5031 = vmatprep.subr.bf16.mxu0 %v3969
      %5032 = vmatpush1.bf16.msra.mxu0 %v3968
      %5033 = vmatprep.subr.bf16.mxu0 %v3974
      %5034 = vmatpush1.bf16.msra.mxu0 %v3973
      %5035 = vmatprep.subr.bf16.mxu0 %v3979
      %5036 = vmatpush1.bf16.msra.mxu0 %v3978
      %5037 = vmatprep.subr.bf16.mxu0 %v3984
      %5038 = vmatpush1.bf16.msra.mxu0 %v3983
      %5039 = vmatprep.subr.bf16.mxu0 %v3989
      %5040 = vmatpush1.bf16.msra.mxu0 %v3988
      %5041 = vmatprep.subr.bf16.mxu0 %v3994
      %5042 = vmatpush1.bf16.msra.mxu0 %v3993
      %5043 = vmatprep.subr.bf16.mxu0 %v3999
      %5044 = vmatpush1.bf16.msra.mxu0 %v3998
      %5045 = vmatprep.subr.bf16.mxu0 %v4004
      %5046 = vmatpush1.bf16.msra.mxu0 %v4003
      %5047 = vmatprep.mubr.bf16.mxu0 %v1564
      %5048 = vmatmul.mubr.bf16.gmra.mrb[0].mxu0 %v1563
      %v5049 = vpop.f32.mrb[0].mxu0
      %v5050 = vadd.f32 %v5009, %v5049
      %v5051 = vpop.f32.mrb[0].mxu0
      %v5052 = vadd.f32 %v5011, %v5051
      %v5053 = vpop.f32.mrb[0].mxu0
      %v5054 = vpop.f32.mrb[0].mxu0
      %5055 = vdwg.mxu0
      %5056 = vmatprep.subr.bf16.mxu0 %v4009
      %5057 = vmatpush1.bf16.msra.mxu0 %v4008
      %5058 = vmatprep.subr.bf16.mxu0 %v4014
      %5059 = vmatpush1.bf16.msra.mxu0 %v4013
      %5060 = vmatprep.subr.bf16.mxu0 %v4019
      %5061 = vmatpush1.bf16.msra.mxu0 %v4018
      %5062 = vmatprep.subr.bf16.mxu0 %v4024
      %5063 = vmatpush1.bf16.msra.mxu0 %v4023
      %5064 = vmatprep.subr.bf16.mxu0 %v4029
      %5065 = vmatpush1.bf16.msra.mxu0 %v4028
      %5066 = vmatprep.subr.bf16.mxu0 %v4034
      %5067 = vmatpush1.bf16.msra.mxu0 %v4033
      %5068 = vmatprep.subr.bf16.mxu0 %v4039
      %5069 = vmatpush1.bf16.msra.mxu0 %v4038
      %5070 = vmatprep.subr.bf16.mxu0 %v4044
      %5071 = vmatpush1.bf16.msra.mxu0 %v4043
      %5072 = vmatprep.subr.bf16.mxu0 %v4049
      %5073 = vmatpush1.bf16.msra.mxu0 %v4048
      %5074 = vmatprep.subr.bf16.mxu0 %v4054
      %5075 = vmatpush1.bf16.msra.mxu0 %v4053
      %5076 = vmatprep.subr.bf16.mxu0 %v4059
      %5077 = vmatpush1.bf16.msra.mxu0 %v4058
      %5078 = vmatprep.subr.bf16.mxu0 %v4064
      %5079 = vmatpush1.bf16.msra.mxu0 %v4063
      %5080 = vmatprep.subr.bf16.mxu0 %v4069
      %5081 = vmatpush1.bf16.msra.mxu0 %v4068
      %5082 = vmatprep.subr.bf16.mxu0 %v4074
      %5083 = vmatpush1.bf16.msra.mxu0 %v4073
      %5084 = vmatprep.subr.bf16.mxu0 %v4079
      %5085 = vmatpush1.bf16.msra.mxu0 %v4078
      %5086 = vmatprep.subr.bf16.mxu0 %v4084
      %5087 = vmatpush1.bf16.msra.mxu0 %v4083
      %5088 = vmatprep.mubr.bf16.mxu0 %v1566
      %5089 = vmatmul.mubr.bf16.gmra.mrb[0].mxu0 %v1565
      %v5090 = vpop.f32.mrb[0].mxu0
      %v5091 = vadd.f32 %v5050, %v5090
      %v5092 = vpop.f32.mrb[0].mxu0
      %v5093 = vadd.f32 %v5052, %v5092
      %v5094 = vpop.f32.mrb[0].mxu0
      %v5095 = vpop.f32.mrb[0].mxu0
      %5096 = vdwg.mxu0
      %5097 = vmatprep.subr.bf16.mxu0 %v4089
      %5098 = vmatpush1.bf16.msra.mxu0 %v4088
      %5099 = vmatprep.subr.bf16.mxu0 %v4094
      %5100 = vmatpush1.bf16.msra.mxu0 %v4093
      %5101 = vmatprep.subr.bf16.mxu0 %v4099
      %5102 = vmatpush1.bf16.msra.mxu0 %v4098
      %5103 = vmatprep.subr.bf16.mxu0 %v4104
      %5104 = vmatpush1.bf16.msra.mxu0 %v4103
      %5105 = vmatprep.subr.bf16.mxu0 %v4109
      %5106 = vmatpush1.bf16.msra.mxu0 %v4108
      %5107 = vmatprep.subr.bf16.mxu0 %v4114
      %5108 = vmatpush1.bf16.msra.mxu0 %v4113
      %5109 = vmatprep.subr.bf16.mxu0 %v4119
      %5110 = vmatpush1.bf16.msra.mxu0 %v4118
      %5111 = vmatprep.subr.bf16.mxu0 %v4124
      %5112 = vmatpush1.bf16.msra.mxu0 %v4123
      %5113 = vmatprep.subr.bf16.mxu0 %v4129
      %5114 = vmatpush1.bf16.msra.mxu0 %v4128
      %5115 = vmatprep.subr.bf16.mxu0 %v4134
      %5116 = vmatpush1.bf16.msra.mxu0 %v4133
      %5117 = vmatprep.subr.bf16.mxu0 %v4139
      %5118 = vmatpush1.bf16.msra.mxu0 %v4138
      %5119 = vmatprep.subr.bf16.mxu0 %v4144
      %5120 = vmatpush1.bf16.msra.mxu0 %v4143
      %5121 = vmatprep.subr.bf16.mxu0 %v4149
      %5122 = vmatpush1.bf16.msra.mxu0 %v4148
      %5123 = vmatprep.subr.bf16.mxu0 %v4154
      %5124 = vmatpush1.bf16.msra.mxu0 %v4153
      %5125 = vmatprep.subr.bf16.mxu0 %v4159
      %5126 = vmatpush1.bf16.msra.mxu0 %v4158
      %5127 = vmatprep.subr.bf16.mxu0 %v4164
      %5128 = vmatpush1.bf16.msra.mxu0 %v4163
      %5129 = vmatprep.mubr.bf16.mxu0 %v1568
      %5130 = vmatmul.mubr.bf16.gmra.mrb[0].mxu0 %v1567
      %v5131 = vpop.f32.mrb[0].mxu0
      %v5132 = vadd.f32 %v5091, %v5131
      %v5133 = vpop.f32.mrb[0].mxu0
      %v5134 = vadd.f32 %v5093, %v5133
      %v5135 = vpop.f32.mrb[0].mxu0
      %v5136 = vpop.f32.mrb[0].mxu0
      %5137 = vdwg.mxu0
      %5138 = vmatprep.subr.bf16.mxu0 0
      %5139 = vmatpush1.bf16.msra.mxu0 %v3690
      %5140 = vmatprep.subr.bf16.mxu0 0
      %5141 = vmatpush1.bf16.msra.mxu0 %v3695
      %5142 = vmatprep.subr.bf16.mxu0 0
      %5143 = vmatpush1.bf16.msra.mxu0 %v3700
      %5144 = vmatprep.subr.bf16.mxu0 0
      %5145 = vmatpush1.bf16.msra.mxu0 %v3705
      %5146 = vmatprep.subr.bf16.mxu0 0
      %5147 = vmatpush1.bf16.msra.mxu0 %v3710
      %5148 = vmatprep.subr.bf16.mxu0 0
      %5149 = vmatpush1.bf16.msra.mxu0 %v3715
      %5150 = vmatprep.subr.bf16.mxu0 0
      %5151 = vmatpush1.bf16.msra.mxu0 %v3720
      %5152 = vmatprep.subr.bf16.mxu0 0
      %5153 = vmatpush1.bf16.msra.mxu0 %v3725
      %5154 = vmatprep.subr.bf16.mxu0 0
      %5155 = vmatpush1.bf16.msra.mxu0 %v3730
      %5156 = vmatprep.subr.bf16.mxu0 0
      %5157 = vmatpush1.bf16.msra.mxu0 %v3735
      %5158 = vmatprep.subr.bf16.mxu0 0
      %5159 = vmatpush1.bf16.msra.mxu0 %v3740
      %5160 = vmatprep.subr.bf16.mxu0 0
      %5161 = vmatpush1.bf16.msra.mxu0 %v3745
      %5162 = vmatprep.subr.bf16.mxu0 0
      %5163 = vmatpush1.bf16.msra.mxu0 %v3750
      %5164 = vmatprep.subr.bf16.mxu0 0
      %5165 = vmatpush1.bf16.msra.mxu0 %v3755
      %5166 = vmatprep.subr.bf16.mxu0 0
      %5167 = vmatpush1.bf16.msra.mxu0 %v3760
      %5168 = vmatprep.subr.bf16.mxu0 0
      %5169 = vmatpush1.bf16.msra.mxu0 %v3765
      %5170 = vmatprep.mubr.bf16.mxu0 %v1558
      %5171 = vmatmul.mubr.bf16.gmra.mrb[0].mxu0 %v1557
      %v5172 = vpop.f32.mrb[0].mxu0
      %v5173 = vadd.f32 0.0, %v5172
      %v5174 = vpop.f32.mrb[0].mxu0
      %v5175 = vpop.f32.mrb[0].mxu0
      %v5176 = vpop.f32.mrb[0].mxu0
      %5177 = vdwg.mxu0
      %5178 = vmatprep.subr.bf16.mxu0 0
      %5179 = vmatpush1.bf16.msra.mxu0 %v3770
      %5180 = vmatprep.subr.bf16.mxu0 0
      %5181 = vmatpush1.bf16.msra.mxu0 %v3775
      %5182 = vmatprep.subr.bf16.mxu0 0
      %5183 = vmatpush1.bf16.msra.mxu0 %v3780
      %5184 = vmatprep.subr.bf16.mxu0 0
      %5185 = vmatpush1.bf16.msra.mxu0 %v3785
      %5186 = vmatprep.subr.bf16.mxu0 0
      %5187 = vmatpush1.bf16.msra.mxu0 %v3790
      %5188 = vmatprep.subr.bf16.mxu0 0
      %5189 = vmatpush1.bf16.msra.mxu0 %v3795
      %5190 = vmatprep.subr.bf16.mxu0 0
      %5191 = vmatpush1.bf16.msra.mxu0 %v3800
      %5192 = vmatprep.subr.bf16.mxu0 0
      %5193 = vmatpush1.bf16.msra.mxu0 %v3805
      %5194 = vmatprep.subr.bf16.mxu0 0
      %5195 = vmatpush1.bf16.msra.mxu0 %v3810
      %5196 = vmatprep.subr.bf16.mxu0 0
      %5197 = vmatpush1.bf16.msra.mxu0 %v3815
      %5198 = vmatprep.subr.bf16.mxu0 0
      %5199 = vmatpush1.bf16.msra.mxu0 %v3820
      %5200 = vmatprep.subr.bf16.mxu0 0
      %5201 = vmatpush1.bf16.msra.mxu0 %v3825
      %5202 = vmatprep.subr.bf16.mxu0 0
      %5203 = vmatpush1.bf16.msra.mxu0 %v3830
      %5204 = vmatprep.subr.bf16.mxu0 0
      %5205 = vmatpush1.bf16.msra.mxu0 %v3835
      %5206 = vmatprep.subr.bf16.mxu0 0
      %5207 = vmatpush1.bf16.msra.mxu0 %v3840
      %5208 = vmatprep.subr.bf16.mxu0 0
      %5209 = vmatpush1.bf16.msra.mxu0 %v3845
      %5210 = vmatprep.mubr.bf16.mxu0 %v1560
      %5211 = vmatmul.mubr.bf16.gmra.mrb[0].mxu0 %v1559
      %v5212 = vpop.f32.mrb[0].mxu0
      %v5213 = vadd.f32 %v5173, %v5212
      %v5214 = vpop.f32.mrb[0].mxu0
      %v5215 = vpop.f32.mrb[0].mxu0
      %v5216 = vpop.f32.mrb[0].mxu0
      %5217 = vdwg.mxu0
      %5218 = vmatprep.subr.bf16.mxu0 0
      %5219 = vmatpush1.bf16.msra.mxu0 %v3850
      %5220 = vmatprep.subr.bf16.mxu0 0
      %5221 = vmatpush1.bf16.msra.mxu0 %v3855
      %5222 = vmatprep.subr.bf16.mxu0 0
      %5223 = vmatpush1.bf16.msra.mxu0 %v3860
      %5224 = vmatprep.subr.bf16.mxu0 0
      %5225 = vmatpush1.bf16.msra.mxu0 %v3865
      %5226 = vmatprep.subr.bf16.mxu0 0
      %5227 = vmatpush1.bf16.msra.mxu0 %v3870
      %5228 = vmatprep.subr.bf16.mxu0 0
      %5229 = vmatpush1.bf16.msra.mxu0 %v3875
      %5230 = vmatprep.subr.bf16.mxu0 0
      %5231 = vmatpush1.bf16.msra.mxu0 %v3880
      %5232 = vmatprep.subr.bf16.mxu0 0
      %5233 = vmatpush1.bf16.msra.mxu0 %v3885
      %5234 = vmatprep.subr.bf16.mxu0 0
      %5235 = vmatpush1.bf16.msra.mxu0 %v3890
      %5236 = vmatprep.subr.bf16.mxu0 0
      %5237 = vmatpush1.bf16.msra.mxu0 %v3895
      %5238 = vmatprep.subr.bf16.mxu0 0
      %5239 = vmatpush1.bf16.msra.mxu0 %v3900
      %5240 = vmatprep.subr.bf16.mxu0 0
      %5241 = vmatpush1.bf16.msra.mxu0 %v3905
      %5242 = vmatprep.subr.bf16.mxu0 0
      %5243 = vmatpush1.bf16.msra.mxu0 %v3910
      %5244 = vmatprep.subr.bf16.mxu0 0
      %5245 = vmatpush1.bf16.msra.mxu0 %v3915
      %5246 = vmatprep.subr.bf16.mxu0 0
      %5247 = vmatpush1.bf16.msra.mxu0 %v3920
      %5248 = vmatprep.subr.bf16.mxu0 0
      %5249 = vmatpush1.bf16.msra.mxu0 %v3925
      %5250 = vmatprep.mubr.bf16.mxu0 %v1562
      %5251 = vmatmul.mubr.bf16.gmra.mrb[0].mxu0 %v1561
      %v5252 = vpop.f32.mrb[0].mxu0
      %v5253 = vadd.f32 %v5213, %v5252
      %v5254 = vpop.f32.mrb[0].mxu0
      %v5255 = vpop.f32.mrb[0].mxu0
      %v5256 = vpop.f32.mrb[0].mxu0
      %5257 = vdwg.mxu0
      %5258 = vmatprep.subr.bf16.mxu0 0
      %5259 = vmatpush1.bf16.msra.mxu0 %v3930
      %5260 = vmatprep.subr.bf16.mxu0 0
      %5261 = vmatpush1.bf16.msra.mxu0 %v3935
      %5262 = vmatprep.subr.bf16.mxu0 0
      %5263 = vmatpush1.bf16.msra.mxu0 %v3940
      %5264 = vmatprep.subr.bf16.mxu0 0
      %5265 = vmatpush1.bf16.msra.mxu0 %v3945
      %5266 = vmatprep.subr.bf16.mxu0 0
      %5267 = vmatpush1.bf16.msra.mxu0 %v3950
      %5268 = vmatprep.subr.bf16.mxu0 0
      %5269 = vmatpush1.bf16.msra.mxu0 %v3955
      %5270 = vmatprep.subr.bf16.mxu0 0
      %5271 = vmatpush1.bf16.msra.mxu0 %v3960
      %5272 = vmatprep.subr.bf16.mxu0 0
      %5273 = vmatpush1.bf16.msra.mxu0 %v3965
      %5274 = vmatprep.subr.bf16.mxu0 0
      %5275 = vmatpush1.bf16.msra.mxu0 %v3970
      %5276 = vmatprep.subr.bf16.mxu0 0
      %5277 = vmatpush1.bf16.msra.mxu0 %v3975
      %5278 = vmatprep.subr.bf16.mxu0 0
      %5279 = vmatpush1.bf16.msra.mxu0 %v3980
      %5280 = vmatprep.subr.bf16.mxu0 0
      %5281 = vmatpush1.bf16.msra.mxu0 %v3985
      %5282 = vmatprep.subr.bf16.mxu0 0
      %5283 = vmatpush1.bf16.msra.mxu0 %v3990
      %5284 = vmatprep.subr.bf16.mxu0 0
      %5285 = vmatpush1.bf16.msra.mxu0 %v3995
      %5286 = vmatprep.subr.bf16.mxu0 0
      %5287 = vmatpush1.bf16.msra.mxu0 %v4000
      %5288 = vmatprep.subr.bf16.mxu0 0
      %5289 = vmatpush1.bf16.msra.mxu0 %v4005
      %5290 = vmatprep.mubr.bf16.mxu0 %v1564
      %5291 = vmatmul.mubr.bf16.gmra.mrb[0].mxu0 %v1563
      %v5292 = vpop.f32.mrb[0].mxu0
      %v5293 = vadd.f32 %v5253, %v5292
      %v5294 = vpop.f32.mrb[0].mxu0
      %v5295 = vpop.f32.mrb[0].mxu0
      %v5296 = vpop.f32.mrb[0].mxu0
      %5297 = vdwg.mxu0
      %5298 = vmatprep.subr.bf16.mxu0 0
      %5299 = vmatpush1.bf16.msra.mxu0 %v4010
      %5300 = vmatprep.subr.bf16.mxu0 0
      %5301 = vmatpush1.bf16.msra.mxu0 %v4015
      %5302 = vmatprep.subr.bf16.mxu0 0
      %5303 = vmatpush1.bf16.msra.mxu0 %v4020
      %5304 = vmatprep.subr.bf16.mxu0 0
      %5305 = vmatpush1.bf16.msra.mxu0 %v4025
      %5306 = vmatprep.subr.bf16.mxu0 0
      %5307 = vmatpush1.bf16.msra.mxu0 %v4030
      %5308 = vmatprep.subr.bf16.mxu0 0
      %5309 = vmatpush1.bf16.msra.mxu0 %v4035
      %5310 = vmatprep.subr.bf16.mxu0 0
      %5311 = vmatpush1.bf16.msra.mxu0 %v4040
      %5312 = vmatprep.subr.bf16.mxu0 0
      %5313 = vmatpush1.bf16.msra.mxu0 %v4045
      %5314 = vmatprep.subr.bf16.mxu0 0
      %5315 = vmatpush1.bf16.msra.mxu0 %v4050
      %5316 = vmatprep.subr.bf16.mxu0 0
      %5317 = vmatpush1.bf16.msra.mxu0 %v4055
      %5318 = vmatprep.subr.bf16.mxu0 0
      %5319 = vmatpush1.bf16.msra.mxu0 %v4060
      %5320 = vmatprep.subr.bf16.mxu0 0
      %5321 = vmatpush1.bf16.msra.mxu0 %v4065
      %5322 = vmatprep.subr.bf16.mxu0 0
      %5323 = vmatpush1.bf16.msra.mxu0 %v4070
      %5324 = vmatprep.subr.bf16.mxu0 0
      %5325 = vmatpush1.bf16.msra.mxu0 %v4075
      %5326 = vmatprep.subr.bf16.mxu0 0
      %5327 = vmatpush1.bf16.msra.mxu0 %v4080
      %5328 = vmatprep.subr.bf16.mxu0 0
      %5329 = vmatpush1.bf16.msra.mxu0 %v4085
      %5330 = vmatprep.mubr.bf16.mxu0 %v1566
      %5331 = vmatmul.mubr.bf16.gmra.mrb[0].mxu0 %v1565
      %v5332 = vpop.f32.mrb[0].mxu0
      %v5333 = vadd.f32 %v5293, %v5332
      %v5334 = vpop.f32.mrb[0].mxu0
      %v5335 = vpop.f32.mrb[0].mxu0
      %v5336 = vpop.f32.mrb[0].mxu0
      %5337 = vdwg.mxu0
      %5338 = vmatprep.subr.bf16.mxu0 0
      %5339 = vmatpush1.bf16.msra.mxu0 %v4090
      %5340 = vmatprep.subr.bf16.mxu0 0
      %5341 = vmatpush1.bf16.msra.mxu0 %v4095
      %5342 = vmatprep.subr.bf16.mxu0 0
      %5343 = vmatpush1.bf16.msra.mxu0 %v4100
      %5344 = vmatprep.subr.bf16.mxu0 0
      %5345 = vmatpush1.bf16.msra.mxu0 %v4105
      %5346 = vmatprep.subr.bf16.mxu0 0
      %5347 = vmatpush1.bf16.msra.mxu0 %v4110
      %5348 = vmatprep.subr.bf16.mxu0 0
      %5349 = vmatpush1.bf16.msra.mxu0 %v4115
      %5350 = vmatprep.subr.bf16.mxu0 0
      %5351 = vmatpush1.bf16.msra.mxu0 %v4120
      %5352 = vmatprep.subr.bf16.mxu0 0
      %5353 = vmatpush1.bf16.msra.mxu0 %v4125
      %5354 = vmatprep.subr.bf16.mxu0 0
      %5355 = vmatpush1.bf16.msra.mxu0 %v4130
      %5356 = vmatprep.subr.bf16.mxu0 0
      %5357 = vmatpush1.bf16.msra.mxu0 %v4135
      %5358 = vmatprep.subr.bf16.mxu0 0
      %5359 = vmatpush1.bf16.msra.mxu0 %v4140
      %5360 = vmatprep.subr.bf16.mxu0 0
      %5361 = vmatpush1.bf16.msra.mxu0 %v4145
      %5362 = vmatprep.subr.bf16.mxu0 0
      %5363 = vmatpush1.bf16.msra.mxu0 %v4150
      %5364 = vmatprep.subr.bf16.mxu0 0
      %5365 = vmatpush1.bf16.msra.mxu0 %v4155
      %5366 = vmatprep.subr.bf16.mxu0 0
      %5367 = vmatpush1.bf16.msra.mxu0 %v4160
      %5368 = vmatprep.subr.bf16.mxu0 0
      %5369 = vmatpush1.bf16.msra.mxu0 %v4165
      %5370 = vmatprep.mubr.bf16.mxu0 %v1568
      %5371 = vmatmul.mubr.bf16.gmra.mrb[0].mxu0 %v1567
      %v5372 = vpop.f32.mrb[0].mxu0
      %v5373 = vadd.f32 %v5333, %v5372
      %v5374 = vpop.f32.mrb[0].mxu0
      %v5375 = vpop.f32.mrb[0].mxu0
      %v5376 = vpop.f32.mrb[0].mxu0
      %5377 = vdwg.mxu0
      %v5378 = vadd.f32 %v1569, %v4886
      %v5379 = vadd.f32 %v1570, %v4888
      %v5380 = vadd.f32 %v1571, %v5132
      %v5381 = vadd.f32 %v1572, %v5134
      %v5382 = vadd.f32 %v1573, %v5373
      %5383 = vst [vmem:[#allocation3] sm:$0xff] %v5378
      %5384 = vst [vmem:[#allocation3 + $0x8] sm:$0xff] %v5379
      %5385 = vst [vmem:[#allocation3 + $0x10] sm:$0xff] %v5380
      %5386 = vst [vmem:[#allocation3 + $0x18] sm:$0xff] %v5381
      %vm5387 = vcmask 719872
      %5388 = vst.msk [vmem:[#allocation3 + $0x20] sm:$0xff] %vm5387, %v5382
      %p5389 = scmp.eq.s32.totalorder %s23, 3
      // Predicated region
      $region65: #{discriminator_forward.1} parent=59 // pred_check
        %p5390 = pneg %p5389
      $region66: #{discriminator_forward.1} parent=59 // pred_check_branch
        %5392 = sbr.rel (%p5390) target = $region68
      $region67: #{discriminator_forward.1} parent=59 // pred_region
        %v5393 = vld [vmem:[#allocation3] sm:$0xff]
        %v5394 = vld [vmem:[#allocation3 + $0x8] sm:$0xff]
        %v5395 = vld [vmem:[#allocation3 + $0x10] sm:$0xff]
        %v5396 = vld [vmem:[#allocation3 + $0x18] sm:$0xff]
        %v5397 = vld [vmem:[#allocation3 + $0x20] sm:$0xff]
        %v5398 = vld [vmem:[%s7] sm:$0x1f]
        %v5400 = vlaneseq
        %v5401 = vshrl.u32 %v5400, 7
        %v5402 = vsub.s32 0, %v5401
        %v5403 = vrot.slane %v5398, %v5402
        %v5404 = vlaneseq
        %v5405 = vshrl.u32 %v5404, 7
        %v5406 = vsub.s32 1, %v5405
        %v5407 = vrot.slane %v5398, %v5406
        %v5408 = vlaneseq
        %v5409 = vshrl.u32 %v5408, 7
        %v5410 = vsub.s32 2, %v5409
        %v5411 = vrot.slane %v5398, %v5410
        %v5412 = vlaneseq
        %v5413 = vshrl.u32 %v5412, 7
        %v5414 = vsub.s32 3, %v5413
        %v5415 = vrot.slane %v5398, %v5414
        %v5416 = vlaneseq
        %v5417 = vshrl.u32 %v5416, 7
        %v5418 = vsub.s32 4, %v5417
        %v5419 = vrot.slane %v5398, %v5418
        %v5425 = vadd.f32 %v5393, %v5403
        %v5426 = vadd.f32 %v5394, %v5407
        %v5427 = vadd.f32 %v5395, %v5411
        %v5428 = vadd.f32 %v5396, %v5415
        %v5429 = vadd.f32 %v5397, %v5419
        %vm5430 = vcmp.gt.f32.partialorder %v5425, 0.0
        %vm5431 = vcmp.gt.f32.partialorder %v5426, 0.0
        %vm5432 = vcmp.gt.f32.partialorder %v5427, 0.0
        %vm5433 = vcmp.gt.f32.partialorder %v5428, 0.0
        %vm5434 = vcmp.gt.f32.partialorder %v5429, 0.0
        %v5435 = vmul.f32 %v5425, 0.2
        %v5436 = vmul.f32 %v5426, 0.2
        %v5437 = vmul.f32 %v5427, 0.2
        %v5438 = vmul.f32 %v5428, 0.2
        %v5439 = vmul.f32 %v5429, 0.2
        %v5440 = vsel %vm5430, %v5425, %v5435
        %v5441 = vsel %vm5431, %v5426, %v5436
        %v5442 = vsel %vm5432, %v5427, %v5437
        %v5443 = vsel %vm5433, %v5428, %v5438
        %v5444 = vsel %vm5434, %v5429, %v5439
        %v5445 = vld [vmem:[%s8] sm:$0x1f]
        %v5447 = vlaneseq
        %v5448 = vshrl.u32 %v5447, 7
        %v5449 = vsub.s32 0, %v5448
        %v5450 = vrot.slane %v5445, %v5449
        %v5451 = vlaneseq
        %v5452 = vshrl.u32 %v5451, 7
        %v5453 = vsub.s32 1, %v5452
        %v5454 = vrot.slane %v5445, %v5453
        %v5455 = vlaneseq
        %v5456 = vshrl.u32 %v5455, 7
        %v5457 = vsub.s32 2, %v5456
        %v5458 = vrot.slane %v5445, %v5457
        %v5459 = vlaneseq
        %v5460 = vshrl.u32 %v5459, 7
        %v5461 = vsub.s32 3, %v5460
        %v5462 = vrot.slane %v5445, %v5461
        %v5463 = vlaneseq
        %v5464 = vshrl.u32 %v5463, 7
        %v5465 = vsub.s32 4, %v5464
        %v5466 = vrot.slane %v5445, %v5465
        %v5472 = vmul.f32 %v5440, %v5450
        %v5473 = vmul.f32 %v5441, %v5454
        %v5474 = vmul.f32 %v5442, %v5458
        %v5475 = vmul.f32 %v5443, %v5462
        %v5476 = vmul.f32 %v5444, %v5466
        %v5477 = vadd.f32 %v5472, %v5473
        %v5478 = vadd.f32 %v5477, %v5474
        %v5479 = vadd.f32 %v5478, %v5475
        %v5480 = vsel %vm5387, %v5476, 0.0
        %v5481 = vadd.f32 %v5479, %v5480
        %5482 = vadd.xlane.f32.xlu0 %v5481
        %v5483 = vpop.xlane.xlu0 %5482
        %v5484 = vld [vmem:[#allocation5] sm:$0x1]
        %v5486 = vlaneseq
        %v5487 = vshrl.u32 %v5486, 7
        %v5488 = vsub.s32 0, %v5487
        %v5489 = vrot.slane %v5484, %v5488
        %v5491 = vadd.f32 %v5483, %v5489
        %vm5492 = vcmask 1024
        %5493 = vst.msk [vmem:[%s10] sm:$0x3] %vm5492, %v5491
      $region68: #{discriminator_forward.1} parent=59 // pred_fallthru
        _
      // Predicated region
      $region69: #{discriminator_forward.1} parent=59 // pred_check
        %p5494 = pneg %p251
      $region70: #{discriminator_forward.1} parent=59 // pred_check_branch
        %5496 = sbr.rel (%p5494) target = $region72
      $region71: #{discriminator_forward.1} parent=59 // pred_region
        _
      $region72: #{discriminator_forward.1} parent=59 // pred_fallthru
        _
      // Predicated region
      $region73: #{discriminator_forward.1} parent=59 // pred_check
        %p5497 = pneg %p251
      $region74: #{discriminator_forward.1} parent=59 // pred_check_branch
        %5499 = sbr.rel (%p5497) target = $region76
      $region75: #{discriminator_forward.1} parent=59 // pred_region
        _
      $region76: #{discriminator_forward.1} parent=59 // pred_fallthru
        _
    $region60: #{discriminator_forward.1} parent=5 // pred_fallthru
      _
    %p5500 = scmp.le.s32.totalorder 2, %s18
    // Predicated region
    $region77: #{discriminator_forward.1} parent=5 // pred_check
      %p5501 = pneg %p5500
    $region78: #{discriminator_forward.1} parent=5 // pred_check_branch
      %5503 = sbr.rel (%p5501) target = $region80
    $region79: #{discriminator_forward.1} parent=5 // pred_region
      %s5504 = ssub.s32 %s18, 2
    $region80: #{discriminator_forward.1} parent=5 // pred_fallthru
      _
  $region6: #{discriminator_forward.1} parent=0 // loop_footer
    %s22 = sadd.s32 1, %s18
  $region7: #{discriminator_forward.1} parent=0 // loop_footer_branch
    %17 = sbr.rel target = $region3
  $region8: #{discriminator_forward.1} parent=0 // loop_exit
    _

</llo_original>
